<compile_context>
chip_gen: v6e
topology: v6e:2x2x1
jax: 0.10.0
libtpu: 0.0.40
codegen_flags: <defaults>
</compile_context>

<pallas_src>
from functools import partial

import numpy as np
import jax
import jax.numpy as jnp
from jax import lax
from jax.experimental import pallas as pl
from jax.experimental.pallas import tpu as pltpu

EMBED_DIM = 32
NUM_HEADS = 4
HEAD_DIM = EMBED_DIM // NUM_HEADS
L2NORM_EPS = 1e-6
INIT_STD = EMBED_DIM ** -0.5  # deterministic synthetic init scale

# Production default: bf16 MXU inputs with f32 accumulation on the bulk matmuls
# (v5e/v6e/v7x MXUs are bf16-native).  Sensitive paths (Newton inverse,
# beta-weighted correction, key transport, l2-norm, sigmoid, softmax stats)
# stay f32 regardless of this switch.
MXU_DTYPE = jnp.bfloat16


# ----------------------------------------------------------------------------
# dot helpers (all accumulate in f32 on the MXU)
# ----------------------------------------------------------------------------
def _dot(a, b, dims, dtype):
    return lax.dot_general(a.astype(dtype), b.astype(dtype), (dims, ((), ())),
                           preferred_element_type=jnp.float32)


def _mm_nn(a, b, dtype=jnp.float32):   # a @ b
    return _dot(a, b, ((1,), (0,)), dtype)


def _mm_nt(a, b, dtype=jnp.float32):   # a @ b^T
    return _dot(a, b, ((1,), (1,)), dtype)


def _mm_tn(a, b, dtype=jnp.float32):   # a^T @ b
    return _dot(a, b, ((0,), (0,)), dtype)


# ----------------------------------------------------------------------------
# Kernel 1: fused q/k/v/w/beta projections, head-major outputs.
#   outputs (per head h): q, k, v, w (l2-normalised), u = beta * w
# ----------------------------------------------------------------------------
def _proj_kernel(x_ref, wf_ref, w1_ref, q_ref, k_ref, v_ref, w_ref, u_ref, *,
                 num_heads, head_dim, mxu_dtype):
    rc, d = x_ref.shape
    h, dh = num_heads, head_dim
    x = x_ref[...]

    # single fused MXU pass over x: [ q | k | v | w-stage-0 | beta logits ]
    y = _mm_nt(x, wf_ref[...], mxu_dtype)                 # (Rc, 3D+Dh+H) f32
    q = y[:, :d]
    k = y[:, d:2 * d]
    v = y[:, 2 * d:3 * d]
    w_mid = y[:, 3 * d:3 * d + dh]
    beta = 2.0 * jax.nn.sigmoid(y[:, 3 * d + dh:3 * d + dh + h])   # (Rc, H) f32

    w = _mm_nt(w_mid, w1_ref[...], mxu_dtype)             # (Rc, D) second w stage

    # per-head l2-norm (f32) and beta pre-scaling; static per-head column slices
    for hh in range(h):
        sl = slice(hh * dh, (hh + 1) * dh)
        q_ref[hh] = q[:, sl].astype(q_ref.dtype)
        k_ref[hh] = k[:, sl].astype(k_ref.dtype)
        v_ref[hh] = v[:, sl].astype(v_ref.dtype)
        wh = w[:, sl]
        wn = wh * lax.rsqrt(jnp.sum(wh * wh, axis=-1, keepdims=True) + L2NORM_EPS)
        w_ref[hh] = wn.astype(w_ref.dtype)
        u_ref[hh] = (beta[:, hh:hh + 1] * wn).astype(u_ref.dtype)


# ----------------------------------------------------------------------------
# Kernel 2: chunked PaTH attention (one (batch, head, q-chunk) per grid step).
# ----------------------------------------------------------------------------
def _attn_kernel(q_ref, k_ref, w_ref, u_ref, v_ref, o_ref,
                 kstate_ref, m_sc, l_sc, acc_sc, *,
                 chunk, n_newton, scale, mxu_dtype):
    t = pl.program_id(2)           # q-chunk index (sequential / "arbitrary")
    c = chunk

    q = q_ref[...].astype(jnp.float32)       # (C, Dh)
    k = k_ref[...].astype(jnp.float32)
    w = w_ref[...].astype(jnp.float32)       # l2-normalised Householder directions
    u = u_ref[...].astype(jnp.float32)       # beta_m * w_m

    row = lax.broadcasted_iota(jnp.int32, (c, c), 0)
    col = lax.broadcasted_iota(jnp.int32, (c, c), 1)
    tril = row >= col
    stril = row > col

    # ---- intra-chunk UT/WY (same math as the validated monolithic kernel,
    #      restricted to a C x C block) ------------------------------------
    l_mat = jnp.where(stril, _mm_nt(u, w, mxu_dtype), 0.0)   # beta_m <w_m, w_j>, m>j
    y_inv = -l_mat                                           # (I+L)^-1 = I + Y
    for _ in range(n_newton):                                # exact: L nilpotent
        ly = _mm_nn(l_mat, y_inv)
        y_inv = -(l_mat + ly) - _mm_nn(y_inv, l_mat + y_inv + ly)

    mqw = jnp.where(tril, _mm_nt(q, w, mxu_dtype), 0.0)      # <q_i, w_m>, m <= i
    cmat = mqw + _mm_nn(mqw, y_inv)                          # C[i,m] (f32)
    bg = jnp.where(stril, _mm_nt(u, k, mxu_dtype), 0.0)      # beta_m <w_m, k_j>, m>j
    corr = _mm_nn(cmat, bg)                                  # f32 (sensitive)

    s_intra = (_mm_nt(q, k, mxu_dtype) - corr) * scale
    s_intra = jnp.where(tril, s_intra, -1e30)                # causal mask

    v_intra = v_ref[pl.ds(pl.multiple_of(t * c, c), c), :]
    m_sc[...] = jnp.max(s_intra, axis=-1, keepdims=True)
    p = jnp.exp(s_intra - m_sc[...])                         # f32 exp (v5e-safe)
    l_sc[...] = jnp.sum(p, axis=-1, keepdims=True)
    acc_sc[...] = _mm_nn(p, v_intra, mxu_dtype)

    # transported query for cross-chunk scores: q~_i = H_{tC+1} .. H_i q_i
    q_t = (q - _mm_nn(cmat, u)).astype(mxu_dtype)

    # ---- cross-chunk: online softmax over prior kv chunks, fused with the
    #      key-transport update (push old keys through this chunk's product) --
    @pl.loop(0, t)
    def _(s):
        off = pl.multiple_of(s * c, c)
        k_s = kstate_ref[pl.ds(off, c), :]                   # transported to end of chunk t-1
        v_s = v_ref[pl.ds(off, c), :]
        s_x = _mm_nt(q_t, k_s, mxu_dtype) * scale            # (C, C) cross scores
        m_prev = m_sc[...]
        m_new = jnp.maximum(m_prev, jnp.max(s_x, axis=-1, keepdims=True))
        alpha = jnp.exp(m_prev - m_new)
        p_x = jnp.exp(s_x - m_new)
        m_sc[...] = m_new
        l_sc[...] = alpha * l_sc[...] + jnp.sum(p_x, axis=-1, keepdims=True)
        acc_sc[...] = alpha * acc_sc[...] + _mm_nn(p_x, v_s, mxu_dtype)
        # X <- X P_t^T = X - (X U^T)(I + Y^T) W   (f32: transport error compounds)
        xu = _mm_nt(k_s, u)
        kstate_ref[pl.ds(off, c), :] = k_s - _mm_nn(xu + _mm_nt(xu, y_inv), w)

    # ---- append this chunk's keys, transported to the chunk end -------------
    #      K~ = K - ((I+Y) diag(beta) (W K^T))^T W           (reuses bg, Y; f32)
    ybg = bg + _mm_nn(y_inv, bg)
    kstate_ref[pl.ds(pl.multiple_of(t * c, c), c), :] = k - _mm_tn(ybg, w)

    # ---- epilogue ------------------------------------------------------------
    o_ref[...] = (acc_sc[...] *
                  pl.reciprocal(l_sc[...], approx=True)).astype(o_ref.dtype)


# ----------------------------------------------------------------------------
# Kernel 3: head concat + o_proj as a single matmul (contraction depth = D).
# ----------------------------------------------------------------------------
def _oproj_kernel(a_ref, wo_ref, o_ref, *, mxu_dtype):
    h = a_ref.shape[0]
    a = jnp.concatenate([a_ref[hh] for hh in range(h)], axis=-1)   # (Rc, D) lane-dense
    o_ref[...] = _mm_nt(a, wo_ref[...], mxu_dtype).astype(o_ref.dtype)


# ----------------------------------------------------------------------------
# Wrapper
# ----------------------------------------------------------------------------
def prepare_params(params):
    """Build the fused projection weight ONCE, outside jit (no .T at trace time)."""
    w_fused = jnp.concatenate(
        [params["q_proj"], params["k_proj"], params["v_proj"],
         params["w_proj_0"], params["bet_proj"]], axis=0)   # (3D + Dh + H, D)
    return {
        "w_fused": w_fused,
        "w_proj_1": params["w_proj_1"],   # (D, Dh)
        "o_proj": params["o_proj"],       # (D, D)
    }


def path_attention_forward(x, prepared, *, chunk=128, mxu_dtype=MXU_DTYPE):
    b, n, d = x.shape
    h = NUM_HEADS
    dh = d // h
    assert d % h == 0
    c = min(chunk, n)
    assert n % c == 0 and c % 8 == 0, "N must be a multiple of the chunk (chunk % 8 == 0)"
    tq = n // c
    r = b * n
    rc = min(r, 512)
    while r % rc:
        rc //= 2

    w_fused = prepared["w_fused"]
    w1 = prepared["w_proj_1"]
    wo = prepared["o_proj"]
    x_flat = x.reshape(r, d)

    # ---- 1) fused projections (q, k, v, w-normalised, u = beta*w), head-major ----
    hm_shape = jax.ShapeDtypeStruct((h, r, dh), jnp.float32)
    hm_spec = pl.BlockSpec((h, rc, dh), lambda i: (0, i, 0))
    q_hm, k_hm, v_hm, w_hm, u_hm = pl.pallas_call(
        partial(_proj_kernel, num_heads=h, head_dim=dh, mxu_dtype=mxu_dtype),
        grid=(r // rc,),
        in_specs=[
            pl.BlockSpec((rc, d), lambda i: (i, 0)),
            pl.BlockSpec(w_fused.shape, lambda i: (0, 0)),
            pl.BlockSpec(w1.shape, lambda i: (0, 0)),
        ],
        out_specs=(hm_spec,) * 5,
        out_shape=(hm_shape,) * 5,
        compiler_params=pltpu.CompilerParams(dimension_semantics=("parallel",)),
    )(x_flat, w_fused, w1)

    # ---- 2) chunked PaTH attention ------------------------------------------------
    n_newton = max(0, (c - 1).bit_length() - 1)   # exact (I+L)^-1 for nilpotent CxC L
    scale = dh ** -0.5

    chunk_spec = pl.BlockSpec((pl.Squeezed(), c, dh),
                              lambda bi, hi, ti: (hi, bi * tq + ti, 0))
    v_spec = pl.BlockSpec((pl.Squeezed(), n, dh), lambda bi, hi, ti: (hi, bi, 0))

    c3, ccd = c * c * c, c * c * dh
    n_prior = tq * (tq - 1) // 2
    flops = int(b * h * (tq * 2 * (7 * ccd + (3 * n_newton + 3) * c3)
                         + n_prior * 2 * (4 * ccd + c3)))
    transcendentals = int(b * h * c * c * (tq + n_prior))
    bytes_accessed = int(4 * 6 * h * r * dh)

    vmem_need = (n * dh * 4            # transported-key state scratch
                 + 2 * n * dh * 4      # resident V block (double buffered)
                 + 2 * 5 * c * dh * 4  # q/k/w/u in + o out blocks, double buffered
                 + 16 * c * c * 4      # CxC temporaries
                 + 4 * c * dh * 4)
    vmem_limit = int(min(64 * 2 ** 20, max(8 * 2 ** 20, 2 * vmem_need)))

    attn_hm = pl.pallas_call(
        partial(_attn_kernel, chunk=c, n_newton=n_newton, scale=scale,
                mxu_dtype=mxu_dtype),
        grid=(b, h, tq),
        in_specs=[chunk_spec, chunk_spec, chunk_spec, chunk_spec, v_spec],
        out_specs=chunk_spec,
        out_shape=jax.ShapeDtypeStruct((h, r, dh), jnp.float32),
        scratch_shapes=[
            pltpu.VMEM((n, dh), jnp.float32),   # transported keys per (b, h)
            pltpu.VMEM((c, 1), jnp.float32),    # running max
            pltpu.VMEM((c, 1), jnp.float32),    # running denominator
            pltpu.VMEM((c, dh), jnp.float32),   # output accumulator
        ],
        compiler_params=pltpu.CompilerParams(
            dimension_semantics=("parallel", "parallel", "arbitrary"),
            vmem_limit_bytes=vmem_limit,
        ),
        cost_estimate=pl.CostEstimate(flops=flops, transcendentals=transcendentals,
                                      bytes_accessed=bytes_accessed),
    )(q_hm, k_hm, w_hm, u_hm, v_hm)

    # ---- 3) o_proj: single matmul with full contraction depth D --------------------
    out_flat = pl.pallas_call(
        partial(_oproj_kernel, mxu_dtype=mxu_dtype),
        grid=(r // rc,),
        in_specs=[
            pl.BlockSpec((h, rc, dh), lambda i: (0, i, 0)),
            pl.BlockSpec(wo.shape, lambda i: (0, 0)),
        ],
        out_specs=pl.BlockSpec((rc, d), lambda i: (i, 0)),
        out_shape=jax.ShapeDtypeStruct((r, d), x.dtype),
        compiler_params=pltpu.CompilerParams(dimension_semantics=("parallel",)),
    )(attn_hm, wo)

    return out_flat.reshape(b, n, d)


# ----------------------------------------------------------------------------
# Pure numpy reference (sequential rank-one key updates) for validation.
# ----------------------------------------------------------------------------
def ref_forward(x, params):
    x = np.asarray(x, np.float32)
    b, n, d = x.shape
    h, dh = NUM_HEADS, d // NUM_HEADS

    def lin(a, wt):
        return a @ np.asarray(wt, np.float32).T

    x2 = x.reshape(b * n, d)
    q = lin(x2, params["q_proj"])
    k = lin(x2, params["k_proj"])
    v = lin(x2, params["v_proj"])
    w = lin(lin(x2, params["w_proj_0"]), params["w_proj_1"])
    beta = 2.0 / (1.0 + np.exp(-lin(x2, params["bet_proj"])))  # (b*n, h)

    def heads(t):
        return t.reshape(b, n, h, dh).transpose(0, 2, 1, 3)

    q, k, v, w = map(heads, (q, k, v, w))
    beta = beta.reshape(b, n, h).transpose(0, 2, 1)  # (b, h, n)
    w = w / np.sqrt((w * w).sum(-1, keepdims=True) + L2NORM_EPS)
    scale = dh ** -0.5

    out = np.zeros_like(q)
    for bi in range(b):
        for hi in range(h):
            ktil = k[bi, hi].copy()
            for i in range(n):
                if i > 0:  # apply H_i = I - beta_i w_i w_i^T to all past keys
                    proj = ktil[:i] @ w[bi, hi, i]
                    ktil[:i] = ktil[:i] - beta[bi, hi, i] * proj[:, None] * w[bi, hi, i][None, :]
                logits = (ktil[: i + 1] @ q[bi, hi, i]) * scale
                logits = logits - logits.max()
                p = np.exp(logits)
                p = p / p.sum()
                out[bi, hi, i] = p @ v[bi, hi, : i + 1]
    out = out.transpose(0, 2, 1, 3).reshape(b * n, d)
    return lin(out, params["o_proj"]).reshape(b, n, d)


# ----------------------------------------------------------------------------
if __name__ == "__main__":
    key = jax.random.PRNGKey(0)
    ks = jax.random.split(key, 8)
    # N = 16 with chunk = 8 exercises the cross-chunk (flash) path, the online
    # softmax and the Householder key-transport state update.
    B, N, D = 2, 16, EMBED_DIM

    params = {
        "q_proj": jax.random.normal(ks[0], (D, D), jnp.float32) * INIT_STD,
        "k_proj": jax.random.normal(ks[1], (D, D), jnp.float32) * INIT_STD,
        "v_proj": jax.random.normal(ks[2], (D, D), jnp.float32) * INIT_STD,
        "o_proj": jax.random.normal(ks[3], (D, D), jnp.float32) * INIT_STD,
        "w_proj_0": jax.random.normal(ks[4], (HEAD_DIM, D), jnp.float32) * INIT_STD,
        "w_proj_1": jax.random.normal(ks[5], (D, HEAD_DIM), jnp.float32) * INIT_STD,
        "bet_proj": jax.random.normal(ks[6], (NUM_HEADS, D), jnp.float32) * INIT_STD,
    }
    x = jax.random.normal(ks[7], (B, N, D), jnp.float32)

    prepared = prepare_params(params)          # weight fusion once, outside jit
    y_ref = ref_forward(x, params)

    # strict f32-MXU validation of the chunked UT/WY algorithm
    fwd_f32 = jax.jit(partial(path_attention_forward, chunk=8, mxu_dtype=jnp.float32))
    y_f32 = jax.block_until_ready(fwd_f32(x, prepared))
    np.testing.assert_allclose(np.asarray(y_f32), y_ref, atol=5e-3, rtol=5e-3)

    # production path: bf16 MXU inputs / f32 accumulation (sanity check only —
    # bf16 input rounding dominates the difference at this tiny contraction depth)
    fwd_bf16 = jax.jit(partial(path_attention_forward, chunk=8, mxu_dtype=jnp.bfloat16))
    y_bf16 = jax.block_until_ready(fwd_bf16(x, prepared))
    mad = float(np.mean(np.abs(np.asarray(y_bf16) - np.asarray(y_f32))))
    assert mad < 5e-2, f"bf16 MXU path drifted too far from f32 path: MAD={mad}"

    print("KERNEL_OK")
</pallas_src>

<mosaic_0001>
module attributes {stable_mosaic.version = 11 : i64} {
  func.func @_attn_kernel(%arg0: i32, %arg1: i32, %arg2: i32, %arg3: memref<1x8x8xf32, #tpu.memory_space<vmem>>, %arg4: memref<1x8x8xf32, #tpu.memory_space<vmem>>, %arg5: memref<1x8x8xf32, #tpu.memory_space<vmem>>, %arg6: memref<1x8x8xf32, #tpu.memory_space<vmem>>, %arg7: memref<1x16x8xf32, #tpu.memory_space<vmem>>, %arg8: memref<1x8x8xf32, #tpu.memory_space<vmem>>, %arg9: memref<16x8xf32, #tpu.memory_space<vmem>>, %arg10: memref<8x1xf32, #tpu.memory_space<vmem>>, %arg11: memref<8x1xf32, #tpu.memory_space<vmem>>, %arg12: memref<8x8xf32, #tpu.memory_space<vmem>>) attributes {dimension_semantics = [#tpu.dimension_semantics<parallel>, #tpu.dimension_semantics<parallel>, #tpu.dimension_semantics<arbitrary>], iteration_bounds = array<i64: 2, 4, 2>, scalar_prefetch = 0 : i64, scratch_operands = 4 : i64, tpu.core_type = #tpu.core_type<tc>, window_params = [{transform_indices = @transform_0, window_bounds = array<i64: 1, 8, 8>}, {transform_indices = @transform_1, window_bounds = array<i64: 1, 8, 8>}, {transform_indices = @transform_2, window_bounds = array<i64: 1, 8, 8>}, {transform_indices = @transform_3, window_bounds = array<i64: 1, 8, 8>}, {transform_indices = @transform_4, window_bounds = array<i64: 1, 16, 8>}, {transform_indices = @transform_5, window_bounds = array<i64: 1, 8, 8>}]} {
    %c0 = arith.constant 0 : index
    %c0_0 = arith.constant 0 : index
    %c0_1 = arith.constant 0 : index
    %0 = vector.load %arg3[%c0, %c0_0, %c0_1] : memref<1x8x8xf32, #tpu.memory_space<vmem>>, vector<1x8x8xf32>
    %1 = vector.shape_cast %0 : vector<1x8x8xf32> to vector<8x8xf32>
    %c0_2 = arith.constant 0 : index
    %c0_3 = arith.constant 0 : index
    %c0_4 = arith.constant 0 : index
    %2 = vector.load %arg4[%c0_2, %c0_3, %c0_4] : memref<1x8x8xf32, #tpu.memory_space<vmem>>, vector<1x8x8xf32>
    %3 = vector.shape_cast %2 : vector<1x8x8xf32> to vector<8x8xf32>
    %c0_5 = arith.constant 0 : index
    %c0_6 = arith.constant 0 : index
    %c0_7 = arith.constant 0 : index
    %4 = vector.load %arg5[%c0_5, %c0_6, %c0_7] : memref<1x8x8xf32, #tpu.memory_space<vmem>>, vector<1x8x8xf32>
    %5 = vector.shape_cast %4 : vector<1x8x8xf32> to vector<8x8xf32>
    %c0_8 = arith.constant 0 : index
    %c0_9 = arith.constant 0 : index
    %c0_10 = arith.constant 0 : index
    %6 = vector.load %arg6[%c0_8, %c0_9, %c0_10] : memref<1x8x8xf32, #tpu.memory_space<vmem>>, vector<1x8x8xf32>
    %7 = vector.shape_cast %6 : vector<1x8x8xf32> to vector<8x8xf32>
    %8 = tpu.iota {dimensions = array<i32: 0>} : vector<8x8xi32>
    %9 = tpu.iota {dimensions = array<i32: 1>} : vector<8x8xi32>
    %10 = arith.cmpi sge, %8, %9 : vector<8x8xi32>
    %11 = arith.cmpi sgt, %8, %9 : vector<8x8xi32>
    %cst = arith.constant dense<0.000000e+00> : vector<8x8xf32>
    %12 = tpu.matmul %7, %5, %cst {dimension_numbers = #tpu.dot_dimension_numbers<[1], [1], [0], [0], [0, 0, 1, 0], [], []>} : vector<8x8xf32>, vector<8x8xf32>, vector<8x8xf32> -> vector<8x8xf32>
    %cst_11 = arith.constant 0.000000e+00 : f32
    %13 = vector.broadcast %cst_11 : f32 to vector<8x8xf32>
    %14 = arith.select %11, %12, %13 : vector<8x8xi1>, vector<8x8xf32>
    %cst_12 = arith.constant 0.000000e+00 : f32
    %15 = vector.broadcast %cst_12 : f32 to vector<8x8xf32>
    %16 = arith.subf %15, %14 : vector<8x8xf32>
    %cst_13 = arith.constant dense<0.000000e+00> : vector<8x8xf32>
    %17 = tpu.matmul %14, %16, %cst_13 {dimension_numbers = #tpu.dot_dimension_numbers<[1], [0], [0], [1], [0, 0, 1, 1], [], []>} : vector<8x8xf32>, vector<8x8xf32>, vector<8x8xf32> -> vector<8x8xf32>
    %18 = arith.addf %14, %17 : vector<8x8xf32>
    %cst_14 = arith.constant 0.000000e+00 : f32
    %19 = vector.broadcast %cst_14 : f32 to vector<8x8xf32>
    %20 = arith.subf %19, %18 : vector<8x8xf32>
    %21 = arith.addf %14, %16 : vector<8x8xf32>
    %22 = arith.addf %21, %17 : vector<8x8xf32>
    %cst_15 = arith.constant dense<0.000000e+00> : vector<8x8xf32>
    %23 = tpu.matmul %16, %22, %cst_15 {dimension_numbers = #tpu.dot_dimension_numbers<[1], [0], [0], [1], [0, 0, 1, 1], [], []>} : vector<8x8xf32>, vector<8x8xf32>, vector<8x8xf32> -> vector<8x8xf32>
    %24 = arith.subf %20, %23 : vector<8x8xf32>
    %cst_16 = arith.constant dense<0.000000e+00> : vector<8x8xf32>
    %25 = tpu.matmul %14, %24, %cst_16 {dimension_numbers = #tpu.dot_dimension_numbers<[1], [0], [0], [1], [0, 0, 1, 1], [], []>} : vector<8x8xf32>, vector<8x8xf32>, vector<8x8xf32> -> vector<8x8xf32>
    %26 = arith.addf %14, %25 : vector<8x8xf32>
    %cst_17 = arith.constant 0.000000e+00 : f32
    %27 = vector.broadcast %cst_17 : f32 to vector<8x8xf32>
    %28 = arith.subf %27, %26 : vector<8x8xf32>
    %29 = arith.addf %14, %24 : vector<8x8xf32>
    %30 = arith.addf %29, %25 : vector<8x8xf32>
    %cst_18 = arith.constant dense<0.000000e+00> : vector<8x8xf32>
    %31 = tpu.matmul %24, %30, %cst_18 {dimension_numbers = #tpu.dot_dimension_numbers<[1], [0], [0], [1], [0, 0, 1, 1], [], []>} : vector<8x8xf32>, vector<8x8xf32>, vector<8x8xf32> -> vector<8x8xf32>
    %32 = arith.subf %28, %31 : vector<8x8xf32>
    %cst_19 = arith.constant dense<0.000000e+00> : vector<8x8xf32>
    %33 = tpu.matmul %1, %5, %cst_19 {dimension_numbers = #tpu.dot_dimension_numbers<[1], [1], [0], [0], [0, 0, 1, 0], [], []>} : vector<8x8xf32>, vector<8x8xf32>, vector<8x8xf32> -> vector<8x8xf32>
    %cst_20 = arith.constant 0.000000e+00 : f32
    %34 = vector.broadcast %cst_20 : f32 to vector<8x8xf32>
    %35 = arith.select %10, %33, %34 : vector<8x8xi1>, vector<8x8xf32>
    %cst_21 = arith.constant dense<0.000000e+00> : vector<8x8xf32>
    %36 = tpu.matmul %35, %32, %cst_21 {dimension_numbers = #tpu.dot_dimension_numbers<[1], [0], [0], [1], [0, 0, 1, 1], [], []>} : vector<8x8xf32>, vector<8x8xf32>, vector<8x8xf32> -> vector<8x8xf32>
    %37 = arith.addf %35, %36 : vector<8x8xf32>
    %cst_22 = arith.constant dense<0.000000e+00> : vector<8x8xf32>
    %38 = tpu.matmul %7, %3, %cst_22 {dimension_numbers = #tpu.dot_dimension_numbers<[1], [1], [0], [0], [0, 0, 1, 0], [], []>} : vector<8x8xf32>, vector<8x8xf32>, vector<8x8xf32> -> vector<8x8xf32>
    %cst_23 = arith.constant 0.000000e+00 : f32
    %39 = vector.broadcast %cst_23 : f32 to vector<8x8xf32>
    %40 = arith.select %11, %38, %39 : vector<8x8xi1>, vector<8x8xf32>
    %cst_24 = arith.constant dense<0.000000e+00> : vector<8x8xf32>
    %41 = tpu.matmul %37, %40, %cst_24 {dimension_numbers = #tpu.dot_dimension_numbers<[1], [0], [0], [1], [0, 0, 1, 1], [], []>} : vector<8x8xf32>, vector<8x8xf32>, vector<8x8xf32> -> vector<8x8xf32>
    %cst_25 = arith.constant dense<0.000000e+00> : vector<8x8xf32>
    %42 = tpu.matmul %1, %3, %cst_25 {dimension_numbers = #tpu.dot_dimension_numbers<[1], [1], [0], [0], [0, 0, 1, 0], [], []>} : vector<8x8xf32>, vector<8x8xf32>, vector<8x8xf32> -> vector<8x8xf32>
    %43 = arith.subf %42, %41 : vector<8x8xf32>
    %cst_26 = arith.constant 0.353553385 : f32
    %44 = vector.broadcast %cst_26 : f32 to vector<8x8xf32>
    %45 = arith.mulf %43, %44 : vector<8x8xf32>
    %cst_27 = arith.constant -1.000000e+30 : f32
    %46 = vector.broadcast %cst_27 : f32 to vector<8x8xf32>
    %47 = arith.select %10, %45, %46 : vector<8x8xi1>, vector<8x8xf32>
    %c8_i32 = arith.constant 8 : i32
    %48 = arith.muli %arg2, %c8_i32 : i32
    %49 = tpu.assume_multiple %48, 8 : i32
    %c0_28 = arith.constant 0 : index
    %50 = arith.index_cast %49 : i32 to index
    %c0_29 = arith.constant 0 : index
    %51 = vector.load %arg7[%c0_28, %50, %c0_29] : memref<1x16x8xf32, #tpu.memory_space<vmem>>, vector<1x8x8xf32>
    %52 = vector.shape_cast %51 : vector<1x8x8xf32> to vector<8x8xf32>
    %cst_30 = arith.constant dense<0xFF800000> : vector<8xf32>
    %53 = vector.multi_reduction <maximumf>, %47, %cst_30 [1] : vector<8x8xf32> to vector<8xf32>
    %54 = vector.shape_cast %53 : vector<8xf32> to vector<8x1xf32>
    %c0_31 = arith.constant 0 : index
    %c0_32 = arith.constant 0 : index
    %55 = vector.load %arg10[%c0_31, %c0_32] : memref<8x1xf32, #tpu.memory_space<vmem>>, vector<8x1xf32>
    tpu.vector_store %arg10[%c0_31, %c0_32], %54 {strides = array<i32>} : memref<8x1xf32, #tpu.memory_space<vmem>>, vector<8x1xf32>,
    %c0_33 = arith.constant 0 : index
    %c0_34 = arith.constant 0 : index
    %56 = vector.load %arg10[%c0_33, %c0_34] : memref<8x1xf32, #tpu.memory_space<vmem>>, vector<8x1xf32>
    %57 = vector.broadcast %56 : vector<8x1xf32> to vector<8x8xf32>
    %58 = arith.subf %47, %57 : vector<8x8xf32>
    %59 = math.exp %58 : vector<8x8xf32>
    %cst_35 = arith.constant dense<0.000000e+00> : vector<8xf32>
    %60 = vector.multi_reduction <add>, %59, %cst_35 [1] : vector<8x8xf32> to vector<8xf32>
    %61 = vector.shape_cast %60 : vector<8xf32> to vector<8x1xf32>
    %c0_36 = arith.constant 0 : index
    %c0_37 = arith.constant 0 : index
    %62 = vector.load %arg11[%c0_36, %c0_37] : memref<8x1xf32, #tpu.memory_space<vmem>>, vector<8x1xf32>
    tpu.vector_store %arg11[%c0_36, %c0_37], %61 {strides = array<i32>} : memref<8x1xf32, #tpu.memory_space<vmem>>, vector<8x1xf32>,
    %cst_38 = arith.constant dense<0.000000e+00> : vector<8x8xf32>
    %63 = tpu.matmul %59, %52, %cst_38 {dimension_numbers = #tpu.dot_dimension_numbers<[1], [0], [0], [1], [0, 0, 1, 1], [], []>} : vector<8x8xf32>, vector<8x8xf32>, vector<8x8xf32> -> vector<8x8xf32>
    %c0_39 = arith.constant 0 : index
    %c0_40 = arith.constant 0 : index
    %64 = vector.load %arg12[%c0_39, %c0_40] : memref<8x8xf32, #tpu.memory_space<vmem>>, vector<8x8xf32>
    tpu.vector_store %arg12[%c0_39, %c0_40], %63 {strides = array<i32>} : memref<8x8xf32, #tpu.memory_space<vmem>>, vector<8x8xf32>,
    %cst_41 = arith.constant dense<0.000000e+00> : vector<8x8xf32>
    %65 = tpu.matmul %37, %7, %cst_41 {dimension_numbers = #tpu.dot_dimension_numbers<[1], [0], [0], [1], [0, 0, 1, 1], [], []>} : vector<8x8xf32>, vector<8x8xf32>, vector<8x8xf32> -> vector<8x8xf32>
    %66 = arith.subf %1, %65 : vector<8x8xf32>
    %c0_i32 = arith.constant 0 : i32
    %67 = arith.subi %arg2, %c0_i32 : i32
    %c1_i32 = arith.constant 1 : i32
    %c1_i32_42 = arith.constant 1 : i32
    %68 = arith.subi %c1_i32, %c1_i32_42 : i32
    %69 = arith.addi %67, %68 : i32
    %c1_i32_43 = arith.constant 1 : i32
    %70 = arith.divsi %69, %c1_i32_43 : i32
    %c1_i32_44 = arith.constant 1 : i32
    %c0_i32_45 = arith.constant 0 : i32
    %c0_i32_46 = arith.constant 0 : i32
    %71 = arith.subi %70, %c0_i32_46 : i32
    %72 = arith.addi %c0_i32_46, %71 : i32
    %c1_i32_47 = arith.constant 1 : i32
    scf.for %arg13 = %c0_i32_46 to %72 step %c1_i32_47  : i32 {
      %89 = arith.muli %arg13, %c1_i32_44 : i32
      %90 = arith.addi %c0_i32_45, %89 : i32
      %c8_i32_59 = arith.constant 8 : i32
      %91 = arith.muli %90, %c8_i32_59 : i32
      %92 = tpu.assume_multiple %91, 8 : i32
      %93 = arith.index_cast %92 : i32 to index
      %c0_60 = arith.constant 0 : index
      %94 = vector.load %arg9[%93, %c0_60] : memref<16x8xf32, #tpu.memory_space<vmem>>, vector<8x8xf32>
      %c0_61 = arith.constant 0 : index
      %95 = arith.index_cast %92 : i32 to index
      %c0_62 = arith.constant 0 : index
      %96 = vector.load %arg7[%c0_61, %95, %c0_62] : memref<1x16x8xf32, #tpu.memory_space<vmem>>, vector<1x8x8xf32>
      %97 = vector.shape_cast %96 : vector<1x8x8xf32> to vector<8x8xf32>
      %cst_63 = arith.constant dense<0.000000e+00> : vector<8x8xf32>
      %98 = tpu.matmul %66, %94, %cst_63 {dimension_numbers = #tpu.dot_dimension_numbers<[1], [1], [0], [0], [0, 0, 1, 0], [], []>} : vector<8x8xf32>, vector<8x8xf32>, vector<8x8xf32> -> vector<8x8xf32>
      %cst_64 = arith.constant 0.353553385 : f32
      %99 = vector.broadcast %cst_64 : f32 to vector<8x8xf32>
      %100 = arith.mulf %98, %99 : vector<8x8xf32>
      %c0_65 = arith.constant 0 : index
      %c0_66 = arith.constant 0 : index
      %101 = vector.load %arg10[%c0_65, %c0_66] : memref<8x1xf32, #tpu.memory_space<vmem>>, vector<8x1xf32>
      %cst_67 = arith.constant dense<0xFF800000> : vector<8xf32>
      %102 = vector.multi_reduction <maximumf>, %100, %cst_67 [1] : vector<8x8xf32> to vector<8xf32>
      %103 = vector.shape_cast %102 : vector<8xf32> to vector<8x1xf32>
      %104 = arith.maximumf %101, %103 : vector<8x1xf32>
      %105 = arith.subf %101, %104 : vector<8x1xf32>
      %106 = math.exp %105 : vector<8x1xf32>
      %107 = vector.broadcast %104 : vector<8x1xf32> to vector<8x8xf32>
      %108 = arith.subf %100, %107 : vector<8x8xf32>
      %109 = math.exp %108 : vector<8x8xf32>
      %c0_68 = arith.constant 0 : index
      %c0_69 = arith.constant 0 : index
      %110 = vector.load %arg10[%c0_68, %c0_69] : memref<8x1xf32, #tpu.memory_space<vmem>>, vector<8x1xf32>
      tpu.vector_store %arg10[%c0_68, %c0_69], %104 {strides = array<i32>} : memref<8x1xf32, #tpu.memory_space<vmem>>, vector<8x1xf32>,
      %c0_70 = arith.constant 0 : index
      %c0_71 = arith.constant 0 : index
      %111 = vector.load %arg11[%c0_70, %c0_71] : memref<8x1xf32, #tpu.memory_space<vmem>>, vector<8x1xf32>
      %112 = arith.mulf %106, %111 : vector<8x1xf32>
      %cst_72 = arith.constant dense<0.000000e+00> : vector<8xf32>
      %113 = vector.multi_reduction <add>, %109, %cst_72 [1] : vector<8x8xf32> to vector<8xf32>
      %114 = vector.shape_cast %113 : vector<8xf32> to vector<8x1xf32>
      %115 = arith.addf %112, %114 : vector<8x1xf32>
      %c0_73 = arith.constant 0 : index
      %c0_74 = arith.constant 0 : index
      %116 = vector.load %arg11[%c0_73, %c0_74] : memref<8x1xf32, #tpu.memory_space<vmem>>, vector<8x1xf32>
      tpu.vector_store %arg11[%c0_73, %c0_74], %115 {strides = array<i32>} : memref<8x1xf32, #tpu.memory_space<vmem>>, vector<8x1xf32>,
      %c0_75 = arith.constant 0 : index
      %c0_76 = arith.constant 0 : index
      %117 = vector.load %arg12[%c0_75, %c0_76] : memref<8x8xf32, #tpu.memory_space<vmem>>, vector<8x8xf32>
      %118 = vector.broadcast %106 : vector<8x1xf32> to vector<8x8xf32>
      %119 = arith.mulf %118, %117 : vector<8x8xf32>
      %cst_77 = arith.constant dense<0.000000e+00> : vector<8x8xf32>
      %120 = tpu.matmul %109, %97, %cst_77 {dimension_numbers = #tpu.dot_dimension_numbers<[1], [0], [0], [1], [0, 0, 1, 1], [], []>} : vector<8x8xf32>, vector<8x8xf32>, vector<8x8xf32> -> vector<8x8xf32>
      %121 = arith.addf %119, %120 : vector<8x8xf32>
      %c0_78 = arith.constant 0 : index
      %c0_79 = arith.constant 0 : index
      %122 = vector.load %arg12[%c0_78, %c0_79] : memref<8x8xf32, #tpu.memory_space<vmem>>, vector<8x8xf32>
      tpu.vector_store %arg12[%c0_78, %c0_79], %121 {strides = array<i32>} : memref<8x8xf32, #tpu.memory_space<vmem>>, vector<8x8xf32>,
      %cst_80 = arith.constant dense<0.000000e+00> : vector<8x8xf32>
      %123 = tpu.matmul %94, %7, %cst_80 {dimension_numbers = #tpu.dot_dimension_numbers<[1], [1], [0], [0], [0, 0, 1, 0], [], []>} : vector<8x8xf32>, vector<8x8xf32>, vector<8x8xf32> -> vector<8x8xf32>
      %cst_81 = arith.constant dense<0.000000e+00> : vector<8x8xf32>
      %124 = tpu.matmul %123, %32, %cst_81 {dimension_numbers = #tpu.dot_dimension_numbers<[1], [1], [0], [0], [0, 0, 1, 0], [], []>} : vector<8x8xf32>, vector<8x8xf32>, vector<8x8xf32> -> vector<8x8xf32>
      %125 = arith.addf %123, %124 : vector<8x8xf32>
      %cst_82 = arith.constant dense<0.000000e+00> : vector<8x8xf32>
      %126 = tpu.matmul %125, %5, %cst_82 {dimension_numbers = #tpu.dot_dimension_numbers<[1], [0], [0], [1], [0, 0, 1, 1], [], []>} : vector<8x8xf32>, vector<8x8xf32>, vector<8x8xf32> -> vector<8x8xf32>
      %127 = arith.subf %94, %126 : vector<8x8xf32>
      %128 = arith.index_cast %92 : i32 to index
      %c0_83 = arith.constant 0 : index
      %129 = vector.load %arg9[%128, %c0_83] : memref<16x8xf32, #tpu.memory_space<vmem>>, vector<8x8xf32>
      tpu.vector_store %arg9[%128, %c0_83], %127 {strides = array<i32>} : memref<16x8xf32, #tpu.memory_space<vmem>>, vector<8x8xf32>,
    }
    %cst_48 = arith.constant dense<0.000000e+00> : vector<8x8xf32>
    %73 = tpu.matmul %32, %40, %cst_48 {dimension_numbers = #tpu.dot_dimension_numbers<[1], [0], [0], [1], [0, 0, 1, 1], [], []>} : vector<8x8xf32>, vector<8x8xf32>, vector<8x8xf32> -> vector<8x8xf32>
    %74 = arith.addf %40, %73 : vector<8x8xf32>
    %cst_49 = arith.constant dense<0.000000e+00> : vector<8x8xf32>
    %75 = tpu.matmul %74, %5, %cst_49 {dimension_numbers = #tpu.dot_dimension_numbers<[0], [0], [1], [1], [0, 1, 1, 1], [], []>} : vector<8x8xf32>, vector<8x8xf32>, vector<8x8xf32> -> vector<8x8xf32>
    %76 = arith.subf %3, %75 : vector<8x8xf32>
    %c8_i32_50 = arith.constant 8 : i32
    %77 = arith.muli %arg2, %c8_i32_50 : i32
    %78 = tpu.assume_multiple %77, 8 : i32
    %79 = arith.index_cast %78 : i32 to index
    %c0_51 = arith.constant 0 : index
    %80 = vector.load %arg9[%79, %c0_51] : memref<16x8xf32, #tpu.memory_space<vmem>>, vector<8x8xf32>
    tpu.vector_store %arg9[%79, %c0_51], %76 {strides = array<i32>} : memref<16x8xf32, #tpu.memory_space<vmem>>, vector<8x8xf32>,
    %c0_52 = arith.constant 0 : index
    %c0_53 = arith.constant 0 : index
    %81 = vector.load %arg12[%c0_52, %c0_53] : memref<8x8xf32, #tpu.memory_space<vmem>>, vector<8x8xf32>
    %c0_54 = arith.constant 0 : index
    %c0_55 = arith.constant 0 : index
    %82 = vector.load %arg11[%c0_54, %c0_55] : memref<8x1xf32, #tpu.memory_space<vmem>>, vector<8x1xf32>
    %83 = tpu.reciprocal %82 {approx = true} : vector<8x1xf32> -> vector<8x1xf32>
    %84 = vector.broadcast %83 : vector<8x1xf32> to vector<8x8xf32>
    %85 = arith.mulf %81, %84 : vector<8x8xf32>
    %c0_56 = arith.constant 0 : index
    %c0_57 = arith.constant 0 : index
    %c0_58 = arith.constant 0 : index
    %86 = vector.load %arg8[%c0_56, %c0_57, %c0_58] : memref<1x8x8xf32, #tpu.memory_space<vmem>>, vector<1x8x8xf32>
    %87 = vector.shape_cast %86 : vector<1x8x8xf32> to vector<8x8xf32>
    %88 = vector.shape_cast %85 : vector<8x8xf32> to vector<1x8x8xf32>
    tpu.vector_store %arg8[%c0_56, %c0_57, %c0_58], %88 {strides = array<i32>} : memref<1x8x8xf32, #tpu.memory_space<vmem>>, vector<1x8x8xf32>,
    return
  }
  func.func @transform_0(%arg0: i32, %arg1: i32, %arg2: i32) -> (i32, i32, i32) {
    %c2_i32 = arith.constant 2 : i32
    %0 = arith.muli %arg0, %c2_i32 : i32
    %1 = arith.addi %0, %arg2 : i32
    %c0_i32 = arith.constant 0 : i32
    %c0_i32_0 = arith.constant 0 : i32
    return %arg1, %1, %c0_i32 : i32, i32, i32
  }
  func.func @transform_1(%arg0: i32, %arg1: i32, %arg2: i32) -> (i32, i32, i32) {
    %c2_i32 = arith.constant 2 : i32
    %0 = arith.muli %arg0, %c2_i32 : i32
    %1 = arith.addi %0, %arg2 : i32
    %c0_i32 = arith.constant 0 : i32
    %c0_i32_0 = arith.constant 0 : i32
    return %arg1, %1, %c0_i32 : i32, i32, i32
  }
  func.func @transform_2(%arg0: i32, %arg1: i32, %arg2: i32) -> (i32, i32, i32) {
    %c2_i32 = arith.constant 2 : i32
    %0 = arith.muli %arg0, %c2_i32 : i32
    %1 = arith.addi %0, %arg2 : i32
    %c0_i32 = arith.constant 0 : i32
    %c0_i32_0 = arith.constant 0 : i32
    return %arg1, %1, %c0_i32 : i32, i32, i32
  }
  func.func @transform_3(%arg0: i32, %arg1: i32, %arg2: i32) -> (i32, i32, i32) {
    %c2_i32 = arith.constant 2 : i32
    %0 = arith.muli %arg0, %c2_i32 : i32
    %1 = arith.addi %0, %arg2 : i32
    %c0_i32 = arith.constant 0 : i32
    %c0_i32_0 = arith.constant 0 : i32
    return %arg1, %1, %c0_i32 : i32, i32, i32
  }
  func.func @transform_4(%arg0: i32, %arg1: i32, %arg2: i32) -> (i32, i32, i32) {
    %c0_i32 = arith.constant 0 : i32
    %c0_i32_0 = arith.constant 0 : i32
    return %arg1, %arg0, %c0_i32 : i32, i32, i32
  }
  func.func @transform_5(%arg0: i32, %arg1: i32, %arg2: i32) -> (i32, i32, i32) {
    %c2_i32 = arith.constant 2 : i32
    %0 = arith.muli %arg0, %c2_i32 : i32
    %1 = arith.addi %0, %arg2 : i32
    %c0_i32 = arith.constant 0 : i32
    %c0_i32_0 = arith.constant 0 : i32
    return %arg1, %1, %c0_i32 : i32, i32, i32
  }
}

module attributes {stable_mosaic.version = 11 : i64} {
  func.func @_proj_kernel(%arg0: i32, %arg1: memref<32x32xf32, #tpu.memory_space<vmem>>, %arg2: memref<108x32xf32, #tpu.memory_space<vmem>>, %arg3: memref<32x8xf32, #tpu.memory_space<vmem>>, %arg4: memref<4x32x8xf32, #tpu.memory_space<vmem>>, %arg5: memref<4x32x8xf32, #tpu.memory_space<vmem>>, %arg6: memref<4x32x8xf32, #tpu.memory_space<vmem>>, %arg7: memref<4x32x8xf32, #tpu.memory_space<vmem>>, %arg8: memref<4x32x8xf32, #tpu.memory_space<vmem>>) attributes {dimension_semantics = [#tpu.dimension_semantics<parallel>], iteration_bounds = array<i64: 1>, scalar_prefetch = 0 : i64, scratch_operands = 0 : i64, tpu.core_type = #tpu.core_type<tc>, window_params = [{transform_indices = @transform_0, window_bounds = array<i64: 32, 32>}, {pipeline_mode = #tpu.pipeline_mode<synchronous>, transform_indices = @transform_1, window_bounds = array<i64: 108, 32>}, {pipeline_mode = #tpu.pipeline_mode<synchronous>, transform_indices = @transform_2, window_bounds = array<i64: 32, 8>}, {transform_indices = @transform_3, window_bounds = array<i64: 4, 32, 8>}, {transform_indices = @transform_4, window_bounds = array<i64: 4, 32, 8>}, {transform_indices = @transform_5, window_bounds = array<i64: 4, 32, 8>}, {transform_indices = @transform_6, window_bounds = array<i64: 4, 32, 8>}, {transform_indices = @transform_7, window_bounds = array<i64: 4, 32, 8>}]} {
    %c0 = arith.constant 0 : index
    %c0_0 = arith.constant 0 : index
    %0 = vector.load %arg1[%c0, %c0_0] : memref<32x32xf32, #tpu.memory_space<vmem>>, vector<32x32xf32>
    %c0_1 = arith.constant 0 : index
    %c0_2 = arith.constant 0 : index
    %1 = vector.load %arg2[%c0_1, %c0_2] : memref<108x32xf32, #tpu.memory_space<vmem>>, vector<108x32xf32>
    %cst = arith.constant dense<0.000000e+00> : vector<32x108xf32>
    %2 = tpu.matmul %0, %1, %cst {dimension_numbers = #tpu.dot_dimension_numbers<[1], [1], [0], [0], [0, 0, 1, 0], [], []>} : vector<32x32xf32>, vector<108x32xf32>, vector<32x108xf32> -> vector<32x108xf32>
    %3 = vector.extract_strided_slice %2 {offsets = [0, 0], sizes = [32, 32], strides = [1, 1]} : vector<32x108xf32> to vector<32x32xf32>
    %4 = vector.extract_strided_slice %2 {offsets = [0, 32], sizes = [32, 32], strides = [1, 1]} : vector<32x108xf32> to vector<32x32xf32>
    %5 = vector.extract_strided_slice %2 {offsets = [0, 64], sizes = [32, 32], strides = [1, 1]} : vector<32x108xf32> to vector<32x32xf32>
    %6 = vector.extract_strided_slice %2 {offsets = [0, 96], sizes = [32, 8], strides = [1, 1]} : vector<32x108xf32> to vector<32x8xf32>
    %7 = vector.extract_strided_slice %2 {offsets = [0, 104], sizes = [32, 4], strides = [1, 1]} : vector<32x108xf32> to vector<32x4xf32>
    %8 = arith.negf %7 : vector<32x4xf32>
    %9 = math.exp %8 : vector<32x4xf32>
    %cst_3 = arith.constant 1.000000e+00 : f32
    %10 = vector.broadcast %cst_3 : f32 to vector<32x4xf32>
    %11 = arith.addf %10, %9 : vector<32x4xf32>
    %12 = arith.divf %10, %11 : vector<32x4xf32>
    %cst_4 = arith.constant 2.000000e+00 : f32
    %13 = vector.broadcast %cst_4 : f32 to vector<32x4xf32>
    %14 = arith.mulf %13, %12 : vector<32x4xf32>
    %c0_5 = arith.constant 0 : index
    %c0_6 = arith.constant 0 : index
    %15 = vector.load %arg3[%c0_5, %c0_6] : memref<32x8xf32, #tpu.memory_space<vmem>>, vector<32x8xf32>
    %cst_7 = arith.constant dense<0.000000e+00> : vector<32x32xf32>
    %16 = tpu.matmul %6, %15, %cst_7 {dimension_numbers = #tpu.dot_dimension_numbers<[1], [1], [0], [0], [0, 0, 1, 0], [], []>} : vector<32x8xf32>, vector<32x8xf32>, vector<32x32xf32> -> vector<32x32xf32>
    %17 = vector.extract_strided_slice %3 {offsets = [0, 0], sizes = [32, 8], strides = [1, 1]} : vector<32x32xf32> to vector<32x8xf32>
    %c0_8 = arith.constant 0 : index
    %c0_9 = arith.constant 0 : index
    %c0_10 = arith.constant 0 : index
    %18 = vector.load %arg4[%c0_8, %c0_9, %c0_10] : memref<4x32x8xf32, #tpu.memory_space<vmem>>, vector<1x32x8xf32>
    %19 = vector.shape_cast %18 : vector<1x32x8xf32> to vector<32x8xf32>
    %20 = vector.shape_cast %17 : vector<32x8xf32> to vector<1x32x8xf32>
    tpu.vector_store %arg4[%c0_8, %c0_9, %c0_10], %20 {strides = array<i32>} : memref<4x32x8xf32, #tpu.memory_space<vmem>>, vector<1x32x8xf32>,
    %21 = vector.extract_strided_slice %4 {offsets = [0, 0], sizes = [32, 8], strides = [1, 1]} : vector<32x32xf32> to vector<32x8xf32>
    %c0_11 = arith.constant 0 : index
    %c0_12 = arith.constant 0 : index
    %c0_13 = arith.constant 0 : index
    %22 = vector.load %arg5[%c0_11, %c0_12, %c0_13] : memref<4x32x8xf32, #tpu.memory_space<vmem>>, vector<1x32x8xf32>
    %23 = vector.shape_cast %22 : vector<1x32x8xf32> to vector<32x8xf32>
    %24 = vector.shape_cast %21 : vector<32x8xf32> to vector<1x32x8xf32>
    tpu.vector_store %arg5[%c0_11, %c0_12, %c0_13], %24 {strides = array<i32>} : memref<4x32x8xf32, #tpu.memory_space<vmem>>, vector<1x32x8xf32>,
    %25 = vector.extract_strided_slice %5 {offsets = [0, 0], sizes = [32, 8], strides = [1, 1]} : vector<32x32xf32> to vector<32x8xf32>
    %c0_14 = arith.constant 0 : index
    %c0_15 = arith.constant 0 : index
    %c0_16 = arith.constant 0 : index
    %26 = vector.load %arg6[%c0_14, %c0_15, %c0_16] : memref<4x32x8xf32, #tpu.memory_space<vmem>>, vector<1x32x8xf32>
    %27 = vector.shape_cast %26 : vector<1x32x8xf32> to vector<32x8xf32>
    %28 = vector.shape_cast %25 : vector<32x8xf32> to vector<1x32x8xf32>
    tpu.vector_store %arg6[%c0_14, %c0_15, %c0_16], %28 {strides = array<i32>} : memref<4x32x8xf32, #tpu.memory_space<vmem>>, vector<1x32x8xf32>,
    %29 = vector.extract_strided_slice %16 {offsets = [0, 0], sizes = [32, 8], strides = [1, 1]} : vector<32x32xf32> to vector<32x8xf32>
    %30 = arith.mulf %29, %29 : vector<32x8xf32>
    %cst_17 = arith.constant dense<0.000000e+00> : vector<32xf32>
    %31 = vector.multi_reduction <add>, %30, %cst_17 [1] : vector<32x8xf32> to vector<32xf32>
    %32 = vector.shape_cast %31 : vector<32xf32> to vector<32x1xf32>
    %cst_18 = arith.constant 9.99999997E-7 : f32
    %33 = vector.broadcast %cst_18 : f32 to vector<32x1xf32>
    %34 = arith.addf %32, %33 : vector<32x1xf32>
    %35 = math.rsqrt %34 : vector<32x1xf32>
    %36 = vector.broadcast %35 : vector<32x1xf32> to vector<32x8xf32>
    %37 = arith.mulf %29, %36 : vector<32x8xf32>
    %c0_19 = arith.constant 0 : index
    %c0_20 = arith.constant 0 : index
    %c0_21 = arith.constant 0 : index
    %38 = vector.load %arg7[%c0_19, %c0_20, %c0_21] : memref<4x32x8xf32, #tpu.memory_space<vmem>>, vector<1x32x8xf32>
    %39 = vector.shape_cast %38 : vector<1x32x8xf32> to vector<32x8xf32>
    %40 = vector.shape_cast %37 : vector<32x8xf32> to vector<1x32x8xf32>
    tpu.vector_store %arg7[%c0_19, %c0_20, %c0_21], %40 {strides = array<i32>} : memref<4x32x8xf32, #tpu.memory_space<vmem>>, vector<1x32x8xf32>,
    %41 = vector.extract_strided_slice %14 {offsets = [0, 0], sizes = [32, 1], strides = [1, 1]} : vector<32x4xf32> to vector<32x1xf32>
    %42 = vector.broadcast %41 : vector<32x1xf32> to vector<32x8xf32>
    %43 = arith.mulf %42, %37 : vector<32x8xf32>
    %c0_22 = arith.constant 0 : index
    %c0_23 = arith.constant 0 : index
    %c0_24 = arith.constant 0 : index
    %44 = vector.load %arg8[%c0_22, %c0_23, %c0_24] : memref<4x32x8xf32, #tpu.memory_space<vmem>>, vector<1x32x8xf32>
    %45 = vector.shape_cast %44 : vector<1x32x8xf32> to vector<32x8xf32>
    %46 = vector.shape_cast %43 : vector<32x8xf32> to vector<1x32x8xf32>
    tpu.vector_store %arg8[%c0_22, %c0_23, %c0_24], %46 {strides = array<i32>} : memref<4x32x8xf32, #tpu.memory_space<vmem>>, vector<1x32x8xf32>,
    %47 = vector.extract_strided_slice %3 {offsets = [0, 8], sizes = [32, 8], strides = [1, 1]} : vector<32x32xf32> to vector<32x8xf32>
    %c1 = arith.constant 1 : index
    %c0_25 = arith.constant 0 : index
    %c0_26 = arith.constant 0 : index
    %48 = vector.load %arg4[%c1, %c0_25, %c0_26] : memref<4x32x8xf32, #tpu.memory_space<vmem>>, vector<1x32x8xf32>
    %49 = vector.shape_cast %48 : vector<1x32x8xf32> to vector<32x8xf32>
    %50 = vector.shape_cast %47 : vector<32x8xf32> to vector<1x32x8xf32>
    tpu.vector_store %arg4[%c1, %c0_25, %c0_26], %50 {strides = array<i32>} : memref<4x32x8xf32, #tpu.memory_space<vmem>>, vector<1x32x8xf32>,
    %51 = vector.extract_strided_slice %4 {offsets = [0, 8], sizes = [32, 8], strides = [1, 1]} : vector<32x32xf32> to vector<32x8xf32>
    %c1_27 = arith.constant 1 : index
    %c0_28 = arith.constant 0 : index
    %c0_29 = arith.constant 0 : index
    %52 = vector.load %arg5[%c1_27, %c0_28, %c0_29] : memref<4x32x8xf32, #tpu.memory_space<vmem>>, vector<1x32x8xf32>
    %53 = vector.shape_cast %52 : vector<1x32x8xf32> to vector<32x8xf32>
    %54 = vector.shape_cast %51 : vector<32x8xf32> to vector<1x32x8xf32>
    tpu.vector_store %arg5[%c1_27, %c0_28, %c0_29], %54 {strides = array<i32>} : memref<4x32x8xf32, #tpu.memory_space<vmem>>, vector<1x32x8xf32>,
    %55 = vector.extract_strided_slice %5 {offsets = [0, 8], sizes = [32, 8], strides = [1, 1]} : vector<32x32xf32> to vector<32x8xf32>
    %c1_30 = arith.constant 1 : index
    %c0_31 = arith.constant 0 : index
    %c0_32 = arith.constant 0 : index
    %56 = vector.load %arg6[%c1_30, %c0_31, %c0_32] : memref<4x32x8xf32, #tpu.memory_space<vmem>>, vector<1x32x8xf32>
    %57 = vector.shape_cast %56 : vector<1x32x8xf32> to vector<32x8xf32>
    %58 = vector.shape_cast %55 : vector<32x8xf32> to vector<1x32x8xf32>
    tpu.vector_store %arg6[%c1_30, %c0_31, %c0_32], %58 {strides = array<i32>} : memref<4x32x8xf32, #tpu.memory_space<vmem>>, vector<1x32x8xf32>,
    %59 = vector.extract_strided_slice %16 {offsets = [0, 8], sizes = [32, 8], strides = [1, 1]} : vector<32x32xf32> to vector<32x8xf32>
    %60 = arith.mulf %59, %59 : vector<32x8xf32>
    %cst_33 = arith.constant dense<0.000000e+00> : vector<32xf32>
    %61 = vector.multi_reduction <add>, %60, %cst_33 [1] : vector<32x8xf32> to vector<32xf32>
    %62 = vector.shape_cast %61 : vector<32xf32> to vector<32x1xf32>
    %cst_34 = arith.constant 9.99999997E-7 : f32
    %63 = vector.broadcast %cst_34 : f32 to vector<32x1xf32>
    %64 = arith.addf %62, %63 : vector<32x1xf32>
    %65 = math.rsqrt %64 : vector<32x1xf32>
    %66 = vector.broadcast %65 : vector<32x1xf32> to vector<32x8xf32>
    %67 = arith.mulf %59, %66 : vector<32x8xf32>
    %c1_35 = arith.constant 1 : index
    %c0_36 = arith.constant 0 : index
    %c0_37 = arith.constant 0 : index
    %68 = vector.load %arg7[%c1_35, %c0_36, %c0_37] : memref<4x32x8xf32, #tpu.memory_space<vmem>>, vector<1x32x8xf32>
    %69 = vector.shape_cast %68 : vector<1x32x8xf32> to vector<32x8xf32>
    %70 = vector.shape_cast %67 : vector<32x8xf32> to vector<1x32x8xf32>
    tpu.vector_store %arg7[%c1_35, %c0_36, %c0_37], %70 {strides = array<i32>} : memref<4x32x8xf32, #tpu.memory_space<vmem>>, vector<1x32x8xf32>,
    %71 = vector.extract_strided_slice %14 {offsets = [0, 1], sizes = [32, 1], strides = [1, 1]} : vector<32x4xf32> to vector<32x1xf32>
    %72 = vector.broadcast %71 : vector<32x1xf32> to vector<32x8xf32>
    %73 = arith.mulf %72, %67 : vector<32x8xf32>
    %c1_38 = arith.constant 1 : index
    %c0_39 = arith.constant 0 : index
    %c0_40 = arith.constant 0 : index
    %74 = vector.load %arg8[%c1_38, %c0_39, %c0_40] : memref<4x32x8xf32, #tpu.memory_space<vmem>>, vector<1x32x8xf32>
    %75 = vector.shape_cast %74 : vector<1x32x8xf32> to vector<32x8xf32>
    %76 = vector.shape_cast %73 : vector<32x8xf32> to vector<1x32x8xf32>
    tpu.vector_store %arg8[%c1_38, %c0_39, %c0_40], %76 {strides = array<i32>} : memref<4x32x8xf32, #tpu.memory_space<vmem>>, vector<1x32x8xf32>,
    %77 = vector.extract_strided_slice %3 {offsets = [0, 16], sizes = [32, 8], strides = [1, 1]} : vector<32x32xf32> to vector<32x8xf32>
    %c2 = arith.constant 2 : index
    %c0_41 = arith.constant 0 : index
    %c0_42 = arith.constant 0 : index
    %78 = vector.load %arg4[%c2, %c0_41, %c0_42] : memref<4x32x8xf32, #tpu.memory_space<vmem>>, vector<1x32x8xf32>
    %79 = vector.shape_cast %78 : vector<1x32x8xf32> to vector<32x8xf32>
    %80 = vector.shape_cast %77 : vector<32x8xf32> to vector<1x32x8xf32>
    tpu.vector_store %arg4[%c2, %c0_41, %c0_42], %80 {strides = array<i32>} : memref<4x32x8xf32, #tpu.memory_space<vmem>>, vector<1x32x8xf32>,
    %81 = vector.extract_strided_slice %4 {offsets = [0, 16], sizes = [32, 8], strides = [1, 1]} : vector<32x32xf32> to vector<32x8xf32>
    %c2_43 = arith.constant 2 : index
    %c0_44 = arith.constant 0 : index
    %c0_45 = arith.constant 0 : index
    %82 = vector.load %arg5[%c2_43, %c0_44, %c0_45] : memref<4x32x8xf32, #tpu.memory_space<vmem>>, vector<1x32x8xf32>
    %83 = vector.shape_cast %82 : vector<1x32x8xf32> to vector<32x8xf32>
    %84 = vector.shape_cast %81 : vector<32x8xf32> to vector<1x32x8xf32>
    tpu.vector_store %arg5[%c2_43, %c0_44, %c0_45], %84 {strides = array<i32>} : memref<4x32x8xf32, #tpu.memory_space<vmem>>, vector<1x32x8xf32>,
    %85 = vector.extract_strided_slice %5 {offsets = [0, 16], sizes = [32, 8], strides = [1, 1]} : vector<32x32xf32> to vector<32x8xf32>
    %c2_46 = arith.constant 2 : index
    %c0_47 = arith.constant 0 : index
    %c0_48 = arith.constant 0 : index
    %86 = vector.load %arg6[%c2_46, %c0_47, %c0_48] : memref<4x32x8xf32, #tpu.memory_space<vmem>>, vector<1x32x8xf32>
    %87 = vector.shape_cast %86 : vector<1x32x8xf32> to vector<32x8xf32>
    %88 = vector.shape_cast %85 : vector<32x8xf32> to vector<1x32x8xf32>
    tpu.vector_store %arg6[%c2_46, %c0_47, %c0_48], %88 {strides = array<i32>} : memref<4x32x8xf32, #tpu.memory_space<vmem>>, vector<1x32x8xf32>,
    %89 = vector.extract_strided_slice %16 {offsets = [0, 16], sizes = [32, 8], strides = [1, 1]} : vector<32x32xf32> to vector<32x8xf32>
    %90 = arith.mulf %89, %89 : vector<32x8xf32>
    %cst_49 = arith.constant dense<0.000000e+00> : vector<32xf32>
    %91 = vector.multi_reduction <add>, %90, %cst_49 [1] : vector<32x8xf32> to vector<32xf32>
    %92 = vector.shape_cast %91 : vector<32xf32> to vector<32x1xf32>
    %cst_50 = arith.constant 9.99999997E-7 : f32
    %93 = vector.broadcast %cst_50 : f32 to vector<32x1xf32>
    %94 = arith.addf %92, %93 : vector<32x1xf32>
    %95 = math.rsqrt %94 : vector<32x1xf32>
    %96 = vector.broadcast %95 : vector<32x1xf32> to vector<32x8xf32>
    %97 = arith.mulf %89, %96 : vector<32x8xf32>
    %c2_51 = arith.constant 2 : index
    %c0_52 = arith.constant 0 : index
    %c0_53 = arith.constant 0 : index
    %98 = vector.load %arg7[%c2_51, %c0_52, %c0_53] : memref<4x32x8xf32, #tpu.memory_space<vmem>>, vector<1x32x8xf32>
    %99 = vector.shape_cast %98 : vector<1x32x8xf32> to vector<32x8xf32>
    %100 = vector.shape_cast %97 : vector<32x8xf32> to vector<1x32x8xf32>
    tpu.vector_store %arg7[%c2_51, %c0_52, %c0_53], %100 {strides = array<i32>} : memref<4x32x8xf32, #tpu.memory_space<vmem>>, vector<1x32x8xf32>,
    %101 = vector.extract_strided_slice %14 {offsets = [0, 2], sizes = [32, 1], strides = [1, 1]} : vector<32x4xf32> to vector<32x1xf32>
    %102 = vector.broadcast %101 : vector<32x1xf32> to vector<32x8xf32>
    %103 = arith.mulf %102, %97 : vector<32x8xf32>
    %c2_54 = arith.constant 2 : index
    %c0_55 = arith.constant 0 : index
    %c0_56 = arith.constant 0 : index
    %104 = vector.load %arg8[%c2_54, %c0_55, %c0_56] : memref<4x32x8xf32, #tpu.memory_space<vmem>>, vector<1x32x8xf32>
    %105 = vector.shape_cast %104 : vector<1x32x8xf32> to vector<32x8xf32>
    %106 = vector.shape_cast %103 : vector<32x8xf32> to vector<1x32x8xf32>
    tpu.vector_store %arg8[%c2_54, %c0_55, %c0_56], %106 {strides = array<i32>} : memref<4x32x8xf32, #tpu.memory_space<vmem>>, vector<1x32x8xf32>,
    %107 = vector.extract_strided_slice %3 {offsets = [0, 24], sizes = [32, 8], strides = [1, 1]} : vector<32x32xf32> to vector<32x8xf32>
    %c3 = arith.constant 3 : index
    %c0_57 = arith.constant 0 : index
    %c0_58 = arith.constant 0 : index
    %108 = vector.load %arg4[%c3, %c0_57, %c0_58] : memref<4x32x8xf32, #tpu.memory_space<vmem>>, vector<1x32x8xf32>
    %109 = vector.shape_cast %108 : vector<1x32x8xf32> to vector<32x8xf32>
    %110 = vector.shape_cast %107 : vector<32x8xf32> to vector<1x32x8xf32>
    tpu.vector_store %arg4[%c3, %c0_57, %c0_58], %110 {strides = array<i32>} : memref<4x32x8xf32, #tpu.memory_space<vmem>>, vector<1x32x8xf32>,
    %111 = vector.extract_strided_slice %4 {offsets = [0, 24], sizes = [32, 8], strides = [1, 1]} : vector<32x32xf32> to vector<32x8xf32>
    %c3_59 = arith.constant 3 : index
    %c0_60 = arith.constant 0 : index
    %c0_61 = arith.constant 0 : index
    %112 = vector.load %arg5[%c3_59, %c0_60, %c0_61] : memref<4x32x8xf32, #tpu.memory_space<vmem>>, vector<1x32x8xf32>
    %113 = vector.shape_cast %112 : vector<1x32x8xf32> to vector<32x8xf32>
    %114 = vector.shape_cast %111 : vector<32x8xf32> to vector<1x32x8xf32>
    tpu.vector_store %arg5[%c3_59, %c0_60, %c0_61], %114 {strides = array<i32>} : memref<4x32x8xf32, #tpu.memory_space<vmem>>, vector<1x32x8xf32>,
    %115 = vector.extract_strided_slice %5 {offsets = [0, 24], sizes = [32, 8], strides = [1, 1]} : vector<32x32xf32> to vector<32x8xf32>
    %c3_62 = arith.constant 3 : index
    %c0_63 = arith.constant 0 : index
    %c0_64 = arith.constant 0 : index
    %116 = vector.load %arg6[%c3_62, %c0_63, %c0_64] : memref<4x32x8xf32, #tpu.memory_space<vmem>>, vector<1x32x8xf32>
    %117 = vector.shape_cast %116 : vector<1x32x8xf32> to vector<32x8xf32>
    %118 = vector.shape_cast %115 : vector<32x8xf32> to vector<1x32x8xf32>
    tpu.vector_store %arg6[%c3_62, %c0_63, %c0_64], %118 {strides = array<i32>} : memref<4x32x8xf32, #tpu.memory_space<vmem>>, vector<1x32x8xf32>,
    %119 = vector.extract_strided_slice %16 {offsets = [0, 24], sizes = [32, 8], strides = [1, 1]} : vector<32x32xf32> to vector<32x8xf32>
    %120 = arith.mulf %119, %119 : vector<32x8xf32>
    %cst_65 = arith.constant dense<0.000000e+00> : vector<32xf32>
    %121 = vector.multi_reduction <add>, %120, %cst_65 [1] : vector<32x8xf32> to vector<32xf32>
    %122 = vector.shape_cast %121 : vector<32xf32> to vector<32x1xf32>
    %cst_66 = arith.constant 9.99999997E-7 : f32
    %123 = vector.broadcast %cst_66 : f32 to vector<32x1xf32>
    %124 = arith.addf %122, %123 : vector<32x1xf32>
    %125 = math.rsqrt %124 : vector<32x1xf32>
    %126 = vector.broadcast %125 : vector<32x1xf32> to vector<32x8xf32>
    %127 = arith.mulf %119, %126 : vector<32x8xf32>
    %c3_67 = arith.constant 3 : index
    %c0_68 = arith.constant 0 : index
    %c0_69 = arith.constant 0 : index
    %128 = vector.load %arg7[%c3_67, %c0_68, %c0_69] : memref<4x32x8xf32, #tpu.memory_space<vmem>>, vector<1x32x8xf32>
    %129 = vector.shape_cast %128 : vector<1x32x8xf32> to vector<32x8xf32>
    %130 = vector.shape_cast %127 : vector<32x8xf32> to vector<1x32x8xf32>
    tpu.vector_store %arg7[%c3_67, %c0_68, %c0_69], %130 {strides = array<i32>} : memref<4x32x8xf32, #tpu.memory_space<vmem>>, vector<1x32x8xf32>,
    %131 = vector.extract_strided_slice %14 {offsets = [0, 3], sizes = [32, 1], strides = [1, 1]} : vector<32x4xf32> to vector<32x1xf32>
    %132 = vector.broadcast %131 : vector<32x1xf32> to vector<32x8xf32>
    %133 = arith.mulf %132, %127 : vector<32x8xf32>
    %c3_70 = arith.constant 3 : index
    %c0_71 = arith.constant 0 : index
    %c0_72 = arith.constant 0 : index
    %134 = vector.load %arg8[%c3_70, %c0_71, %c0_72] : memref<4x32x8xf32, #tpu.memory_space<vmem>>, vector<1x32x8xf32>
    %135 = vector.shape_cast %134 : vector<1x32x8xf32> to vector<32x8xf32>
    %136 = vector.shape_cast %133 : vector<32x8xf32> to vector<1x32x8xf32>
    tpu.vector_store %arg8[%c3_70, %c0_71, %c0_72], %136 {strides = array<i32>} : memref<4x32x8xf32, #tpu.memory_space<vmem>>, vector<1x32x8xf32>,
    return
  }
  func.func @transform_0(%arg0: i32) -> (i32, i32) {
    %c0_i32 = arith.constant 0 : i32
    %c0_i32_0 = arith.constant 0 : i32
    return %arg0, %c0_i32 : i32, i32
  }
  func.func @transform_1(%arg0: i32) -> (i32, i32) {
    %c0_i32 = arith.constant 0 : i32
    %c0_i32_0 = arith.constant 0 : i32
    %c0_i32_1 = arith.constant 0 : i32
    return %c0_i32, %c0_i32_0 : i32, i32
  }
  func.func @transform_2(%arg0: i32) -> (i32, i32) {
    %c0_i32 = arith.constant 0 : i32
    %c0_i32_0 = arith.constant 0 : i32
    %c0_i32_1 = arith.constant 0 : i32
    return %c0_i32, %c0_i32_0 : i32, i32
  }
  func.func @transform_3(%arg0: i32) -> (i32, i32, i32) {
    %c0_i32 = arith.constant 0 : i32
    %c0_i32_0 = arith.constant 0 : i32
    %c0_i32_1 = arith.constant 0 : i32
    return %c0_i32, %arg0, %c0_i32_0 : i32, i32, i32
  }
  func.func @transform_4(%arg0: i32) -> (i32, i32, i32) {
    %c0_i32 = arith.constant 0 : i32
    %c0_i32_0 = arith.constant 0 : i32
    %c0_i32_1 = arith.constant 0 : i32
    return %c0_i32, %arg0, %c0_i32_0 : i32, i32, i32
  }
  func.func @transform_5(%arg0: i32) -> (i32, i32, i32) {
    %c0_i32 = arith.constant 0 : i32
    %c0_i32_0 = arith.constant 0 : i32
    %c0_i32_1 = arith.constant 0 : i32
    return %c0_i32, %arg0, %c0_i32_0 : i32, i32, i32
  }
  func.func @transform_6(%arg0: i32) -> (i32, i32, i32) {
    %c0_i32 = arith.constant 0 : i32
    %c0_i32_0 = arith.constant 0 : i32
    %c0_i32_1 = arith.constant 0 : i32
    return %c0_i32, %arg0, %c0_i32_0 : i32, i32, i32
  }
  func.func @transform_7(%arg0: i32) -> (i32, i32, i32) {
    %c0_i32 = arith.constant 0 : i32
    %c0_i32_0 = arith.constant 0 : i32
    %c0_i32_1 = arith.constant 0 : i32
    return %c0_i32, %arg0, %c0_i32_0 : i32, i32, i32
  }
}

module attributes {stable_mosaic.version = 11 : i64} {
  func.func @_oproj_kernel(%arg0: i32, %arg1: memref<4x32x8xf32, #tpu.memory_space<vmem>>, %arg2: memref<32x32xf32, #tpu.memory_space<vmem>>, %arg3: memref<32x32xf32, #tpu.memory_space<vmem>>) attributes {dimension_semantics = [#tpu.dimension_semantics<parallel>], iteration_bounds = array<i64: 1>, scalar_prefetch = 0 : i64, scratch_operands = 0 : i64, tpu.core_type = #tpu.core_type<tc>, window_params = [{transform_indices = @transform_0, window_bounds = array<i64: 4, 32, 8>}, {pipeline_mode = #tpu.pipeline_mode<synchronous>, transform_indices = @transform_1, window_bounds = array<i64: 32, 32>}, {transform_indices = @transform_2, window_bounds = array<i64: 32, 32>}]} {
    %c0 = arith.constant 0 : index
    %c0_0 = arith.constant 0 : index
    %c0_1 = arith.constant 0 : index
    %0 = vector.load %arg1[%c0, %c0_0, %c0_1] : memref<4x32x8xf32, #tpu.memory_space<vmem>>, vector<1x32x8xf32>
    %1 = vector.shape_cast %0 : vector<1x32x8xf32> to vector<32x8xf32>
    %c1 = arith.constant 1 : index
    %c0_2 = arith.constant 0 : index
    %c0_3 = arith.constant 0 : index
    %2 = vector.load %arg1[%c1, %c0_2, %c0_3] : memref<4x32x8xf32, #tpu.memory_space<vmem>>, vector<1x32x8xf32>
    %3 = vector.shape_cast %2 : vector<1x32x8xf32> to vector<32x8xf32>
    %c2 = arith.constant 2 : index
    %c0_4 = arith.constant 0 : index
    %c0_5 = arith.constant 0 : index
    %4 = vector.load %arg1[%c2, %c0_4, %c0_5] : memref<4x32x8xf32, #tpu.memory_space<vmem>>, vector<1x32x8xf32>
    %5 = vector.shape_cast %4 : vector<1x32x8xf32> to vector<32x8xf32>
    %c3 = arith.constant 3 : index
    %c0_6 = arith.constant 0 : index
    %c0_7 = arith.constant 0 : index
    %6 = vector.load %arg1[%c3, %c0_6, %c0_7] : memref<4x32x8xf32, #tpu.memory_space<vmem>>, vector<1x32x8xf32>
    %7 = vector.shape_cast %6 : vector<1x32x8xf32> to vector<32x8xf32>
    %8 = tpu.concatenate %1, %3, %5, %7 in 1 : vector<32x8xf32>, vector<32x8xf32>, vector<32x8xf32>, vector<32x8xf32> -> vector<32x32xf32>
    %c0_8 = arith.constant 0 : index
    %c0_9 = arith.constant 0 : index
    %9 = vector.load %arg2[%c0_8, %c0_9] : memref<32x32xf32, #tpu.memory_space<vmem>>, vector<32x32xf32>
    %cst = arith.constant dense<0.000000e+00> : vector<32x32xf32>
    %10 = tpu.matmul %8, %9, %cst {dimension_numbers = #tpu.dot_dimension_numbers<[1], [1], [0], [0], [0, 0, 1, 0], [], []>} : vector<32x32xf32>, vector<32x32xf32>, vector<32x32xf32> -> vector<32x32xf32>
    %c0_10 = arith.constant 0 : index
    %c0_11 = arith.constant 0 : index
    %11 = vector.load %arg3[%c0_10, %c0_11] : memref<32x32xf32, #tpu.memory_space<vmem>>, vector<32x32xf32>
    tpu.vector_store %arg3[%c0_10, %c0_11], %10 {strides = array<i32>} : memref<32x32xf32, #tpu.memory_space<vmem>>, vector<32x32xf32>,
    return
  }
  func.func @transform_0(%arg0: i32) -> (i32, i32, i32) {
    %c0_i32 = arith.constant 0 : i32
    %c0_i32_0 = arith.constant 0 : i32
    %c0_i32_1 = arith.constant 0 : i32
    return %c0_i32, %arg0, %c0_i32_0 : i32, i32, i32
  }
  func.func @transform_1(%arg0: i32) -> (i32, i32) {
    %c0_i32 = arith.constant 0 : i32
    %c0_i32_0 = arith.constant 0 : i32
    %c0_i32_1 = arith.constant 0 : i32
    return %c0_i32, %c0_i32_0 : i32, i32
  }
  func.func @transform_2(%arg0: i32) -> (i32, i32) {
    %c0_i32 = arith.constant 0 : i32
    %c0_i32_0 = arith.constant 0 : i32
    return %arg0, %c0_i32 : i32, i32
  }
}

</mosaic_0001>

<llo_original>
// kernel: path_attention_forward.5
$region0: #{path_attention_forward.5}
  #allocation0 [shape = 'u32[]', space=smem, size = 0x4, offset = 0x4, fixed_abs, tag = 'smem constant byte address 0x4 - core index']
  #allocation1 [shape = 'u32[144,128]{1,0:T(1,128)}', space=vmem, size = 0x12000, scoped, tag = 'internal scratch']
  %s0 = inlined_call_operand.vmem [shape: f32[4,32,8], index: 0, kind: input, shape index: {}]
  %s1 = inlined_call_operand.vmem [shape: f32[32,32], index: 1, kind: input, shape index: {}]
  %s2 = inlined_call_operand.hbm [shape: f32[32,32], index: 2, kind: output, shape index: {}]
  %s3 = sld [smem:[#allocation0]]
  $region18: #{path_attention_forward.5} parent=0
    _
  %s5 = ssub.s32 1, %s3
  %s6 = scalar_select 0, %s5, %s3
  $region1: #{path_attention_forward.5} parent=0
    #allocation2 [shape = 'u8[16384]{0}', space=vmem, size = 0x4000, scoped, tag = 'output window, operand 0, single buffered']
    #allocation3 [shape = 's32[1]{0}', space=sflag, size = 0x4, scoped, tag = 'scoped memory for path_attention_forward.5']
    %7 = vsyncpa [#allocation3], 0
    // Predicated region
    $region2: #{path_attention_forward.5} parent=1 // pred_check
      _
    $region3: #{path_attention_forward.5} parent=1 // pred_check_branch
      %9 = sbr.rel (0) target = $region5
    $region4: #{path_attention_forward.5} parent=1 // pred_region
      _
    $region5: #{path_attention_forward.5} parent=1 // pred_fallthru
      _
    // Predicated region
    $region6: #{path_attention_forward.5} parent=1 // pred_check
      _
    $region7: #{path_attention_forward.5} parent=1 // pred_check_branch
      %11 = sbr.rel (0) target = $region9
    $region8: #{path_attention_forward.5} parent=1 // pred_region
      _
    $region9: #{path_attention_forward.5} parent=1 // pred_fallthru
      _
    %v12 = vld [vmem:[%s0] sm:$0xff]
    %v13 = vld [vmem:[%s0 + $0x8] sm:$0xff]
    %v14 = vld [vmem:[%s0 + $0x10] sm:$0xff]
    %v15 = vld [vmem:[%s0 + $0x18] sm:$0xff]
    %s16 = scalar_lea.vmem %s0, 32
    %v17 = vld [vmem:[%s16] sm:$0xff]
    %v18 = vld [vmem:[%s16 + $0x8] sm:$0xff]
    %v19 = vld [vmem:[%s16 + $0x10] sm:$0xff]
    %v20 = vld [vmem:[%s16 + $0x18] sm:$0xff]
    %s21 = scalar_lea.vmem %s0, 64
    %v22 = vld [vmem:[%s21] sm:$0xff]
    %v23 = vld [vmem:[%s21 + $0x8] sm:$0xff]
    %v24 = vld [vmem:[%s21 + $0x10] sm:$0xff]
    %v25 = vld [vmem:[%s21 + $0x18] sm:$0xff]
    %s26 = scalar_lea.vmem %s0, 96
    %v27 = vld [vmem:[%s26] sm:$0xff]
    %v28 = vld [vmem:[%s26 + $0x8] sm:$0xff]
    %v29 = vld [vmem:[%s26 + $0x10] sm:$0xff]
    %v30 = vld [vmem:[%s26 + $0x18] sm:$0xff]
    %35 = vrot.lane.b32.xlu0 %v17, 8
    %v36 = vpop.permute.xlu0 %35
    %37 = vrot.lane.b32.xlu0 %v18, 8
    %v38 = vpop.permute.xlu0 %37
    %39 = vrot.lane.b32.xlu0 %v19, 8
    %v40 = vpop.permute.xlu0 %39
    %41 = vrot.lane.b32.xlu0 %v20, 8
    %v42 = vpop.permute.xlu0 %41
    %51 = vrot.lane.b32.xlu0 %v22, 16
    %v52 = vpop.permute.xlu0 %51
    %53 = vrot.lane.b32.xlu0 %v23, 16
    %v54 = vpop.permute.xlu0 %53
    %55 = vrot.lane.b32.xlu0 %v24, 16
    %v56 = vpop.permute.xlu0 %55
    %57 = vrot.lane.b32.xlu0 %v25, 16
    %v58 = vpop.permute.xlu0 %57
    %67 = vrot.lane.b32.xlu0 %v27, 24
    %v68 = vpop.permute.xlu0 %67
    %69 = vrot.lane.b32.xlu0 %v28, 24
    %v70 = vpop.permute.xlu0 %69
    %71 = vrot.lane.b32.xlu0 %v29, 24
    %v72 = vpop.permute.xlu0 %71
    %73 = vrot.lane.b32.xlu0 %v30, 24
    %v74 = vpop.permute.xlu0 %73
    %vm79 = vcmask 64512
    %v80 = vsel %vm79, %v12, %v36
    %v81 = vsel %vm79, %v13, %v38
    %v82 = vsel %vm79, %v14, %v40
    %v83 = vsel %vm79, %v15, %v42
    %vm84 = vcmask 130048
    %v85 = vsel %vm84, %v80, %v52
    %v86 = vsel %vm84, %v81, %v54
    %v87 = vsel %vm84, %v82, %v56
    %v88 = vsel %vm84, %v83, %v58
    %vm89 = vcmask 195584
    %v90 = vsel %vm89, %v85, %v68
    %v91 = vsel %vm89, %v86, %v70
    %v92 = vsel %vm89, %v87, %v72
    %v93 = vsel %vm89, %v88, %v74
    %v94 = vld [vmem:[%s1] sm:$0xff]
    %v95 = vld [vmem:[%s1 + $0x8] sm:$0xff]
    %v96 = vld [vmem:[%s1 + $0x10] sm:$0xff]
    %v97 = vld [vmem:[%s1 + $0x18] sm:$0xff]
    %vm98 = vcmask 261120
    %v100 = vsel %vm98, %v90, 0
    %v103 = vsel %vm98, %v91, 0
    %v106 = vsel %vm98, %v92, 0
    %v109 = vsel %vm98, %v93, 0
    %v112 = vsel %vm98, %v94, 0
    %v115 = vsel %vm98, %v95, 0
    %v118 = vsel %vm98, %v96, 0
    %v121 = vsel %vm98, %v97, 0
    %123 = vmatprep.subr.mxu0 0.0
    %124 = vmatpush1.xpose.msra.mxu0 0.0
    %125 = vmatprep.subr.mxu0 0.0
    %126 = vmatpush1.xpose.msra.mxu0 0.0
    %127 = vmatprep.subr.mxu0 0.0
    %128 = vmatpush1.xpose.msra.mxu0 0.0
    %129 = vmatprep.subr.mxu0 0.0
    %130 = vmatpush1.xpose.msra.mxu0 0.0
    %131 = vmatprep.subr.mxu0 0.0
    %132 = vmatpush1.xpose.msra.mxu0 0.0
    %133 = vmatprep.subr.mxu0 0.0
    %134 = vmatpush1.xpose.msra.mxu0 0.0
    %135 = vmatprep.subr.mxu0 0.0
    %136 = vmatpush1.xpose.msra.mxu0 0.0
    %137 = vmatprep.subr.mxu0 0.0
    %138 = vmatpush1.xpose.msra.mxu0 0.0
    %139 = vmatprep.subr.mxu0 0.0
    %140 = vmatpush1.xpose.msra.mxu0 0.0
    %141 = vmatprep.subr.mxu0 0.0
    %142 = vmatpush1.xpose.msra.mxu0 0.0
    %143 = vmatprep.subr.mxu0 0.0
    %144 = vmatpush1.xpose.msra.mxu0 0.0
    %145 = vmatprep.subr.mxu0 0.0
    %146 = vmatpush1.xpose.msra.mxu0 0.0
    %147 = vmatprep.subr.mxu0 0.0
    %148 = vmatpush1.xpose.msra.mxu0 %v121
    %149 = vmatprep.subr.mxu0 0.0
    %150 = vmatpush1.xpose.msra.mxu0 %v118
    %151 = vmatprep.subr.mxu0 0.0
    %152 = vmatpush1.xpose.msra.mxu0 %v115
    %153 = vmatprep.subr.mxu0 0.0
    %154 = vmatpush1.xpose.msra.mxu0 %v112
    %155 = vmatprep.subr.mxu0 0.0
    %156 = vmatpush2.xpose.msra.mxu0 0.0
    %157 = vmatprep.subr.mxu0 0.0
    %158 = vmatpush2.xpose.msra.mxu0 0.0
    %159 = vmatprep.subr.mxu0 0.0
    %160 = vmatpush2.xpose.msra.mxu0 0.0
    %161 = vmatprep.subr.mxu0 0.0
    %162 = vmatpush2.xpose.msra.mxu0 0.0
    %163 = vmatprep.subr.mxu0 0.0
    %164 = vmatpush2.xpose.msra.mxu0 0.0
    %165 = vmatprep.subr.mxu0 0.0
    %166 = vmatpush2.xpose.msra.mxu0 0.0
    %167 = vmatprep.subr.mxu0 0.0
    %168 = vmatpush2.xpose.msra.mxu0 0.0
    %169 = vmatprep.subr.mxu0 0.0
    %170 = vmatpush2.xpose.msra.mxu0 0.0
    %171 = vmatprep.subr.mxu0 0.0
    %172 = vmatpush2.xpose.msra.mxu0 0.0
    %173 = vmatprep.subr.mxu0 0.0
    %174 = vmatpush2.xpose.msra.mxu0 0.0
    %175 = vmatprep.subr.mxu0 0.0
    %176 = vmatpush2.xpose.msra.mxu0 0.0
    %177 = vmatprep.subr.mxu0 0.0
    %178 = vmatpush2.xpose.msra.mxu0 0.0
    %179 = vmatprep.subr.mxu0 0.0
    %180 = vmatpush2.xpose.msra.mxu0 0.0
    %181 = vmatprep.subr.mxu0 0.0
    %182 = vmatpush2.xpose.msra.mxu0 0.0
    %183 = vmatprep.subr.mxu0 0.0
    %184 = vmatpush2.xpose.msra.mxu0 0.0
    %185 = vmatprep.subr.mxu0 0.0
    %186 = vmatpush2.xpose.msra.mxu0 0.0
    %187 = vmatprep.mubr.f32.mxu0 0.0
    %188 = vmatmul.mubr.f32.gmra.mxu0 %v100
    %v189 = vpop.f32.mrf.mxu0
    %v190 = vadd.f32 0.0, %v189
    %v191 = vpop.f32.mrf.mxu0
    %192 = vmatprep.mubr.f32.mxu0 0.0
    %193 = vmatmul.mubr.f32.gmra.mxu0 %v103
    %v194 = vpop.f32.mrf.mxu0
    %v195 = vadd.f32 0.0, %v194
    %v196 = vpop.f32.mrf.mxu0
    %197 = vmatprep.mubr.f32.mxu0 0.0
    %198 = vmatmul.mubr.f32.gmra.mxu0 %v106
    %v199 = vpop.f32.mrf.mxu0
    %v200 = vadd.f32 0.0, %v199
    %v201 = vpop.f32.mrf.mxu0
    %202 = vmatprep.mubr.f32.mxu0 0.0
    %203 = vmatmul.mubr.f32.gmra.mxu0 %v109
    %v204 = vpop.f32.mrf.mxu0
    %v205 = vadd.f32 0.0, %v204
    %v206 = vpop.f32.mrf.mxu0
    %207 = vdwg.mxu0
    %208 = vst.msk [vmem:[#allocation2] sm:$0xff] %vm98, %v190
    %209 = vst.msk [vmem:[#allocation2 + $0x8] sm:$0xff] %vm98, %v195
    %210 = vst.msk [vmem:[#allocation2 + $0x10] sm:$0xff] %vm98, %v200
    %211 = vst.msk [vmem:[#allocation2 + $0x18] sm:$0xff] %vm98, %v205
    // Predicated region
    $region10: #{path_attention_forward.5} parent=1 // pred_check
      _
    $region11: #{path_attention_forward.5} parent=1 // pred_check_branch
      %213 = sbr.rel (0) target = $region13
    $region12: #{path_attention_forward.5} parent=1 // pred_region
      %s215 = ssub.s32 512, 512
      %216 = vsyncadd [#allocation3], %s215
      %s217 = sshll.u32 [#allocation2], 4
      %s218 = int_to_ptr.vmem [resolvable:$true] %s217
      %223 = dma.vmem_to_hbm [thread:$0]  %s218, 512, %s2, [#allocation3], 128, 128, 8
    $region13: #{path_attention_forward.5} parent=1 // pred_fallthru
      _
    // Predicated region
    $region14: #{path_attention_forward.5} parent=1 // pred_check
      _
    $region15: #{path_attention_forward.5} parent=1 // pred_check_branch
      %225 = sbr.rel (0) target = $region17
    $region16: #{path_attention_forward.5} parent=1 // pred_region
      %226 = dma.done [#allocation3], 512
    $region17: #{path_attention_forward.5} parent=1 // pred_fallthru
      _
    %227 = vsyncpa [#allocation3], 1

// kernel: path_attention_forward.3
$region0: #{path_attention_forward.3}
  #allocation0 [shape = 'u32[]', space=smem, size = 0x4, offset = 0x4, fixed_abs, tag = 'smem constant byte address 0x4 - core index']
  #allocation1 [shape = 'u32[144,128]{1,0:T(1,128)}', space=vmem, size = 0x12000, scoped, tag = 'internal scratch']
  %s0 = inlined_call_operand.vmem [shape: f32[32,32], index: 0, kind: input, shape index: {}]
  %s1 = inlined_call_operand.vmem [shape: f32[108,32], index: 1, kind: input, shape index: {}]
  %s2 = inlined_call_operand.vmem [shape: f32[32,8], index: 2, kind: input, shape index: {}]
  %s3 = inlined_call_operand.vmem [shape: f32[4,32,8], index: 3, kind: output, shape index: {0}]
  %s4 = inlined_call_operand.vmem [shape: f32[4,32,8], index: 4, kind: output, shape index: {1}]
  %s5 = inlined_call_operand.vmem [shape: f32[4,32,8], index: 5, kind: output, shape index: {2}]
  %s6 = inlined_call_operand.vmem [shape: f32[4,32,8], index: 6, kind: output, shape index: {3}]
  %s7 = inlined_call_operand.vmem [shape: f32[4,32,8], index: 7, kind: output, shape index: {4}]
  %8 = xla_tuple %s3, %s4, %s5, %s6, %s7
  %s9 = sld [smem:[#allocation0]]
  $region54: #{path_attention_forward.3} parent=0
    _
  %s11 = ssub.s32 1, %s9
  %s12 = scalar_select 0, %s11, %s9
  // Predicated region
  $region2: #{path_attention_forward.3} parent=0 // pred_check
    _
  $region3: #{path_attention_forward.3} parent=0 // pred_check_branch
    %14 = sbr.rel (0) target = $region5
  $region4: #{path_attention_forward.3} parent=0 // pred_region
    _
  $region5: #{path_attention_forward.3} parent=0 // pred_fallthru
    _
  // Predicated region
  $region6: #{path_attention_forward.3} parent=0 // pred_check
    _
  $region7: #{path_attention_forward.3} parent=0 // pred_check_branch
    %16 = sbr.rel (0) target = $region9
  $region8: #{path_attention_forward.3} parent=0 // pred_region
    _
  $region9: #{path_attention_forward.3} parent=0 // pred_fallthru
    _
  // Predicated region
  $region10: #{path_attention_forward.3} parent=0 // pred_check
    _
  $region11: #{path_attention_forward.3} parent=0 // pred_check_branch
    %18 = sbr.rel (0) target = $region13
  $region12: #{path_attention_forward.3} parent=0 // pred_region
    _
  $region13: #{path_attention_forward.3} parent=0 // pred_fallthru
    _
  %v19 = vld [vmem:[%s0] sm:$0xff]
  %v20 = vld [vmem:[%s0 + $0x8] sm:$0xff]
  %v21 = vld [vmem:[%s0 + $0x10] sm:$0xff]
  %v22 = vld [vmem:[%s0 + $0x18] sm:$0xff]
  %v23 = vld [vmem:[%s1] sm:$0xff]
  %v24 = vld [vmem:[%s1 + $0x8] sm:$0xff]
  %v25 = vld [vmem:[%s1 + $0x10] sm:$0xff]
  %v26 = vld [vmem:[%s1 + $0x18] sm:$0xff]
  %v27 = vld [vmem:[%s1 + $0x20] sm:$0xff]
  %v28 = vld [vmem:[%s1 + $0x28] sm:$0xff]
  %v29 = vld [vmem:[%s1 + $0x30] sm:$0xff]
  %v30 = vld [vmem:[%s1 + $0x38] sm:$0xff]
  %v31 = vld [vmem:[%s1 + $0x40] sm:$0xff]
  %v32 = vld [vmem:[%s1 + $0x48] sm:$0xff]
  %v33 = vld [vmem:[%s1 + $0x50] sm:$0xff]
  %v34 = vld [vmem:[%s1 + $0x58] sm:$0xff]
  %v35 = vld [vmem:[%s1 + $0x60] sm:$0xff]
  %v36 = vld [vmem:[%s1 + $0x68] sm:$0xf]
  %vm37 = vcmask 261120
  %v39 = vsel %vm37, %v19, 0
  %v42 = vsel %vm37, %v20, 0
  %v45 = vsel %vm37, %v21, 0
  %v48 = vsel %vm37, %v22, 0
  %v51 = vsel %vm37, %v23, 0
  %v54 = vsel %vm37, %v24, 0
  %v57 = vsel %vm37, %v25, 0
  %v60 = vsel %vm37, %v26, 0
  %v63 = vsel %vm37, %v27, 0
  %v66 = vsel %vm37, %v28, 0
  %v69 = vsel %vm37, %v29, 0
  %v72 = vsel %vm37, %v30, 0
  %v75 = vsel %vm37, %v31, 0
  %v78 = vsel %vm37, %v32, 0
  %v81 = vsel %vm37, %v33, 0
  %v84 = vsel %vm37, %v34, 0
  %v87 = vsel %vm37, %v35, 0
  %v90 = vsel %vm37, %v36, 0
  %92 = vmatprep.subr.mxu0 0.0
  %93 = vmatpush1.xpose.msra.mxu0 0.0
  %94 = vmatprep.subr.mxu0 0.0
  %95 = vmatpush1.xpose.msra.mxu0 0.0
  %96 = vmatprep.subr.mxu0 0.0
  %97 = vmatpush1.xpose.msra.mxu0 %v90
  %98 = vmatprep.subr.mxu0 0.0
  %99 = vmatpush1.xpose.msra.mxu0 %v87
  %100 = vmatprep.subr.mxu0 0.0
  %101 = vmatpush1.xpose.msra.mxu0 %v84
  %102 = vmatprep.subr.mxu0 0.0
  %103 = vmatpush1.xpose.msra.mxu0 %v81
  %104 = vmatprep.subr.mxu0 0.0
  %105 = vmatpush1.xpose.msra.mxu0 %v78
  %106 = vmatprep.subr.mxu0 0.0
  %107 = vmatpush1.xpose.msra.mxu0 %v75
  %108 = vmatprep.subr.mxu0 0.0
  %109 = vmatpush1.xpose.msra.mxu0 %v72
  %110 = vmatprep.subr.mxu0 0.0
  %111 = vmatpush1.xpose.msra.mxu0 %v69
  %112 = vmatprep.subr.mxu0 0.0
  %113 = vmatpush1.xpose.msra.mxu0 %v66
  %114 = vmatprep.subr.mxu0 0.0
  %115 = vmatpush1.xpose.msra.mxu0 %v63
  %116 = vmatprep.subr.mxu0 0.0
  %117 = vmatpush1.xpose.msra.mxu0 %v60
  %118 = vmatprep.subr.mxu0 0.0
  %119 = vmatpush1.xpose.msra.mxu0 %v57
  %120 = vmatprep.subr.mxu0 0.0
  %121 = vmatpush1.xpose.msra.mxu0 %v54
  %122 = vmatprep.subr.mxu0 0.0
  %123 = vmatpush1.xpose.msra.mxu0 %v51
  %124 = vmatprep.subr.mxu0 0.0
  %125 = vmatpush2.xpose.msra.mxu0 0.0
  %126 = vmatprep.subr.mxu0 0.0
  %127 = vmatpush2.xpose.msra.mxu0 0.0
  %128 = vmatprep.subr.mxu0 0.0
  %129 = vmatpush2.xpose.msra.mxu0 0.0
  %130 = vmatprep.subr.mxu0 0.0
  %131 = vmatpush2.xpose.msra.mxu0 0.0
  %132 = vmatprep.subr.mxu0 0.0
  %133 = vmatpush2.xpose.msra.mxu0 0.0
  %134 = vmatprep.subr.mxu0 0.0
  %135 = vmatpush2.xpose.msra.mxu0 0.0
  %136 = vmatprep.subr.mxu0 0.0
  %137 = vmatpush2.xpose.msra.mxu0 0.0
  %138 = vmatprep.subr.mxu0 0.0
  %139 = vmatpush2.xpose.msra.mxu0 0.0
  %140 = vmatprep.subr.mxu0 0.0
  %141 = vmatpush2.xpose.msra.mxu0 0.0
  %142 = vmatprep.subr.mxu0 0.0
  %143 = vmatpush2.xpose.msra.mxu0 0.0
  %144 = vmatprep.subr.mxu0 0.0
  %145 = vmatpush2.xpose.msra.mxu0 0.0
  %146 = vmatprep.subr.mxu0 0.0
  %147 = vmatpush2.xpose.msra.mxu0 0.0
  %148 = vmatprep.subr.mxu0 0.0
  %149 = vmatpush2.xpose.msra.mxu0 0.0
  %150 = vmatprep.subr.mxu0 0.0
  %151 = vmatpush2.xpose.msra.mxu0 0.0
  %152 = vmatprep.subr.mxu0 0.0
  %153 = vmatpush2.xpose.msra.mxu0 0.0
  %154 = vmatprep.subr.mxu0 0.0
  %155 = vmatpush2.xpose.msra.mxu0 0.0
  %156 = vmatprep.mubr.f32.mxu0 0.0
  %157 = vmatmul.mubr.f32.gmra.mxu0 %v39
  %v158 = vpop.f32.mrf.mxu0
  %v159 = vadd.f32 0.0, %v158
  %v160 = vpop.f32.mrf.mxu0
  %161 = vmatprep.mubr.f32.mxu0 0.0
  %162 = vmatmul.mubr.f32.gmra.mxu0 %v42
  %v163 = vpop.f32.mrf.mxu0
  %v164 = vadd.f32 0.0, %v163
  %v165 = vpop.f32.mrf.mxu0
  %166 = vmatprep.mubr.f32.mxu0 0.0
  %167 = vmatmul.mubr.f32.gmra.mxu0 %v45
  %v168 = vpop.f32.mrf.mxu0
  %v169 = vadd.f32 0.0, %v168
  %v170 = vpop.f32.mrf.mxu0
  %171 = vmatprep.mubr.f32.mxu0 0.0
  %172 = vmatmul.mubr.f32.gmra.mxu0 %v48
  %v173 = vpop.f32.mrf.mxu0
  %v174 = vadd.f32 0.0, %v173
  %v175 = vpop.f32.mrf.mxu0
  %176 = vdwg.mxu0
  %v177 = vxor.u32 %v159, 2147483648
  %v178 = vxor.u32 %v164, 2147483648
  %v179 = vxor.u32 %v169, 2147483648
  %v180 = vxor.u32 %v174, 2147483648
  %v181 = vmul.f32 %v177, 1.442695
  %v182 = vpow.pop %v181
  %v183 = vmul.f32 %v178, 1.442695
  %v184 = vpow.pop %v183
  %v185 = vmul.f32 %v179, 1.442695
  %v186 = vpow.pop %v185
  %v187 = vmul.f32 %v180, 1.442695
  %v188 = vpow.pop %v187
  %v189 = vadd.f32 %v182, 1.0
  %v190 = vadd.f32 %v184, 1.0
  %v191 = vadd.f32 %v186, 1.0
  %v192 = vadd.f32 %v188, 1.0
  %v193 = vrcp.pop %v189
  %v194 = vmul.f32 1.0, %v193
  %v195 = vrcp.pop %v190
  %v196 = vmul.f32 1.0, %v195
  %v197 = vrcp.pop %v191
  %v198 = vmul.f32 1.0, %v197
  %v199 = vrcp.pop %v192
  %v200 = vmul.f32 1.0, %v199
  %v201 = vmul.f32 %v194, 2.0
  %v202 = vmul.f32 %v196, 2.0
  %v203 = vmul.f32 %v198, 2.0
  %v204 = vmul.f32 %v200, 2.0
  %v205 = vld [vmem:[%s2] sm:$0xff]
  %v206 = vld [vmem:[%s2 + $0x8] sm:$0xff]
  %v207 = vld [vmem:[%s2 + $0x10] sm:$0xff]
  %v208 = vld [vmem:[%s2 + $0x18] sm:$0xff]
  %213 = vrot.lane.b32.xlu0 %v159, 32
  %v214 = vpop.permute.xlu0 %213
  %215 = vrot.lane.b32.xlu0 %v164, 32
  %v216 = vpop.permute.xlu0 %215
  %217 = vrot.lane.b32.xlu0 %v169, 32
  %v218 = vpop.permute.xlu0 %217
  %219 = vrot.lane.b32.xlu0 %v174, 32
  %v220 = vpop.permute.xlu0 %219
  %vm221 = vcmask 64512
  %v222 = vsel %vm221, %v214, 0
  %v224 = vsel %vm221, %v216, 0
  %v226 = vsel %vm221, %v218, 0
  %v228 = vsel %vm221, %v220, 0
  %v231 = vsel %vm221, %v205, 0
  %v234 = vsel %vm221, %v206, 0
  %v237 = vsel %vm221, %v207, 0
  %v240 = vsel %vm221, %v208, 0
  %242 = vmatprep.subr.mxu0 0.0
  %243 = vmatpush1.xpose.msra.mxu0 0.0
  %244 = vmatprep.subr.mxu0 0.0
  %245 = vmatpush1.xpose.msra.mxu0 0.0
  %246 = vmatprep.subr.mxu0 0.0
  %247 = vmatpush1.xpose.msra.mxu0 0.0
  %248 = vmatprep.subr.mxu0 0.0
  %249 = vmatpush1.xpose.msra.mxu0 0.0
  %250 = vmatprep.subr.mxu0 0.0
  %251 = vmatpush1.xpose.msra.mxu0 0.0
  %252 = vmatprep.subr.mxu0 0.0
  %253 = vmatpush1.xpose.msra.mxu0 0.0
  %254 = vmatprep.subr.mxu0 0.0
  %255 = vmatpush1.xpose.msra.mxu0 0.0
  %256 = vmatprep.subr.mxu0 0.0
  %257 = vmatpush1.xpose.msra.mxu0 0.0
  %258 = vmatprep.subr.mxu0 0.0
  %259 = vmatpush1.xpose.msra.mxu0 0.0
  %260 = vmatprep.subr.mxu0 0.0
  %261 = vmatpush1.xpose.msra.mxu0 0.0
  %262 = vmatprep.subr.mxu0 0.0
  %263 = vmatpush1.xpose.msra.mxu0 0.0
  %264 = vmatprep.subr.mxu0 0.0
  %265 = vmatpush1.xpose.msra.mxu0 0.0
  %266 = vmatprep.subr.mxu0 0.0
  %267 = vmatpush1.xpose.msra.mxu0 %v240
  %268 = vmatprep.subr.mxu0 0.0
  %269 = vmatpush1.xpose.msra.mxu0 %v237
  %270 = vmatprep.subr.mxu0 0.0
  %271 = vmatpush1.xpose.msra.mxu0 %v234
  %272 = vmatprep.subr.mxu0 0.0
  %273 = vmatpush1.xpose.msra.mxu0 %v231
  %274 = vmatprep.subr.mxu0 0.0
  %275 = vmatpush2.xpose.msra.mxu0 0.0
  %276 = vmatprep.subr.mxu0 0.0
  %277 = vmatpush2.xpose.msra.mxu0 0.0
  %278 = vmatprep.subr.mxu0 0.0
  %279 = vmatpush2.xpose.msra.mxu0 0.0
  %280 = vmatprep.subr.mxu0 0.0
  %281 = vmatpush2.xpose.msra.mxu0 0.0
  %282 = vmatprep.subr.mxu0 0.0
  %283 = vmatpush2.xpose.msra.mxu0 0.0
  %284 = vmatprep.subr.mxu0 0.0
  %285 = vmatpush2.xpose.msra.mxu0 0.0
  %286 = vmatprep.subr.mxu0 0.0
  %287 = vmatpush2.xpose.msra.mxu0 0.0
  %288 = vmatprep.subr.mxu0 0.0
  %289 = vmatpush2.xpose.msra.mxu0 0.0
  %290 = vmatprep.subr.mxu0 0.0
  %291 = vmatpush2.xpose.msra.mxu0 0.0
  %292 = vmatprep.subr.mxu0 0.0
  %293 = vmatpush2.xpose.msra.mxu0 0.0
  %294 = vmatprep.subr.mxu0 0.0
  %295 = vmatpush2.xpose.msra.mxu0 0.0
  %296 = vmatprep.subr.mxu0 0.0
  %297 = vmatpush2.xpose.msra.mxu0 0.0
  %298 = vmatprep.subr.mxu0 0.0
  %299 = vmatpush2.xpose.msra.mxu0 0.0
  %300 = vmatprep.subr.mxu0 0.0
  %301 = vmatpush2.xpose.msra.mxu0 0.0
  %302 = vmatprep.subr.mxu0 0.0
  %303 = vmatpush2.xpose.msra.mxu0 0.0
  %304 = vmatprep.subr.mxu0 0.0
  %305 = vmatpush2.xpose.msra.mxu0 0.0
  %306 = vmatprep.mubr.f32.mxu0 0.0
  %307 = vmatmul.mubr.f32.gmra.mxu0 %v222
  %v308 = vpop.f32.mrf.mxu0
  %v309 = vadd.f32 0.0, %v308
  %v310 = vpop.f32.mrf.mxu0
  %311 = vmatprep.mubr.f32.mxu0 0.0
  %312 = vmatmul.mubr.f32.gmra.mxu0 %v224
  %v313 = vpop.f32.mrf.mxu0
  %v314 = vadd.f32 0.0, %v313
  %v315 = vpop.f32.mrf.mxu0
  %316 = vmatprep.mubr.f32.mxu0 0.0
  %317 = vmatmul.mubr.f32.gmra.mxu0 %v226
  %v318 = vpop.f32.mrf.mxu0
  %v319 = vadd.f32 0.0, %v318
  %v320 = vpop.f32.mrf.mxu0
  %321 = vmatprep.mubr.f32.mxu0 0.0
  %322 = vmatmul.mubr.f32.gmra.mxu0 %v228
  %v323 = vpop.f32.mrf.mxu0
  %v324 = vadd.f32 0.0, %v323
  %v325 = vpop.f32.mrf.mxu0
  %326 = vdwg.mxu0
  %327 = vst.msk [vmem:[%s3] sm:$0xff] %vm221, %v159
  %328 = vst.msk [vmem:[%s3 + $0x8] sm:$0xff] %vm221, %v164
  %329 = vst.msk [vmem:[%s3 + $0x10] sm:$0xff] %vm221, %v169
  %330 = vst.msk [vmem:[%s3 + $0x18] sm:$0xff] %vm221, %v174
  %331 = vrot.lane.b32.xlu0 %v159, 96
  %v332 = vpop.permute.xlu0 %331
  %333 = vrot.lane.b32.xlu0 %v164, 96
  %v334 = vpop.permute.xlu0 %333
  %335 = vrot.lane.b32.xlu0 %v169, 96
  %v336 = vpop.permute.xlu0 %335
  %337 = vrot.lane.b32.xlu0 %v174, 96
  %v338 = vpop.permute.xlu0 %337
  %343 = vst.msk [vmem:[%s4] sm:$0xff] %vm221, %v332
  %344 = vst.msk [vmem:[%s4 + $0x8] sm:$0xff] %vm221, %v334
  %345 = vst.msk [vmem:[%s4 + $0x10] sm:$0xff] %vm221, %v336
  %346 = vst.msk [vmem:[%s4 + $0x18] sm:$0xff] %vm221, %v338
  %347 = vrot.lane.b32.xlu0 %v159, 64
  %v348 = vpop.permute.xlu0 %347
  %349 = vrot.lane.b32.xlu0 %v164, 64
  %v350 = vpop.permute.xlu0 %349
  %351 = vrot.lane.b32.xlu0 %v169, 64
  %v352 = vpop.permute.xlu0 %351
  %353 = vrot.lane.b32.xlu0 %v174, 64
  %v354 = vpop.permute.xlu0 %353
  %359 = vst.msk [vmem:[%s5] sm:$0xff] %vm221, %v348
  %360 = vst.msk [vmem:[%s5 + $0x8] sm:$0xff] %vm221, %v350
  %361 = vst.msk [vmem:[%s5 + $0x10] sm:$0xff] %vm221, %v352
  %362 = vst.msk [vmem:[%s5 + $0x18] sm:$0xff] %vm221, %v354
  %v363 = vmul.f32 %v309, %v309
  %v364 = vmul.f32 %v314, %v314
  %v365 = vmul.f32 %v319, %v319
  %v366 = vmul.f32 %v324, %v324
  %v367 = vsel %vm221, %v363, 0.0
  %368 = vadd.xlane.f32.xlu0 %v367
  %v369 = vpop.xlane.xlu0 %368
  %v370 = vsel %vm221, %v364, 0.0
  %371 = vadd.xlane.f32.xlu0 %v370
  %v372 = vpop.xlane.xlu0 %371
  %v373 = vsel %vm221, %v365, 0.0
  %374 = vadd.xlane.f32.xlu0 %v373
  %v375 = vpop.xlane.xlu0 %374
  %v376 = vsel %vm221, %v366, 0.0
  %377 = vadd.xlane.f32.xlu0 %v376
  %v378 = vpop.xlane.xlu0 %377
  %v379 = vadd.f32 %v369, 1e-06
  %v380 = vadd.f32 %v372, 1e-06
  %v381 = vadd.f32 %v375, 1e-06
  %v382 = vadd.f32 %v378, 1e-06
  %v383 = vrsqrt.pop %v379
  %v384 = vrsqrt.pop %v380
  %v385 = vrsqrt.pop %v381
  %v386 = vrsqrt.pop %v382
  %v387 = vmul.f32 %v309, %v383
  %v388 = vmul.f32 %v314, %v384
  %v389 = vmul.f32 %v319, %v385
  %v390 = vmul.f32 %v324, %v386
  %391 = vst.msk [vmem:[%s6] sm:$0xff] %vm221, %v387
  %392 = vst.msk [vmem:[%s6 + $0x8] sm:$0xff] %vm221, %v388
  %393 = vst.msk [vmem:[%s6 + $0x10] sm:$0xff] %vm221, %v389
  %394 = vst.msk [vmem:[%s6 + $0x18] sm:$0xff] %vm221, %v390
  %396 = vset.pattern.permute.xlu0 104
  %397 = vperm.xlu0 %396, %v201
  %v398 = vpop.permute.xlu0 %397
  %401 = vset.pattern.permute.xlu0 104
  %402 = vperm.xlu0 %401, %v202
  %v403 = vpop.permute.xlu0 %402
  %406 = vset.pattern.permute.xlu0 104
  %407 = vperm.xlu0 %406, %v203
  %v408 = vpop.permute.xlu0 %407
  %411 = vset.pattern.permute.xlu0 104
  %412 = vperm.xlu0 %411, %v204
  %v413 = vpop.permute.xlu0 %412
  %v415 = vmul.f32 %v398, %v387
  %v416 = vmul.f32 %v403, %v388
  %v417 = vmul.f32 %v408, %v389
  %v418 = vmul.f32 %v413, %v390
  %419 = vst.msk [vmem:[%s7] sm:$0xff] %vm221, %v415
  %420 = vst.msk [vmem:[%s7 + $0x8] sm:$0xff] %vm221, %v416
  %421 = vst.msk [vmem:[%s7 + $0x10] sm:$0xff] %vm221, %v417
  %422 = vst.msk [vmem:[%s7 + $0x18] sm:$0xff] %vm221, %v418
  %423 = vrot.lane.b32.xlu0 %v159, 120
  %v424 = vpop.permute.xlu0 %423
  %425 = vrot.lane.b32.xlu0 %v164, 120
  %v426 = vpop.permute.xlu0 %425
  %427 = vrot.lane.b32.xlu0 %v169, 120
  %v428 = vpop.permute.xlu0 %427
  %429 = vrot.lane.b32.xlu0 %v174, 120
  %v430 = vpop.permute.xlu0 %429
  %s435 = scalar_lea.vmem %s3, 32
  %436 = vst.msk [vmem:[%s435] sm:$0xff] %vm221, %v424
  %437 = vst.msk [vmem:[%s435 + $0x8] sm:$0xff] %vm221, %v426
  %438 = vst.msk [vmem:[%s435 + $0x10] sm:$0xff] %vm221, %v428
  %439 = vst.msk [vmem:[%s435 + $0x18] sm:$0xff] %vm221, %v430
  %440 = vrot.lane.b32.xlu0 %v159, 88
  %v441 = vpop.permute.xlu0 %440
  %442 = vrot.lane.b32.xlu0 %v164, 88
  %v443 = vpop.permute.xlu0 %442
  %444 = vrot.lane.b32.xlu0 %v169, 88
  %v445 = vpop.permute.xlu0 %444
  %446 = vrot.lane.b32.xlu0 %v174, 88
  %v447 = vpop.permute.xlu0 %446
  %s452 = scalar_lea.vmem %s4, 32
  %453 = vst.msk [vmem:[%s452] sm:$0xff] %vm221, %v441
  %454 = vst.msk [vmem:[%s452 + $0x8] sm:$0xff] %vm221, %v443
  %455 = vst.msk [vmem:[%s452 + $0x10] sm:$0xff] %vm221, %v445
  %456 = vst.msk [vmem:[%s452 + $0x18] sm:$0xff] %vm221, %v447
  %457 = vrot.lane.b32.xlu0 %v159, 56
  %v458 = vpop.permute.xlu0 %457
  %459 = vrot.lane.b32.xlu0 %v164, 56
  %v460 = vpop.permute.xlu0 %459
  %461 = vrot.lane.b32.xlu0 %v169, 56
  %v462 = vpop.permute.xlu0 %461
  %463 = vrot.lane.b32.xlu0 %v174, 56
  %v464 = vpop.permute.xlu0 %463
  %s469 = scalar_lea.vmem %s5, 32
  %470 = vst.msk [vmem:[%s469] sm:$0xff] %vm221, %v458
  %471 = vst.msk [vmem:[%s469 + $0x8] sm:$0xff] %vm221, %v460
  %472 = vst.msk [vmem:[%s469 + $0x10] sm:$0xff] %vm221, %v462
  %473 = vst.msk [vmem:[%s469 + $0x18] sm:$0xff] %vm221, %v464
  %478 = vrot.lane.b32.xlu0 %v363, 120
  %v479 = vpop.permute.xlu0 %478
  %480 = vrot.lane.b32.xlu0 %v364, 120
  %v481 = vpop.permute.xlu0 %480
  %482 = vrot.lane.b32.xlu0 %v365, 120
  %v483 = vpop.permute.xlu0 %482
  %484 = vrot.lane.b32.xlu0 %v366, 120
  %v485 = vpop.permute.xlu0 %484
  %v490 = vsel %vm221, %v479, 0.0
  %491 = vadd.xlane.f32.xlu0 %v490
  %v492 = vpop.xlane.xlu0 %491
  %v493 = vsel %vm221, %v481, 0.0
  %494 = vadd.xlane.f32.xlu0 %v493
  %v495 = vpop.xlane.xlu0 %494
  %v496 = vsel %vm221, %v483, 0.0
  %497 = vadd.xlane.f32.xlu0 %v496
  %v498 = vpop.xlane.xlu0 %497
  %v499 = vsel %vm221, %v485, 0.0
  %500 = vadd.xlane.f32.xlu0 %v499
  %v501 = vpop.xlane.xlu0 %500
  %v502 = vadd.f32 %v492, 1e-06
  %v503 = vadd.f32 %v495, 1e-06
  %v504 = vadd.f32 %v498, 1e-06
  %v505 = vadd.f32 %v501, 1e-06
  %v506 = vrsqrt.pop %v502
  %v507 = vrsqrt.pop %v503
  %v508 = vrsqrt.pop %v504
  %v509 = vrsqrt.pop %v505
  %v510 = vmul.f32 %v309, %v506
  %v511 = vmul.f32 %v314, %v507
  %v512 = vmul.f32 %v319, %v508
  %v513 = vmul.f32 %v324, %v509
  %518 = vrot.lane.b32.xlu0 %v510, 120
  %v519 = vpop.permute.xlu0 %518
  %520 = vrot.lane.b32.xlu0 %v511, 120
  %v521 = vpop.permute.xlu0 %520
  %522 = vrot.lane.b32.xlu0 %v512, 120
  %v523 = vpop.permute.xlu0 %522
  %524 = vrot.lane.b32.xlu0 %v513, 120
  %v525 = vpop.permute.xlu0 %524
  %s530 = scalar_lea.vmem %s6, 32
  %531 = vst.msk [vmem:[%s530] sm:$0xff] %vm221, %v519
  %532 = vst.msk [vmem:[%s530 + $0x8] sm:$0xff] %vm221, %v521
  %533 = vst.msk [vmem:[%s530 + $0x10] sm:$0xff] %vm221, %v523
  %534 = vst.msk [vmem:[%s530 + $0x18] sm:$0xff] %vm221, %v525
  %535 = vset.pattern.permute.xlu0 105
  %536 = vperm.xlu0 %535, %v201
  %v537 = vpop.permute.xlu0 %536
  %539 = vset.pattern.permute.xlu0 105
  %540 = vperm.xlu0 %539, %v202
  %v541 = vpop.permute.xlu0 %540
  %543 = vset.pattern.permute.xlu0 105
  %544 = vperm.xlu0 %543, %v203
  %v545 = vpop.permute.xlu0 %544
  %547 = vset.pattern.permute.xlu0 105
  %548 = vperm.xlu0 %547, %v204
  %v549 = vpop.permute.xlu0 %548
  %v551 = vmul.f32 %v537, %v510
  %v552 = vmul.f32 %v541, %v511
  %v553 = vmul.f32 %v545, %v512
  %v554 = vmul.f32 %v549, %v513
  %559 = vrot.lane.b32.xlu0 %v551, 120
  %v560 = vpop.permute.xlu0 %559
  %561 = vrot.lane.b32.xlu0 %v552, 120
  %v562 = vpop.permute.xlu0 %561
  %563 = vrot.lane.b32.xlu0 %v553, 120
  %v564 = vpop.permute.xlu0 %563
  %565 = vrot.lane.b32.xlu0 %v554, 120
  %v566 = vpop.permute.xlu0 %565
  %s571 = scalar_lea.vmem %s7, 32
  %572 = vst.msk [vmem:[%s571] sm:$0xff] %vm221, %v560
  %573 = vst.msk [vmem:[%s571 + $0x8] sm:$0xff] %vm221, %v562
  %574 = vst.msk [vmem:[%s571 + $0x10] sm:$0xff] %vm221, %v564
  %575 = vst.msk [vmem:[%s571 + $0x18] sm:$0xff] %vm221, %v566
  %576 = vrot.lane.b32.xlu0 %v159, 112
  %v577 = vpop.permute.xlu0 %576
  %578 = vrot.lane.b32.xlu0 %v164, 112
  %v579 = vpop.permute.xlu0 %578
  %580 = vrot.lane.b32.xlu0 %v169, 112
  %v581 = vpop.permute.xlu0 %580
  %582 = vrot.lane.b32.xlu0 %v174, 112
  %v583 = vpop.permute.xlu0 %582
  %s588 = scalar_lea.vmem %s3, 64
  %589 = vst.msk [vmem:[%s588] sm:$0xff] %vm221, %v577
  %590 = vst.msk [vmem:[%s588 + $0x8] sm:$0xff] %vm221, %v579
  %591 = vst.msk [vmem:[%s588 + $0x10] sm:$0xff] %vm221, %v581
  %592 = vst.msk [vmem:[%s588 + $0x18] sm:$0xff] %vm221, %v583
  %593 = vrot.lane.b32.xlu0 %v159, 80
  %v594 = vpop.permute.xlu0 %593
  %595 = vrot.lane.b32.xlu0 %v164, 80
  %v596 = vpop.permute.xlu0 %595
  %597 = vrot.lane.b32.xlu0 %v169, 80
  %v598 = vpop.permute.xlu0 %597
  %599 = vrot.lane.b32.xlu0 %v174, 80
  %v600 = vpop.permute.xlu0 %599
  %s605 = scalar_lea.vmem %s4, 64
  %606 = vst.msk [vmem:[%s605] sm:$0xff] %vm221, %v594
  %607 = vst.msk [vmem:[%s605 + $0x8] sm:$0xff] %vm221, %v596
  %608 = vst.msk [vmem:[%s605 + $0x10] sm:$0xff] %vm221, %v598
  %609 = vst.msk [vmem:[%s605 + $0x18] sm:$0xff] %vm221, %v600
  %610 = vrot.lane.b32.xlu0 %v159, 48
  %v611 = vpop.permute.xlu0 %610
  %612 = vrot.lane.b32.xlu0 %v164, 48
  %v613 = vpop.permute.xlu0 %612
  %614 = vrot.lane.b32.xlu0 %v169, 48
  %v615 = vpop.permute.xlu0 %614
  %616 = vrot.lane.b32.xlu0 %v174, 48
  %v617 = vpop.permute.xlu0 %616
  %s622 = scalar_lea.vmem %s5, 64
  %623 = vst.msk [vmem:[%s622] sm:$0xff] %vm221, %v611
  %624 = vst.msk [vmem:[%s622 + $0x8] sm:$0xff] %vm221, %v613
  %625 = vst.msk [vmem:[%s622 + $0x10] sm:$0xff] %vm221, %v615
  %626 = vst.msk [vmem:[%s622 + $0x18] sm:$0xff] %vm221, %v617
  %627 = vrot.lane.b32.xlu0 %v363, 112
  %v628 = vpop.permute.xlu0 %627
  %629 = vrot.lane.b32.xlu0 %v364, 112
  %v630 = vpop.permute.xlu0 %629
  %631 = vrot.lane.b32.xlu0 %v365, 112
  %v632 = vpop.permute.xlu0 %631
  %633 = vrot.lane.b32.xlu0 %v366, 112
  %v634 = vpop.permute.xlu0 %633
  %v639 = vsel %vm221, %v628, 0.0
  %640 = vadd.xlane.f32.xlu0 %v639
  %v641 = vpop.xlane.xlu0 %640
  %v642 = vsel %vm221, %v630, 0.0
  %643 = vadd.xlane.f32.xlu0 %v642
  %v644 = vpop.xlane.xlu0 %643
  %v645 = vsel %vm221, %v632, 0.0
  %646 = vadd.xlane.f32.xlu0 %v645
  %v647 = vpop.xlane.xlu0 %646
  %v648 = vsel %vm221, %v634, 0.0
  %649 = vadd.xlane.f32.xlu0 %v648
  %v650 = vpop.xlane.xlu0 %649
  %v651 = vadd.f32 %v641, 1e-06
  %v652 = vadd.f32 %v644, 1e-06
  %v653 = vadd.f32 %v647, 1e-06
  %v654 = vadd.f32 %v650, 1e-06
  %v655 = vrsqrt.pop %v651
  %v656 = vrsqrt.pop %v652
  %v657 = vrsqrt.pop %v653
  %v658 = vrsqrt.pop %v654
  %v659 = vmul.f32 %v309, %v655
  %v660 = vmul.f32 %v314, %v656
  %v661 = vmul.f32 %v319, %v657
  %v662 = vmul.f32 %v324, %v658
  %667 = vrot.lane.b32.xlu0 %v659, 112
  %v668 = vpop.permute.xlu0 %667
  %669 = vrot.lane.b32.xlu0 %v660, 112
  %v670 = vpop.permute.xlu0 %669
  %671 = vrot.lane.b32.xlu0 %v661, 112
  %v672 = vpop.permute.xlu0 %671
  %673 = vrot.lane.b32.xlu0 %v662, 112
  %v674 = vpop.permute.xlu0 %673
  %s679 = scalar_lea.vmem %s6, 64
  %680 = vst.msk [vmem:[%s679] sm:$0xff] %vm221, %v668
  %681 = vst.msk [vmem:[%s679 + $0x8] sm:$0xff] %vm221, %v670
  %682 = vst.msk [vmem:[%s679 + $0x10] sm:$0xff] %vm221, %v672
  %683 = vst.msk [vmem:[%s679 + $0x18] sm:$0xff] %vm221, %v674
  %684 = vset.pattern.permute.xlu0 106
  %685 = vperm.xlu0 %684, %v201
  %v686 = vpop.permute.xlu0 %685
  %688 = vset.pattern.permute.xlu0 106
  %689 = vperm.xlu0 %688, %v202
  %v690 = vpop.permute.xlu0 %689
  %692 = vset.pattern.permute.xlu0 106
  %693 = vperm.xlu0 %692, %v203
  %v694 = vpop.permute.xlu0 %693
  %696 = vset.pattern.permute.xlu0 106
  %697 = vperm.xlu0 %696, %v204
  %v698 = vpop.permute.xlu0 %697
  %v700 = vmul.f32 %v686, %v659
  %v701 = vmul.f32 %v690, %v660
  %v702 = vmul.f32 %v694, %v661
  %v703 = vmul.f32 %v698, %v662
  %708 = vrot.lane.b32.xlu0 %v700, 112
  %v709 = vpop.permute.xlu0 %708
  %710 = vrot.lane.b32.xlu0 %v701, 112
  %v711 = vpop.permute.xlu0 %710
  %712 = vrot.lane.b32.xlu0 %v702, 112
  %v713 = vpop.permute.xlu0 %712
  %714 = vrot.lane.b32.xlu0 %v703, 112
  %v715 = vpop.permute.xlu0 %714
  %s720 = scalar_lea.vmem %s7, 64
  %721 = vst.msk [vmem:[%s720] sm:$0xff] %vm221, %v709
  %722 = vst.msk [vmem:[%s720 + $0x8] sm:$0xff] %vm221, %v711
  %723 = vst.msk [vmem:[%s720 + $0x10] sm:$0xff] %vm221, %v713
  %724 = vst.msk [vmem:[%s720 + $0x18] sm:$0xff] %vm221, %v715
  %725 = vrot.lane.b32.xlu0 %v159, 104
  %v726 = vpop.permute.xlu0 %725
  %727 = vrot.lane.b32.xlu0 %v164, 104
  %v728 = vpop.permute.xlu0 %727
  %729 = vrot.lane.b32.xlu0 %v169, 104
  %v730 = vpop.permute.xlu0 %729
  %731 = vrot.lane.b32.xlu0 %v174, 104
  %v732 = vpop.permute.xlu0 %731
  %s737 = scalar_lea.vmem %s3, 96
  %738 = vst.msk [vmem:[%s737] sm:$0xff] %vm221, %v726
  %739 = vst.msk [vmem:[%s737 + $0x8] sm:$0xff] %vm221, %v728
  %740 = vst.msk [vmem:[%s737 + $0x10] sm:$0xff] %vm221, %v730
  %741 = vst.msk [vmem:[%s737 + $0x18] sm:$0xff] %vm221, %v732
  %742 = vrot.lane.b32.xlu0 %v159, 72
  %v743 = vpop.permute.xlu0 %742
  %744 = vrot.lane.b32.xlu0 %v164, 72
  %v745 = vpop.permute.xlu0 %744
  %746 = vrot.lane.b32.xlu0 %v169, 72
  %v747 = vpop.permute.xlu0 %746
  %748 = vrot.lane.b32.xlu0 %v174, 72
  %v749 = vpop.permute.xlu0 %748
  %s754 = scalar_lea.vmem %s4, 96
  %755 = vst.msk [vmem:[%s754] sm:$0xff] %vm221, %v743
  %756 = vst.msk [vmem:[%s754 + $0x8] sm:$0xff] %vm221, %v745
  %757 = vst.msk [vmem:[%s754 + $0x10] sm:$0xff] %vm221, %v747
  %758 = vst.msk [vmem:[%s754 + $0x18] sm:$0xff] %vm221, %v749
  %759 = vrot.lane.b32.xlu0 %v159, 40
  %v760 = vpop.permute.xlu0 %759
  %761 = vrot.lane.b32.xlu0 %v164, 40
  %v762 = vpop.permute.xlu0 %761
  %763 = vrot.lane.b32.xlu0 %v169, 40
  %v764 = vpop.permute.xlu0 %763
  %765 = vrot.lane.b32.xlu0 %v174, 40
  %v766 = vpop.permute.xlu0 %765
  %s771 = scalar_lea.vmem %s5, 96
  %772 = vst.msk [vmem:[%s771] sm:$0xff] %vm221, %v760
  %773 = vst.msk [vmem:[%s771 + $0x8] sm:$0xff] %vm221, %v762
  %774 = vst.msk [vmem:[%s771 + $0x10] sm:$0xff] %vm221, %v764
  %775 = vst.msk [vmem:[%s771 + $0x18] sm:$0xff] %vm221, %v766
  %776 = vrot.lane.b32.xlu0 %v363, 104
  %v777 = vpop.permute.xlu0 %776
  %778 = vrot.lane.b32.xlu0 %v364, 104
  %v779 = vpop.permute.xlu0 %778
  %780 = vrot.lane.b32.xlu0 %v365, 104
  %v781 = vpop.permute.xlu0 %780
  %782 = vrot.lane.b32.xlu0 %v366, 104
  %v783 = vpop.permute.xlu0 %782
  %v788 = vsel %vm221, %v777, 0.0
  %789 = vadd.xlane.f32.xlu0 %v788
  %v790 = vpop.xlane.xlu0 %789
  %v791 = vsel %vm221, %v779, 0.0
  %792 = vadd.xlane.f32.xlu0 %v791
  %v793 = vpop.xlane.xlu0 %792
  %v794 = vsel %vm221, %v781, 0.0
  %795 = vadd.xlane.f32.xlu0 %v794
  %v796 = vpop.xlane.xlu0 %795
  %v797 = vsel %vm221, %v783, 0.0
  %798 = vadd.xlane.f32.xlu0 %v797
  %v799 = vpop.xlane.xlu0 %798
  %v800 = vadd.f32 %v790, 1e-06
  %v801 = vadd.f32 %v793, 1e-06
  %v802 = vadd.f32 %v796, 1e-06
  %v803 = vadd.f32 %v799, 1e-06
  %v804 = vrsqrt.pop %v800
  %v805 = vrsqrt.pop %v801
  %v806 = vrsqrt.pop %v802
  %v807 = vrsqrt.pop %v803
  %v808 = vmul.f32 %v309, %v804
  %v809 = vmul.f32 %v314, %v805
  %v810 = vmul.f32 %v319, %v806
  %v811 = vmul.f32 %v324, %v807
  %816 = vrot.lane.b32.xlu0 %v808, 104
  %v817 = vpop.permute.xlu0 %816
  %818 = vrot.lane.b32.xlu0 %v809, 104
  %v819 = vpop.permute.xlu0 %818
  %820 = vrot.lane.b32.xlu0 %v810, 104
  %v821 = vpop.permute.xlu0 %820
  %822 = vrot.lane.b32.xlu0 %v811, 104
  %v823 = vpop.permute.xlu0 %822
  %s828 = scalar_lea.vmem %s6, 96
  %829 = vst.msk [vmem:[%s828] sm:$0xff] %vm221, %v817
  %830 = vst.msk [vmem:[%s828 + $0x8] sm:$0xff] %vm221, %v819
  %831 = vst.msk [vmem:[%s828 + $0x10] sm:$0xff] %vm221, %v821
  %832 = vst.msk [vmem:[%s828 + $0x18] sm:$0xff] %vm221, %v823
  %833 = vset.pattern.permute.xlu0 107
  %834 = vperm.xlu0 %833, %v201
  %v835 = vpop.permute.xlu0 %834
  %837 = vset.pattern.permute.xlu0 107
  %838 = vperm.xlu0 %837, %v202
  %v839 = vpop.permute.xlu0 %838
  %841 = vset.pattern.permute.xlu0 107
  %842 = vperm.xlu0 %841, %v203
  %v843 = vpop.permute.xlu0 %842
  %845 = vset.pattern.permute.xlu0 107
  %846 = vperm.xlu0 %845, %v204
  %v847 = vpop.permute.xlu0 %846
  %v849 = vmul.f32 %v835, %v808
  %v850 = vmul.f32 %v839, %v809
  %v851 = vmul.f32 %v843, %v810
  %v852 = vmul.f32 %v847, %v811
  %857 = vrot.lane.b32.xlu0 %v849, 104
  %v858 = vpop.permute.xlu0 %857
  %859 = vrot.lane.b32.xlu0 %v850, 104
  %v860 = vpop.permute.xlu0 %859
  %861 = vrot.lane.b32.xlu0 %v851, 104
  %v862 = vpop.permute.xlu0 %861
  %863 = vrot.lane.b32.xlu0 %v852, 104
  %v864 = vpop.permute.xlu0 %863
  %s869 = scalar_lea.vmem %s7, 96
  %870 = vst.msk [vmem:[%s869] sm:$0xff] %vm221, %v858
  %871 = vst.msk [vmem:[%s869 + $0x8] sm:$0xff] %vm221, %v860
  %872 = vst.msk [vmem:[%s869 + $0x10] sm:$0xff] %vm221, %v862
  %873 = vst.msk [vmem:[%s869 + $0x18] sm:$0xff] %vm221, %v864
  // Predicated region
  $region14: #{path_attention_forward.3} parent=0 // pred_check
    _
  $region15: #{path_attention_forward.3} parent=0 // pred_check_branch
    %875 = sbr.rel (0) target = $region17
  $region16: #{path_attention_forward.3} parent=0 // pred_region
    _
  $region17: #{path_attention_forward.3} parent=0 // pred_fallthru
    _
  // Predicated region
  $region18: #{path_attention_forward.3} parent=0 // pred_check
    _
  $region19: #{path_attention_forward.3} parent=0 // pred_check_branch
    %877 = sbr.rel (0) target = $region21
  $region20: #{path_attention_forward.3} parent=0 // pred_region
    _
  $region21: #{path_attention_forward.3} parent=0 // pred_fallthru
    _
  // Predicated region
  $region22: #{path_attention_forward.3} parent=0 // pred_check
    _
  $region23: #{path_attention_forward.3} parent=0 // pred_check_branch
    %879 = sbr.rel (0) target = $region25
  $region24: #{path_attention_forward.3} parent=0 // pred_region
    _
  $region25: #{path_attention_forward.3} parent=0 // pred_fallthru
    _
  // Predicated region
  $region26: #{path_attention_forward.3} parent=0 // pred_check
    _
  $region27: #{path_attention_forward.3} parent=0 // pred_check_branch
    %881 = sbr.rel (0) target = $region29
  $region28: #{path_attention_forward.3} parent=0 // pred_region
    _
  $region29: #{path_attention_forward.3} parent=0 // pred_fallthru
    _
  // Predicated region
  $region30: #{path_attention_forward.3} parent=0 // pred_check
    _
  $region31: #{path_attention_forward.3} parent=0 // pred_check_branch
    %883 = sbr.rel (0) target = $region33
  $region32: #{path_attention_forward.3} parent=0 // pred_region
    _
  $region33: #{path_attention_forward.3} parent=0 // pred_fallthru
    _
  // Predicated region
  $region34: #{path_attention_forward.3} parent=0 // pred_check
    _
  $region35: #{path_attention_forward.3} parent=0 // pred_check_branch
    %885 = sbr.rel (0) target = $region37
  $region36: #{path_attention_forward.3} parent=0 // pred_region
    _
  $region37: #{path_attention_forward.3} parent=0 // pred_fallthru
    _
  // Predicated region
  $region38: #{path_attention_forward.3} parent=0 // pred_check
    _
  $region39: #{path_attention_forward.3} parent=0 // pred_check_branch
    %887 = sbr.rel (0) target = $region41
  $region40: #{path_attention_forward.3} parent=0 // pred_region
    _
  $region41: #{path_attention_forward.3} parent=0 // pred_fallthru
    _
  // Predicated region
  $region42: #{path_attention_forward.3} parent=0 // pred_check
    _
  $region43: #{path_attention_forward.3} parent=0 // pred_check_branch
    %889 = sbr.rel (0) target = $region45
  $region44: #{path_attention_forward.3} parent=0 // pred_region
    _
  $region45: #{path_attention_forward.3} parent=0 // pred_fallthru
    _
  // Predicated region
  $region46: #{path_attention_forward.3} parent=0 // pred_check
    _
  $region47: #{path_attention_forward.3} parent=0 // pred_check_branch
    %891 = sbr.rel (0) target = $region49
  $region48: #{path_attention_forward.3} parent=0 // pred_region
    _
  $region49: #{path_attention_forward.3} parent=0 // pred_fallthru
    _
  // Predicated region
  $region50: #{path_attention_forward.3} parent=0 // pred_check
    _
  $region51: #{path_attention_forward.3} parent=0 // pred_check_branch
    %893 = sbr.rel (0) target = $region53
  $region52: #{path_attention_forward.3} parent=0 // pred_region
    _
  $region53: #{path_attention_forward.3} parent=0 // pred_fallthru
    _

// kernel: path_attention_forward.4
$region0: #{path_attention_forward.4}
  #allocation0 [shape = 'u32[]', space=smem, size = 0x4, offset = 0x4, fixed_abs, tag = 'smem constant byte address 0x4 - core index']
  #allocation1 [shape = 'u32[144,128]{1,0:T(1,128)}', space=vmem, size = 0x12000, scoped, tag = 'internal scratch']
  #allocation2 [shape = 'f32[16,8]{1,0:T(8,128)}', space=vmem, size = 0x2000, scoped, tag = 'scratch operand']
  #allocation3 [shape = 'f32[8,1]{1,0:T(8,128)}', space=vmem, size = 0x1000, scoped, tag = 'scratch operand']
  #allocation4 [shape = 'f32[8,1]{1,0:T(8,128)}', space=vmem, size = 0x1000, scoped, tag = 'scratch operand']
  #allocation5 [shape = 'f32[8,8]{1,0:T(8,128)}', space=vmem, size = 0x1000, scoped, tag = 'scratch operand']
  %s0 = inlined_call_operand.vmem [shape: f32[4,32,8], index: 0, kind: input, shape index: {}]
  %s1 = inlined_call_operand.vmem [shape: f32[4,32,8], index: 1, kind: input, shape index: {}]
  %s2 = inlined_call_operand.vmem [shape: f32[4,32,8], index: 2, kind: input, shape index: {}]
  %s3 = inlined_call_operand.vmem [shape: f32[4,32,8], index: 3, kind: input, shape index: {}]
  %s4 = inlined_call_operand.vmem [shape: f32[4,32,8], index: 4, kind: input, shape index: {}]
  %s5 = inlined_call_operand.vmem [shape: f32[4,32,8], index: 5, kind: output, shape index: {}]
  %s6 = sld [smem:[#allocation0]]
  $region60: #{path_attention_forward.4} parent=0
    _
  %s8 = ssub.s32 1, %s6
  %s9 = scalar_select 0, %s8, %s6
  loop: start=0, step=1, limit=18
  $region2: #{path_attention_forward.4} parent=0 // loop_pre_header
    _
  $region3: #{path_attention_forward.4} parent=0 // loop_header
    %s11 = sphi 0, %s15
    %p12 = scmp.ge.s32.totalorder %s11, 18
    %s18 = sphi 0, %s37
    %s19 = sphi 0, %s33
    %s20 = sphi 0, %s29
    %s21 = sphi 0, %s18
    %s22 = sphi 0, %s19
    %s23 = sphi 0, %s20
    %s24 = sphi 0, %s21
    %s25 = sphi 0, %s22
    %s26 = sphi 0, %s23
    %s46 = sphi 0, %s48
    %s49 = sphi 0, %s46
    %s50 = sphi 0, %s49
    %s66 = sphi 0, %s50
    %s78 = sphi 0, %s80
    %s81 = sphi 0, %s78
    %s82 = sphi 0, %s81
    %s98 = sphi 0, %s82
    %s110 = sphi 0, %s112
    %s113 = sphi 0, %s110
    %s114 = sphi 0, %s113
    %s130 = sphi 0, %s114
    %s142 = sphi 0, %s144
    %s145 = sphi 0, %s142
    %s146 = sphi 0, %s145
    %s162 = sphi 0, %s146
    %s170 = sphi 0, %s172
    %s173 = sphi 0, %s170
    %s174 = sphi 0, %s173
    %s190 = sphi 0, %s174
    %s202 = sphi 0, %s204
    %s205 = sphi 0, %s202
    %s206 = sphi 0, %s205
    %s222 = sphi 0, %s206
  $region4: #{path_attention_forward.4} parent=0 // loop_header_branch
    %14 = sbr.rel (%p12) target = $region8
  $region5: #{path_attention_forward.4} parent=0 // loop_body
    %s16 = ssub.s32 %s11, 1
    %s17 = ssub.s32 %s11, 2
    %s27 = sadd.s32 1, %s20
    %p28 = scmp.ge.s32.totalorder %s27, 2
    %s29 = scalar_select %p28, 0, %s27
    %s30 = sadd.s32 1, %s19
    %s31 = scalar_select %p28, %s30, %s19
    %p32 = scmp.ge.s32.totalorder %s31, 4
    %s33 = scalar_select %p32, 0, %s31
    %s34 = sadd.s32 1, %s18
    %s35 = scalar_select %p32, %s34, %s18
    %p36 = scmp.ge.s32.totalorder %s35, 2
    %s37 = scalar_select %p36, 0, %s35
    %s38 = smul.u32 %s18, 2
    %s39 = sadd.s32 %s38, %s20
    %s40 = smul.u32 %s37, 2
    %s41 = sadd.s32 %s40, %s29
    %s42 = ssub.s32 %s19, %s33
    %s43 = ssub.s32 %s39, %s41
    %s44 = sor.u32 %s42, %s43
    %p45 = scmp.eq.s32.totalorder %s44, 0
    %s47 = sadd.s32 %s46, 1
    %s48 = scalar_select %p45, %s46, %s47
    %p51 = pneg %p45
    %p52 = scmp.eq.s32.totalorder %s11, 15
    %p53 = por %p51, %p52
    %p54 = scmp.ne.s32.totalorder %s46, %s49
    %p55 = scmp.eq.s32.totalorder %s11, 0
    %p56 = por %p54, %p55
    %p57 = scmp.ne.s32.totalorder %s46, %s49
    %p58 = scmp.eq.s32.totalorder %s16, 15
    %p59 = por %p57, %p58
    %p60 = scmp.ne.s32.totalorder %s49, %s50
    %p61 = scmp.eq.s32.totalorder %s16, 0
    %p62 = por %p60, %p61
    %p63 = scmp.ne.s32.totalorder %s49, %s50
    %p64 = scmp.eq.s32.totalorder %s17, 15
    %p65 = por %p63, %p64
    %p67 = scmp.ne.s32.totalorder %s50, %s66
    %p68 = scmp.eq.s32.totalorder %s17, 0
    %p69 = por %p67, %p68
    %s70 = smul.u32 %s18, 2
    %s71 = sadd.s32 %s70, %s20
    %s72 = smul.u32 %s37, 2
    %s73 = sadd.s32 %s72, %s29
    %s74 = ssub.s32 %s19, %s33
    %s75 = ssub.s32 %s71, %s73
    %s76 = sor.u32 %s74, %s75
    %p77 = scmp.eq.s32.totalorder %s76, 0
    %s79 = sadd.s32 %s78, 1
    %s80 = scalar_select %p77, %s78, %s79
    %p83 = pneg %p77
    %p84 = scmp.eq.s32.totalorder %s11, 15
    %p85 = por %p83, %p84
    %p86 = scmp.ne.s32.totalorder %s78, %s81
    %p87 = scmp.eq.s32.totalorder %s11, 0
    %p88 = por %p86, %p87
    %p89 = scmp.ne.s32.totalorder %s78, %s81
    %p90 = scmp.eq.s32.totalorder %s16, 15
    %p91 = por %p89, %p90
    %p92 = scmp.ne.s32.totalorder %s81, %s82
    %p93 = scmp.eq.s32.totalorder %s16, 0
    %p94 = por %p92, %p93
    %p95 = scmp.ne.s32.totalorder %s81, %s82
    %p96 = scmp.eq.s32.totalorder %s17, 15
    %p97 = por %p95, %p96
    %p99 = scmp.ne.s32.totalorder %s82, %s98
    %p100 = scmp.eq.s32.totalorder %s17, 0
    %p101 = por %p99, %p100
    %s102 = smul.u32 %s18, 2
    %s103 = sadd.s32 %s102, %s20
    %s104 = smul.u32 %s37, 2
    %s105 = sadd.s32 %s104, %s29
    %s106 = ssub.s32 %s19, %s33
    %s107 = ssub.s32 %s103, %s105
    %s108 = sor.u32 %s106, %s107
    %p109 = scmp.eq.s32.totalorder %s108, 0
    %s111 = sadd.s32 %s110, 1
    %s112 = scalar_select %p109, %s110, %s111
    %p115 = pneg %p109
    %p116 = scmp.eq.s32.totalorder %s11, 15
    %p117 = por %p115, %p116
    %p118 = scmp.ne.s32.totalorder %s110, %s113
    %p119 = scmp.eq.s32.totalorder %s11, 0
    %p120 = por %p118, %p119
    %p121 = scmp.ne.s32.totalorder %s110, %s113
    %p122 = scmp.eq.s32.totalorder %s16, 15
    %p123 = por %p121, %p122
    %p124 = scmp.ne.s32.totalorder %s113, %s114
    %p125 = scmp.eq.s32.totalorder %s16, 0
    %p126 = por %p124, %p125
    %p127 = scmp.ne.s32.totalorder %s113, %s114
    %p128 = scmp.eq.s32.totalorder %s17, 15
    %p129 = por %p127, %p128
    %p131 = scmp.ne.s32.totalorder %s114, %s130
    %p132 = scmp.eq.s32.totalorder %s17, 0
    %p133 = por %p131, %p132
    %s134 = smul.u32 %s18, 2
    %s135 = sadd.s32 %s134, %s20
    %s136 = smul.u32 %s37, 2
    %s137 = sadd.s32 %s136, %s29
    %s138 = ssub.s32 %s19, %s33
    %s139 = ssub.s32 %s135, %s137
    %s140 = sor.u32 %s138, %s139
    %p141 = scmp.eq.s32.totalorder %s140, 0
    %s143 = sadd.s32 %s142, 1
    %s144 = scalar_select %p141, %s142, %s143
    %p147 = pneg %p141
    %p148 = scmp.eq.s32.totalorder %s11, 15
    %p149 = por %p147, %p148
    %p150 = scmp.ne.s32.totalorder %s142, %s145
    %p151 = scmp.eq.s32.totalorder %s11, 0
    %p152 = por %p150, %p151
    %p153 = scmp.ne.s32.totalorder %s142, %s145
    %p154 = scmp.eq.s32.totalorder %s16, 15
    %p155 = por %p153, %p154
    %p156 = scmp.ne.s32.totalorder %s145, %s146
    %p157 = scmp.eq.s32.totalorder %s16, 0
    %p158 = por %p156, %p157
    %p159 = scmp.ne.s32.totalorder %s145, %s146
    %p160 = scmp.eq.s32.totalorder %s17, 15
    %p161 = por %p159, %p160
    %p163 = scmp.ne.s32.totalorder %s146, %s162
    %p164 = scmp.eq.s32.totalorder %s17, 0
    %p165 = por %p163, %p164
    %s166 = ssub.s32 %s19, %s33
    %s167 = ssub.s32 %s18, %s37
    %s168 = sor.u32 %s166, %s167
    %p169 = scmp.eq.s32.totalorder %s168, 0
    %s171 = sadd.s32 %s170, 1
    %s172 = scalar_select %p169, %s170, %s171
    %p175 = pneg %p169
    %p176 = scmp.eq.s32.totalorder %s11, 15
    %p177 = por %p175, %p176
    %p178 = scmp.ne.s32.totalorder %s170, %s173
    %p179 = scmp.eq.s32.totalorder %s11, 0
    %p180 = por %p178, %p179
    %p181 = scmp.ne.s32.totalorder %s170, %s173
    %p182 = scmp.eq.s32.totalorder %s16, 15
    %p183 = por %p181, %p182
    %p184 = scmp.ne.s32.totalorder %s173, %s174
    %p185 = scmp.eq.s32.totalorder %s16, 0
    %p186 = por %p184, %p185
    %p187 = scmp.ne.s32.totalorder %s173, %s174
    %p188 = scmp.eq.s32.totalorder %s17, 15
    %p189 = por %p187, %p188
    %p191 = scmp.ne.s32.totalorder %s174, %s190
    %p192 = scmp.eq.s32.totalorder %s17, 0
    %p193 = por %p191, %p192
    %s194 = smul.u32 %s18, 2
    %s195 = sadd.s32 %s194, %s20
    %s196 = smul.u32 %s37, 2
    %s197 = sadd.s32 %s196, %s29
    %s198 = ssub.s32 %s19, %s33
    %s199 = ssub.s32 %s195, %s197
    %s200 = sor.u32 %s198, %s199
    %p201 = scmp.eq.s32.totalorder %s200, 0
    %s203 = sadd.s32 %s202, 1
    %s204 = scalar_select %p201, %s202, %s203
    %p207 = pneg %p201
    %p208 = scmp.eq.s32.totalorder %s11, 15
    %p209 = por %p207, %p208
    %p210 = scmp.ne.s32.totalorder %s202, %s205
    %p211 = scmp.eq.s32.totalorder %s11, 0
    %p212 = por %p210, %p211
    %p213 = scmp.ne.s32.totalorder %s202, %s205
    %p214 = scmp.eq.s32.totalorder %s16, 15
    %p215 = por %p213, %p214
    %p216 = scmp.ne.s32.totalorder %s205, %s206
    %p217 = scmp.eq.s32.totalorder %s16, 0
    %p218 = por %p216, %p217
    %p219 = scmp.ne.s32.totalorder %s205, %s206
    %p220 = scmp.eq.s32.totalorder %s17, 15
    %p221 = por %p219, %p220
    %p223 = scmp.ne.s32.totalorder %s206, %s222
    %p224 = scmp.eq.s32.totalorder %s17, 0
    %p225 = por %p223, %p224
    %p226 = scmp.le.s32.totalorder 1, %s11
    %p227 = scmp.lt.s32.totalorder %s11, 17
    %p228 = pnand %p226, %p227
    %p229 = pneg %p228
    // Predicated region
    $region9: #{path_attention_forward.4} parent=5 // pred_check
      _
    $region10: #{path_attention_forward.4} parent=5 // pred_check_branch
      %231 = sbr.rel (%p228) target = $region12
    $region11: #{path_attention_forward.4} parent=5 // pred_region
      %s232 = ssub.s32 %s11, 1
    $region12: #{path_attention_forward.4} parent=5 // pred_fallthru
      _
    %p233 = scmp.lt.s32.totalorder %s11, 16
    // Predicated region
    $region13: #{path_attention_forward.4} parent=5 // pred_check
      %p234 = pneg %p233
    $region14: #{path_attention_forward.4} parent=5 // pred_check_branch
      %236 = sbr.rel (%p234) target = $region16
    $region15: #{path_attention_forward.4} parent=5 // pred_region
      // Predicated region
      $region17: #{path_attention_forward.4} parent=15 // pred_check
        %p237 = pneg %p56
      $region18: #{path_attention_forward.4} parent=15 // pred_check_branch
        %239 = sbr.rel (%p237) target = $region20
      $region19: #{path_attention_forward.4} parent=15 // pred_region
        %s240 = smul.u32 %s18, 2
        %s241 = sadd.s32 %s240, %s20
        %p242 = scmp.lt.s32.totalorder %s19, 3
        %s243 = scalar_select %p242, %s19, 3
        %p244 = scmp.lt.s32.totalorder %s241, 3
        %s245 = scalar_select %p244, %s241, 3
        %s246 = smul.addr %s243, 4
        %s247 = sadd.s32 %s245, %s246
        %s248 = smul.addr %s247, 8
        %s249 = scalar_lea.vmem %s0, %s248
        %s250 = smul.u32 %s18, 2
        %s251 = sadd.s32 %s250, %s20
      $region20: #{path_attention_forward.4} parent=15 // pred_fallthru
        _
      // Predicated region
      $region21: #{path_attention_forward.4} parent=15 // pred_check
        %p252 = pneg %p88
      $region22: #{path_attention_forward.4} parent=15 // pred_check_branch
        %254 = sbr.rel (%p252) target = $region24
      $region23: #{path_attention_forward.4} parent=15 // pred_region
        %s255 = smul.u32 %s18, 2
        %s256 = sadd.s32 %s255, %s20
        %p257 = scmp.lt.s32.totalorder %s19, 3
        %s258 = scalar_select %p257, %s19, 3
        %p259 = scmp.lt.s32.totalorder %s256, 3
        %s260 = scalar_select %p259, %s256, 3
        %s261 = smul.addr %s258, 4
        %s262 = sadd.s32 %s260, %s261
        %s263 = smul.addr %s262, 8
        %s264 = scalar_lea.vmem %s1, %s263
        %s265 = smul.u32 %s18, 2
        %s266 = sadd.s32 %s265, %s20
      $region24: #{path_attention_forward.4} parent=15 // pred_fallthru
        _
      // Predicated region
      $region25: #{path_attention_forward.4} parent=15 // pred_check
        %p267 = pneg %p120
      $region26: #{path_attention_forward.4} parent=15 // pred_check_branch
        %269 = sbr.rel (%p267) target = $region28
      $region27: #{path_attention_forward.4} parent=15 // pred_region
        %s270 = smul.u32 %s18, 2
        %s271 = sadd.s32 %s270, %s20
        %p272 = scmp.lt.s32.totalorder %s19, 3
        %s273 = scalar_select %p272, %s19, 3
        %p274 = scmp.lt.s32.totalorder %s271, 3
        %s275 = scalar_select %p274, %s271, 3
        %s276 = smul.addr %s273, 4
        %s277 = sadd.s32 %s275, %s276
        %s278 = smul.addr %s277, 8
        %s279 = scalar_lea.vmem %s2, %s278
        %s280 = smul.u32 %s18, 2
        %s281 = sadd.s32 %s280, %s20
      $region28: #{path_attention_forward.4} parent=15 // pred_fallthru
        _
      // Predicated region
      $region29: #{path_attention_forward.4} parent=15 // pred_check
        %p282 = pneg %p152
      $region30: #{path_attention_forward.4} parent=15 // pred_check_branch
        %284 = sbr.rel (%p282) target = $region32
      $region31: #{path_attention_forward.4} parent=15 // pred_region
        %s285 = smul.u32 %s18, 2
        %s286 = sadd.s32 %s285, %s20
        %p287 = scmp.lt.s32.totalorder %s19, 3
        %s288 = scalar_select %p287, %s19, 3
        %p289 = scmp.lt.s32.totalorder %s286, 3
        %s290 = scalar_select %p289, %s286, 3
        %s291 = smul.addr %s288, 4
        %s292 = sadd.s32 %s290, %s291
        %s293 = smul.addr %s292, 8
        %s294 = scalar_lea.vmem %s3, %s293
        %s295 = smul.u32 %s18, 2
        %s296 = sadd.s32 %s295, %s20
      $region32: #{path_attention_forward.4} parent=15 // pred_fallthru
        _
      // Predicated region
      $region33: #{path_attention_forward.4} parent=15 // pred_check
        %p297 = pneg %p180
      $region34: #{path_attention_forward.4} parent=15 // pred_check_branch
        %299 = sbr.rel (%p297) target = $region36
      $region35: #{path_attention_forward.4} parent=15 // pred_region
        %s300 = smul.u32 2, %s18
        %p301 = scmp.lt.s32.totalorder %s19, 3
        %s302 = scalar_select %p301, %s19, 3
        %p303 = scmp.lt.s32.totalorder %s300, 3
        %s304 = scalar_select %p303, %s300, 3
        %s305 = smul.addr %s302, 4
        %s306 = sadd.s32 %s304, %s305
        %s307 = smul.addr %s306, 8
        %s308 = scalar_lea.vmem %s4, %s307
        %s309 = smul.u32 2, %s18
      $region36: #{path_attention_forward.4} parent=15 // pred_fallthru
        _
    $region16: #{path_attention_forward.4} parent=5 // pred_fallthru
      _
    %p310 = scmp.le.s32.totalorder 1, %s11
    %p311 = scmp.lt.s32.totalorder %s11, 17
    %p312 = pnand %p310, %p311
    %p313 = pneg %p312
    // Predicated region
    $region37: #{path_attention_forward.4} parent=5 // pred_check
      _
    $region38: #{path_attention_forward.4} parent=5 // pred_check_branch
      %315 = sbr.rel (%p312) target = $region40
    $region39: #{path_attention_forward.4} parent=5 // pred_region
      %s316 = ssub.s32 %s11, 1
      %s317 = smul.u32 %s21, 2
      %s318 = sadd.s32 %s317, %s23
      %p319 = scmp.lt.s32.totalorder %s22, 3
      %s320 = scalar_select %p319, %s22, 3
      %p321 = scmp.lt.s32.totalorder %s318, 3
      %s322 = scalar_select %p321, %s318, 3
      %s323 = smul.addr %s320, 4
      %s324 = sadd.s32 %s322, %s323
      %s325 = smul.addr %s324, 8
      %s326 = scalar_lea.vmem %s0, %s325
      %p327 = pneg %p62
      %p328 = pneg %p59
      %s329 = smul.u32 %s21, 2
      %s330 = sadd.s32 %s329, %s23
      %p331 = scmp.lt.s32.totalorder %s22, 3
      %s332 = scalar_select %p331, %s22, 3
      %p333 = scmp.lt.s32.totalorder %s330, 3
      %s334 = scalar_select %p333, %s330, 3
      %s335 = smul.addr %s332, 4
      %s336 = sadd.s32 %s334, %s335
      %s337 = smul.addr %s336, 8
      %s338 = scalar_lea.vmem %s1, %s337
      %p339 = pneg %p94
      %p340 = pneg %p91
      %s341 = smul.u32 %s21, 2
      %s342 = sadd.s32 %s341, %s23
      %p343 = scmp.lt.s32.totalorder %s22, 3
      %s344 = scalar_select %p343, %s22, 3
      %p345 = scmp.lt.s32.totalorder %s342, 3
      %s346 = scalar_select %p345, %s342, 3
      %s347 = smul.addr %s344, 4
      %s348 = sadd.s32 %s346, %s347
      %s349 = smul.addr %s348, 8
      %s350 = scalar_lea.vmem %s2, %s349
      %p351 = pneg %p126
      %p352 = pneg %p123
      %s353 = smul.u32 %s21, 2
      %s354 = sadd.s32 %s353, %s23
      %p355 = scmp.lt.s32.totalorder %s22, 3
      %s356 = scalar_select %p355, %s22, 3
      %p357 = scmp.lt.s32.totalorder %s354, 3
      %s358 = scalar_select %p357, %s354, 3
      %s359 = smul.addr %s356, 4
      %s360 = sadd.s32 %s358, %s359
      %s361 = smul.addr %s360, 8
      %s362 = scalar_lea.vmem %s3, %s361
      %p363 = pneg %p158
      %p364 = pneg %p155
      %s365 = smul.u32 2, %s21
      %p366 = scmp.lt.s32.totalorder %s22, 3
      %s367 = scalar_select %p366, %s22, 3
      %p368 = scmp.lt.s32.totalorder %s365, 3
      %s369 = scalar_select %p368, %s365, 3
      %s370 = smul.addr %s367, 4
      %s371 = sadd.s32 %s369, %s370
      %s372 = smul.addr %s371, 8
      %s373 = scalar_lea.vmem %s4, %s372
      %p374 = pneg %p186
      %p375 = pneg %p183
      %p376 = pneg %p218
      %p377 = pneg %p215
      %s378 = smul.u32 %s21, 2
      %s379 = sadd.s32 %s378, %s23
      %p380 = scmp.lt.s32.totalorder %s22, 3
      %s381 = scalar_select %p380, %s22, 3
      %p382 = scmp.lt.s32.totalorder %s379, 3
      %s383 = scalar_select %p382, %s379, 3
      %s384 = smul.addr %s381, 4
      %s385 = sadd.s32 %s383, %s384
      %s386 = smul.addr %s385, 8
      %s387 = scalar_lea.vmem %s5, %s386
      %s388 = smul.u32 %s21, 2
      %s389 = sadd.s32 %s388, %s23
      %p390 = scmp.lt.s32.totalorder %s22, 3
      %s391 = scalar_select %p390, %s22, 3
      %p392 = scmp.lt.s32.totalorder %s389, 3
      %s393 = scalar_select %p392, %s389, 3
      %s394 = smul.addr %s391, 4
      %s395 = sadd.s32 %s393, %s394
      %s396 = smul.addr %s395, 8
      %s397 = scalar_lea.vmem %s0, %s396
      %s398 = smul.u32 %s21, 2
      %s399 = sadd.s32 %s398, %s23
      %s400 = smul.u32 %s21, 2
      %s401 = sadd.s32 %s400, %s23
      %p402 = scmp.lt.s32.totalorder %s22, 3
      %s403 = scalar_select %p402, %s22, 3
      %p404 = scmp.lt.s32.totalorder %s401, 3
      %s405 = scalar_select %p404, %s401, 3
      %s406 = smul.addr %s403, 4
      %s407 = sadd.s32 %s405, %s406
      %s408 = smul.addr %s407, 8
      %s409 = scalar_lea.vmem %s1, %s408
      %s410 = smul.u32 %s21, 2
      %s411 = sadd.s32 %s410, %s23
      %s412 = smul.u32 %s21, 2
      %s413 = sadd.s32 %s412, %s23
      %p414 = scmp.lt.s32.totalorder %s22, 3
      %s415 = scalar_select %p414, %s22, 3
      %p416 = scmp.lt.s32.totalorder %s413, 3
      %s417 = scalar_select %p416, %s413, 3
      %s418 = smul.addr %s415, 4
      %s419 = sadd.s32 %s417, %s418
      %s420 = smul.addr %s419, 8
      %s421 = scalar_lea.vmem %s2, %s420
      %s422 = smul.u32 %s21, 2
      %s423 = sadd.s32 %s422, %s23
      %s424 = smul.u32 %s21, 2
      %s425 = sadd.s32 %s424, %s23
      %p426 = scmp.lt.s32.totalorder %s22, 3
      %s427 = scalar_select %p426, %s22, 3
      %p428 = scmp.lt.s32.totalorder %s425, 3
      %s429 = scalar_select %p428, %s425, 3
      %s430 = smul.addr %s427, 4
      %s431 = sadd.s32 %s429, %s430
      %s432 = smul.addr %s431, 8
      %s433 = scalar_lea.vmem %s3, %s432
      %s434 = smul.u32 %s21, 2
      %s435 = sadd.s32 %s434, %s23
      %s436 = smul.u32 2, %s21
      %p437 = scmp.lt.s32.totalorder %s22, 3
      %s438 = scalar_select %p437, %s22, 3
      %p439 = scmp.lt.s32.totalorder %s436, 3
      %s440 = scalar_select %p439, %s436, 3
      %s441 = smul.addr %s438, 4
      %s442 = sadd.s32 %s440, %s441
      %s443 = smul.addr %s442, 8
      %s444 = scalar_lea.vmem %s4, %s443
      %s445 = smul.u32 2, %s21
      %s446 = smul.u32 %s21, 2
      %s447 = sadd.s32 %s446, %s23
      %p448 = scmp.lt.s32.totalorder %s22, 3
      %s449 = scalar_select %p448, %s22, 3
      %p450 = scmp.lt.s32.totalorder %s447, 3
      %s451 = scalar_select %p450, %s447, 3
      %s452 = smul.addr %s449, 4
      %s453 = sadd.s32 %s451, %s452
      %s454 = smul.addr %s453, 8
      %s455 = scalar_lea.vmem %s5, %s454
      %s456 = smul.u32 %s21, 2
      %s457 = sadd.s32 %s456, %s23
      %v458 = vld [vmem:[%s397] sm:$0xff]
      %v459 = vld [vmem:[%s409] sm:$0xff]
      %v460 = vld [vmem:[%s421] sm:$0xff]
      %v461 = vld [vmem:[%s433] sm:$0xff]
      %v462 = vlaneseq
      %v463 = vshrl.u32 %v462, 7
      %v464 = vlaneseq
      %v465 = vand.u32 %v464, 127
      %vm466 = vcmp.ge.s32.totalorder %v463, %v465
      %vm467 = vcmp.gt.s32.totalorder %v463, %v465
      %vm468 = vcmask 64512
      %v470 = vsel %vm468, %v461, 0
      %v473 = vsel %vm468, %v460, 0
      %475 = vmatprep.subr.mxu0 0.0
      %476 = vmatpush1.xpose.msra.mxu0 0.0
      %477 = vmatprep.subr.mxu0 0.0
      %478 = vmatpush1.xpose.msra.mxu0 0.0
      %479 = vmatprep.subr.mxu0 0.0
      %480 = vmatpush1.xpose.msra.mxu0 0.0
      %481 = vmatprep.subr.mxu0 0.0
      %482 = vmatpush1.xpose.msra.mxu0 0.0
      %483 = vmatprep.subr.mxu0 0.0
      %484 = vmatpush1.xpose.msra.mxu0 0.0
      %485 = vmatprep.subr.mxu0 0.0
      %486 = vmatpush1.xpose.msra.mxu0 0.0
      %487 = vmatprep.subr.mxu0 0.0
      %488 = vmatpush1.xpose.msra.mxu0 0.0
      %489 = vmatprep.subr.mxu0 0.0
      %490 = vmatpush1.xpose.msra.mxu0 0.0
      %491 = vmatprep.subr.mxu0 0.0
      %492 = vmatpush1.xpose.msra.mxu0 0.0
      %493 = vmatprep.subr.mxu0 0.0
      %494 = vmatpush1.xpose.msra.mxu0 0.0
      %495 = vmatprep.subr.mxu0 0.0
      %496 = vmatpush1.xpose.msra.mxu0 0.0
      %497 = vmatprep.subr.mxu0 0.0
      %498 = vmatpush1.xpose.msra.mxu0 0.0
      %499 = vmatprep.subr.mxu0 0.0
      %500 = vmatpush1.xpose.msra.mxu0 0.0
      %501 = vmatprep.subr.mxu0 0.0
      %502 = vmatpush1.xpose.msra.mxu0 0.0
      %503 = vmatprep.subr.mxu0 0.0
      %504 = vmatpush1.xpose.msra.mxu0 0.0
      %505 = vmatprep.subr.mxu0 0.0
      %506 = vmatpush1.xpose.msra.mxu0 %v473
      %507 = vmatprep.subr.mxu0 0.0
      %508 = vmatpush2.xpose.msra.mxu0 0.0
      %509 = vmatprep.subr.mxu0 0.0
      %510 = vmatpush2.xpose.msra.mxu0 0.0
      %511 = vmatprep.subr.mxu0 0.0
      %512 = vmatpush2.xpose.msra.mxu0 0.0
      %513 = vmatprep.subr.mxu0 0.0
      %514 = vmatpush2.xpose.msra.mxu0 0.0
      %515 = vmatprep.subr.mxu0 0.0
      %516 = vmatpush2.xpose.msra.mxu0 0.0
      %517 = vmatprep.subr.mxu0 0.0
      %518 = vmatpush2.xpose.msra.mxu0 0.0
      %519 = vmatprep.subr.mxu0 0.0
      %520 = vmatpush2.xpose.msra.mxu0 0.0
      %521 = vmatprep.subr.mxu0 0.0
      %522 = vmatpush2.xpose.msra.mxu0 0.0
      %523 = vmatprep.subr.mxu0 0.0
      %524 = vmatpush2.xpose.msra.mxu0 0.0
      %525 = vmatprep.subr.mxu0 0.0
      %526 = vmatpush2.xpose.msra.mxu0 0.0
      %527 = vmatprep.subr.mxu0 0.0
      %528 = vmatpush2.xpose.msra.mxu0 0.0
      %529 = vmatprep.subr.mxu0 0.0
      %530 = vmatpush2.xpose.msra.mxu0 0.0
      %531 = vmatprep.subr.mxu0 0.0
      %532 = vmatpush2.xpose.msra.mxu0 0.0
      %533 = vmatprep.subr.mxu0 0.0
      %534 = vmatpush2.xpose.msra.mxu0 0.0
      %535 = vmatprep.subr.mxu0 0.0
      %536 = vmatpush2.xpose.msra.mxu0 0.0
      %537 = vmatprep.subr.mxu0 0.0
      %538 = vmatpush2.xpose.msra.mxu0 0.0
      %539 = vmatprep.mubr.f32.mxu0 0.0
      %540 = vmatmul.mubr.f32.gmra.mxu0 %v470
      %v541 = vpop.f32.mrf.mxu0
      %v542 = vadd.f32 0.0, %v541
      %v543 = vpop.f32.mrf.mxu0
      %544 = vdwg.mxu0
      %v545 = vsel %vm467, %v542, 0.0
      %v546 = vsub.f32 0.0, %v545
      %v548 = vsel %vm468, %v545, 0
      %550 = vmatprep.subr.mxu0 0.0
      %551 = vmatpush1.msra.mxu0 0.0
      %552 = vmatprep.subr.mxu0 0.0
      %553 = vmatpush1.msra.mxu0 0.0
      %554 = vmatprep.subr.mxu0 0.0
      %555 = vmatpush1.msra.mxu0 0.0
      %556 = vmatprep.subr.mxu0 0.0
      %557 = vmatpush1.msra.mxu0 0.0
      %558 = vmatprep.subr.mxu0 0.0
      %559 = vmatpush1.msra.mxu0 0.0
      %560 = vmatprep.subr.mxu0 0.0
      %561 = vmatpush1.msra.mxu0 0.0
      %562 = vmatprep.subr.mxu0 0.0
      %563 = vmatpush1.msra.mxu0 0.0
      %564 = vmatprep.subr.mxu0 0.0
      %565 = vmatpush1.msra.mxu0 0.0
      %566 = vmatprep.subr.mxu0 0.0
      %567 = vmatpush1.msra.mxu0 0.0
      %568 = vmatprep.subr.mxu0 0.0
      %569 = vmatpush1.msra.mxu0 0.0
      %570 = vmatprep.subr.mxu0 0.0
      %571 = vmatpush1.msra.mxu0 0.0
      %572 = vmatprep.subr.mxu0 0.0
      %573 = vmatpush1.msra.mxu0 0.0
      %574 = vmatprep.subr.mxu0 0.0
      %575 = vmatpush1.msra.mxu0 0.0
      %576 = vmatprep.subr.mxu0 0.0
      %577 = vmatpush1.msra.mxu0 0.0
      %578 = vmatprep.subr.mxu0 0.0
      %579 = vmatpush1.msra.mxu0 0.0
      %580 = vmatprep.subr.mxu0 0.0
      %581 = vmatpush1.msra.mxu0 %v546
      %582 = vmatprep.subr.mxu0 0.0
      %583 = vmatpush2.msra.mxu0 0.0
      %584 = vmatprep.subr.mxu0 0.0
      %585 = vmatpush2.msra.mxu0 0.0
      %586 = vmatprep.subr.mxu0 0.0
      %587 = vmatpush2.msra.mxu0 0.0
      %588 = vmatprep.subr.mxu0 0.0
      %589 = vmatpush2.msra.mxu0 0.0
      %590 = vmatprep.subr.mxu0 0.0
      %591 = vmatpush2.msra.mxu0 0.0
      %592 = vmatprep.subr.mxu0 0.0
      %593 = vmatpush2.msra.mxu0 0.0
      %594 = vmatprep.subr.mxu0 0.0
      %595 = vmatpush2.msra.mxu0 0.0
      %596 = vmatprep.subr.mxu0 0.0
      %597 = vmatpush2.msra.mxu0 0.0
      %598 = vmatprep.subr.mxu0 0.0
      %599 = vmatpush2.msra.mxu0 0.0
      %600 = vmatprep.subr.mxu0 0.0
      %601 = vmatpush2.msra.mxu0 0.0
      %602 = vmatprep.subr.mxu0 0.0
      %603 = vmatpush2.msra.mxu0 0.0
      %604 = vmatprep.subr.mxu0 0.0
      %605 = vmatpush2.msra.mxu0 0.0
      %606 = vmatprep.subr.mxu0 0.0
      %607 = vmatpush2.msra.mxu0 0.0
      %608 = vmatprep.subr.mxu0 0.0
      %609 = vmatpush2.msra.mxu0 0.0
      %610 = vmatprep.subr.mxu0 0.0
      %611 = vmatpush2.msra.mxu0 0.0
      %612 = vmatprep.subr.mxu0 0.0
      %613 = vmatpush2.msra.mxu0 0.0
      %614 = vmatprep.mubr.f32.mxu0 0.0
      %615 = vmatmul.mubr.f32.gmra.mxu0 %v548
      %v616 = vpop.f32.mrf.mxu0
      %v617 = vadd.f32 0.0, %v616
      %v618 = vpop.f32.mrf.mxu0
      %619 = vdwg.mxu0
      %v620 = vadd.f32 %v545, %v617
      %v621 = vsub.f32 0.0, %v620
      %v622 = vadd.f32 %v545, %v546
      %v623 = vadd.f32 %v622, %v617
      %v625 = vsel %vm468, %v546, 0
      %627 = vmatprep.subr.mxu0 0.0
      %628 = vmatpush1.msra.mxu0 0.0
      %629 = vmatprep.subr.mxu0 0.0
      %630 = vmatpush1.msra.mxu0 0.0
      %631 = vmatprep.subr.mxu0 0.0
      %632 = vmatpush1.msra.mxu0 0.0
      %633 = vmatprep.subr.mxu0 0.0
      %634 = vmatpush1.msra.mxu0 0.0
      %635 = vmatprep.subr.mxu0 0.0
      %636 = vmatpush1.msra.mxu0 0.0
      %637 = vmatprep.subr.mxu0 0.0
      %638 = vmatpush1.msra.mxu0 0.0
      %639 = vmatprep.subr.mxu0 0.0
      %640 = vmatpush1.msra.mxu0 0.0
      %641 = vmatprep.subr.mxu0 0.0
      %642 = vmatpush1.msra.mxu0 0.0
      %643 = vmatprep.subr.mxu0 0.0
      %644 = vmatpush1.msra.mxu0 0.0
      %645 = vmatprep.subr.mxu0 0.0
      %646 = vmatpush1.msra.mxu0 0.0
      %647 = vmatprep.subr.mxu0 0.0
      %648 = vmatpush1.msra.mxu0 0.0
      %649 = vmatprep.subr.mxu0 0.0
      %650 = vmatpush1.msra.mxu0 0.0
      %651 = vmatprep.subr.mxu0 0.0
      %652 = vmatpush1.msra.mxu0 0.0
      %653 = vmatprep.subr.mxu0 0.0
      %654 = vmatpush1.msra.mxu0 0.0
      %655 = vmatprep.subr.mxu0 0.0
      %656 = vmatpush1.msra.mxu0 0.0
      %657 = vmatprep.subr.mxu0 0.0
      %658 = vmatpush1.msra.mxu0 %v623
      %659 = vmatprep.subr.mxu0 0.0
      %660 = vmatpush2.msra.mxu0 0.0
      %661 = vmatprep.subr.mxu0 0.0
      %662 = vmatpush2.msra.mxu0 0.0
      %663 = vmatprep.subr.mxu0 0.0
      %664 = vmatpush2.msra.mxu0 0.0
      %665 = vmatprep.subr.mxu0 0.0
      %666 = vmatpush2.msra.mxu0 0.0
      %667 = vmatprep.subr.mxu0 0.0
      %668 = vmatpush2.msra.mxu0 0.0
      %669 = vmatprep.subr.mxu0 0.0
      %670 = vmatpush2.msra.mxu0 0.0
      %671 = vmatprep.subr.mxu0 0.0
      %672 = vmatpush2.msra.mxu0 0.0
      %673 = vmatprep.subr.mxu0 0.0
      %674 = vmatpush2.msra.mxu0 0.0
      %675 = vmatprep.subr.mxu0 0.0
      %676 = vmatpush2.msra.mxu0 0.0
      %677 = vmatprep.subr.mxu0 0.0
      %678 = vmatpush2.msra.mxu0 0.0
      %679 = vmatprep.subr.mxu0 0.0
      %680 = vmatpush2.msra.mxu0 0.0
      %681 = vmatprep.subr.mxu0 0.0
      %682 = vmatpush2.msra.mxu0 0.0
      %683 = vmatprep.subr.mxu0 0.0
      %684 = vmatpush2.msra.mxu0 0.0
      %685 = vmatprep.subr.mxu0 0.0
      %686 = vmatpush2.msra.mxu0 0.0
      %687 = vmatprep.subr.mxu0 0.0
      %688 = vmatpush2.msra.mxu0 0.0
      %689 = vmatprep.subr.mxu0 0.0
      %690 = vmatpush2.msra.mxu0 0.0
      %691 = vmatprep.mubr.f32.mxu0 0.0
      %692 = vmatmul.mubr.f32.gmra.mxu0 %v625
      %v693 = vpop.f32.mrf.mxu0
      %v694 = vadd.f32 0.0, %v693
      %v695 = vpop.f32.mrf.mxu0
      %696 = vdwg.mxu0
      %v697 = vsub.f32 %v621, %v694
      %698 = vmatprep.subr.mxu0 0.0
      %699 = vmatpush1.msra.mxu0 0.0
      %700 = vmatprep.subr.mxu0 0.0
      %701 = vmatpush1.msra.mxu0 0.0
      %702 = vmatprep.subr.mxu0 0.0
      %703 = vmatpush1.msra.mxu0 0.0
      %704 = vmatprep.subr.mxu0 0.0
      %705 = vmatpush1.msra.mxu0 0.0
      %706 = vmatprep.subr.mxu0 0.0
      %707 = vmatpush1.msra.mxu0 0.0
      %708 = vmatprep.subr.mxu0 0.0
      %709 = vmatpush1.msra.mxu0 0.0
      %710 = vmatprep.subr.mxu0 0.0
      %711 = vmatpush1.msra.mxu0 0.0
      %712 = vmatprep.subr.mxu0 0.0
      %713 = vmatpush1.msra.mxu0 0.0
      %714 = vmatprep.subr.mxu0 0.0
      %715 = vmatpush1.msra.mxu0 0.0
      %716 = vmatprep.subr.mxu0 0.0
      %717 = vmatpush1.msra.mxu0 0.0
      %718 = vmatprep.subr.mxu0 0.0
      %719 = vmatpush1.msra.mxu0 0.0
      %720 = vmatprep.subr.mxu0 0.0
      %721 = vmatpush1.msra.mxu0 0.0
      %722 = vmatprep.subr.mxu0 0.0
      %723 = vmatpush1.msra.mxu0 0.0
      %724 = vmatprep.subr.mxu0 0.0
      %725 = vmatpush1.msra.mxu0 0.0
      %726 = vmatprep.subr.mxu0 0.0
      %727 = vmatpush1.msra.mxu0 0.0
      %728 = vmatprep.subr.mxu0 0.0
      %729 = vmatpush1.msra.mxu0 %v697
      %730 = vmatprep.subr.mxu0 0.0
      %731 = vmatpush2.msra.mxu0 0.0
      %732 = vmatprep.subr.mxu0 0.0
      %733 = vmatpush2.msra.mxu0 0.0
      %734 = vmatprep.subr.mxu0 0.0
      %735 = vmatpush2.msra.mxu0 0.0
      %736 = vmatprep.subr.mxu0 0.0
      %737 = vmatpush2.msra.mxu0 0.0
      %738 = vmatprep.subr.mxu0 0.0
      %739 = vmatpush2.msra.mxu0 0.0
      %740 = vmatprep.subr.mxu0 0.0
      %741 = vmatpush2.msra.mxu0 0.0
      %742 = vmatprep.subr.mxu0 0.0
      %743 = vmatpush2.msra.mxu0 0.0
      %744 = vmatprep.subr.mxu0 0.0
      %745 = vmatpush2.msra.mxu0 0.0
      %746 = vmatprep.subr.mxu0 0.0
      %747 = vmatpush2.msra.mxu0 0.0
      %748 = vmatprep.subr.mxu0 0.0
      %749 = vmatpush2.msra.mxu0 0.0
      %750 = vmatprep.subr.mxu0 0.0
      %751 = vmatpush2.msra.mxu0 0.0
      %752 = vmatprep.subr.mxu0 0.0
      %753 = vmatpush2.msra.mxu0 0.0
      %754 = vmatprep.subr.mxu0 0.0
      %755 = vmatpush2.msra.mxu0 0.0
      %756 = vmatprep.subr.mxu0 0.0
      %757 = vmatpush2.msra.mxu0 0.0
      %758 = vmatprep.subr.mxu0 0.0
      %759 = vmatpush2.msra.mxu0 0.0
      %760 = vmatprep.subr.mxu0 0.0
      %761 = vmatpush2.msra.mxu0 0.0
      %762 = vmatprep.mubr.f32.mxu0 0.0
      %763 = vmatmul.mubr.f32.gmra.mxu0 %v548
      %v764 = vpop.f32.mrf.mxu0
      %v765 = vadd.f32 0.0, %v764
      %v766 = vpop.f32.mrf.mxu0
      %767 = vdwg.mxu0
      %v768 = vadd.f32 %v545, %v765
      %v769 = vsub.f32 0.0, %v768
      %v770 = vadd.f32 %v545, %v697
      %v771 = vadd.f32 %v770, %v765
      %v773 = vsel %vm468, %v697, 0
      %775 = vmatprep.subr.mxu0 0.0
      %776 = vmatpush1.msra.mxu0 0.0
      %777 = vmatprep.subr.mxu0 0.0
      %778 = vmatpush1.msra.mxu0 0.0
      %779 = vmatprep.subr.mxu0 0.0
      %780 = vmatpush1.msra.mxu0 0.0
      %781 = vmatprep.subr.mxu0 0.0
      %782 = vmatpush1.msra.mxu0 0.0
      %783 = vmatprep.subr.mxu0 0.0
      %784 = vmatpush1.msra.mxu0 0.0
      %785 = vmatprep.subr.mxu0 0.0
      %786 = vmatpush1.msra.mxu0 0.0
      %787 = vmatprep.subr.mxu0 0.0
      %788 = vmatpush1.msra.mxu0 0.0
      %789 = vmatprep.subr.mxu0 0.0
      %790 = vmatpush1.msra.mxu0 0.0
      %791 = vmatprep.subr.mxu0 0.0
      %792 = vmatpush1.msra.mxu0 0.0
      %793 = vmatprep.subr.mxu0 0.0
      %794 = vmatpush1.msra.mxu0 0.0
      %795 = vmatprep.subr.mxu0 0.0
      %796 = vmatpush1.msra.mxu0 0.0
      %797 = vmatprep.subr.mxu0 0.0
      %798 = vmatpush1.msra.mxu0 0.0
      %799 = vmatprep.subr.mxu0 0.0
      %800 = vmatpush1.msra.mxu0 0.0
      %801 = vmatprep.subr.mxu0 0.0
      %802 = vmatpush1.msra.mxu0 0.0
      %803 = vmatprep.subr.mxu0 0.0
      %804 = vmatpush1.msra.mxu0 0.0
      %805 = vmatprep.subr.mxu0 0.0
      %806 = vmatpush1.msra.mxu0 %v771
      %807 = vmatprep.subr.mxu0 0.0
      %808 = vmatpush2.msra.mxu0 0.0
      %809 = vmatprep.subr.mxu0 0.0
      %810 = vmatpush2.msra.mxu0 0.0
      %811 = vmatprep.subr.mxu0 0.0
      %812 = vmatpush2.msra.mxu0 0.0
      %813 = vmatprep.subr.mxu0 0.0
      %814 = vmatpush2.msra.mxu0 0.0
      %815 = vmatprep.subr.mxu0 0.0
      %816 = vmatpush2.msra.mxu0 0.0
      %817 = vmatprep.subr.mxu0 0.0
      %818 = vmatpush2.msra.mxu0 0.0
      %819 = vmatprep.subr.mxu0 0.0
      %820 = vmatpush2.msra.mxu0 0.0
      %821 = vmatprep.subr.mxu0 0.0
      %822 = vmatpush2.msra.mxu0 0.0
      %823 = vmatprep.subr.mxu0 0.0
      %824 = vmatpush2.msra.mxu0 0.0
      %825 = vmatprep.subr.mxu0 0.0
      %826 = vmatpush2.msra.mxu0 0.0
      %827 = vmatprep.subr.mxu0 0.0
      %828 = vmatpush2.msra.mxu0 0.0
      %829 = vmatprep.subr.mxu0 0.0
      %830 = vmatpush2.msra.mxu0 0.0
      %831 = vmatprep.subr.mxu0 0.0
      %832 = vmatpush2.msra.mxu0 0.0
      %833 = vmatprep.subr.mxu0 0.0
      %834 = vmatpush2.msra.mxu0 0.0
      %835 = vmatprep.subr.mxu0 0.0
      %836 = vmatpush2.msra.mxu0 0.0
      %837 = vmatprep.subr.mxu0 0.0
      %838 = vmatpush2.msra.mxu0 0.0
      %839 = vmatprep.mubr.f32.mxu0 0.0
      %840 = vmatmul.mubr.f32.gmra.mxu0 %v773
      %v841 = vpop.f32.mrf.mxu0
      %v842 = vadd.f32 0.0, %v841
      %v843 = vpop.f32.mrf.mxu0
      %844 = vdwg.mxu0
      %v845 = vsub.f32 %v769, %v842
      %v847 = vsel %vm468, %v458, 0
      %849 = vmatprep.subr.mxu0 0.0
      %850 = vmatpush1.xpose.msra.mxu0 0.0
      %851 = vmatprep.subr.mxu0 0.0
      %852 = vmatpush1.xpose.msra.mxu0 0.0
      %853 = vmatprep.subr.mxu0 0.0
      %854 = vmatpush1.xpose.msra.mxu0 0.0
      %855 = vmatprep.subr.mxu0 0.0
      %856 = vmatpush1.xpose.msra.mxu0 0.0
      %857 = vmatprep.subr.mxu0 0.0
      %858 = vmatpush1.xpose.msra.mxu0 0.0
      %859 = vmatprep.subr.mxu0 0.0
      %860 = vmatpush1.xpose.msra.mxu0 0.0
      %861 = vmatprep.subr.mxu0 0.0
      %862 = vmatpush1.xpose.msra.mxu0 0.0
      %863 = vmatprep.subr.mxu0 0.0
      %864 = vmatpush1.xpose.msra.mxu0 0.0
      %865 = vmatprep.subr.mxu0 0.0
      %866 = vmatpush1.xpose.msra.mxu0 0.0
      %867 = vmatprep.subr.mxu0 0.0
      %868 = vmatpush1.xpose.msra.mxu0 0.0
      %869 = vmatprep.subr.mxu0 0.0
      %870 = vmatpush1.xpose.msra.mxu0 0.0
      %871 = vmatprep.subr.mxu0 0.0
      %872 = vmatpush1.xpose.msra.mxu0 0.0
      %873 = vmatprep.subr.mxu0 0.0
      %874 = vmatpush1.xpose.msra.mxu0 0.0
      %875 = vmatprep.subr.mxu0 0.0
      %876 = vmatpush1.xpose.msra.mxu0 0.0
      %877 = vmatprep.subr.mxu0 0.0
      %878 = vmatpush1.xpose.msra.mxu0 0.0
      %879 = vmatprep.subr.mxu0 0.0
      %880 = vmatpush1.xpose.msra.mxu0 %v473
      %881 = vmatprep.subr.mxu0 0.0
      %882 = vmatpush2.xpose.msra.mxu0 0.0
      %883 = vmatprep.subr.mxu0 0.0
      %884 = vmatpush2.xpose.msra.mxu0 0.0
      %885 = vmatprep.subr.mxu0 0.0
      %886 = vmatpush2.xpose.msra.mxu0 0.0
      %887 = vmatprep.subr.mxu0 0.0
      %888 = vmatpush2.xpose.msra.mxu0 0.0
      %889 = vmatprep.subr.mxu0 0.0
      %890 = vmatpush2.xpose.msra.mxu0 0.0
      %891 = vmatprep.subr.mxu0 0.0
      %892 = vmatpush2.xpose.msra.mxu0 0.0
      %893 = vmatprep.subr.mxu0 0.0
      %894 = vmatpush2.xpose.msra.mxu0 0.0
      %895 = vmatprep.subr.mxu0 0.0
      %896 = vmatpush2.xpose.msra.mxu0 0.0
      %897 = vmatprep.subr.mxu0 0.0
      %898 = vmatpush2.xpose.msra.mxu0 0.0
      %899 = vmatprep.subr.mxu0 0.0
      %900 = vmatpush2.xpose.msra.mxu0 0.0
      %901 = vmatprep.subr.mxu0 0.0
      %902 = vmatpush2.xpose.msra.mxu0 0.0
      %903 = vmatprep.subr.mxu0 0.0
      %904 = vmatpush2.xpose.msra.mxu0 0.0
      %905 = vmatprep.subr.mxu0 0.0
      %906 = vmatpush2.xpose.msra.mxu0 0.0
      %907 = vmatprep.subr.mxu0 0.0
      %908 = vmatpush2.xpose.msra.mxu0 0.0
      %909 = vmatprep.subr.mxu0 0.0
      %910 = vmatpush2.xpose.msra.mxu0 0.0
      %911 = vmatprep.subr.mxu0 0.0
      %912 = vmatpush2.xpose.msra.mxu0 0.0
      %913 = vmatprep.mubr.f32.mxu0 0.0
      %914 = vmatmul.mubr.f32.gmra.mxu0 %v847
      %v915 = vpop.f32.mrf.mxu0
      %v916 = vadd.f32 0.0, %v915
      %v917 = vpop.f32.mrf.mxu0
      %918 = vdwg.mxu0
      %v919 = vsel %vm466, %v916, 0.0
      %v921 = vsel %vm468, %v919, 0
      %923 = vmatprep.subr.mxu0 0.0
      %924 = vmatpush1.msra.mxu0 0.0
      %925 = vmatprep.subr.mxu0 0.0
      %926 = vmatpush1.msra.mxu0 0.0
      %927 = vmatprep.subr.mxu0 0.0
      %928 = vmatpush1.msra.mxu0 0.0
      %929 = vmatprep.subr.mxu0 0.0
      %930 = vmatpush1.msra.mxu0 0.0
      %931 = vmatprep.subr.mxu0 0.0
      %932 = vmatpush1.msra.mxu0 0.0
      %933 = vmatprep.subr.mxu0 0.0
      %934 = vmatpush1.msra.mxu0 0.0
      %935 = vmatprep.subr.mxu0 0.0
      %936 = vmatpush1.msra.mxu0 0.0
      %937 = vmatprep.subr.mxu0 0.0
      %938 = vmatpush1.msra.mxu0 0.0
      %939 = vmatprep.subr.mxu0 0.0
      %940 = vmatpush1.msra.mxu0 0.0
      %941 = vmatprep.subr.mxu0 0.0
      %942 = vmatpush1.msra.mxu0 0.0
      %943 = vmatprep.subr.mxu0 0.0
      %944 = vmatpush1.msra.mxu0 0.0
      %945 = vmatprep.subr.mxu0 0.0
      %946 = vmatpush1.msra.mxu0 0.0
      %947 = vmatprep.subr.mxu0 0.0
      %948 = vmatpush1.msra.mxu0 0.0
      %949 = vmatprep.subr.mxu0 0.0
      %950 = vmatpush1.msra.mxu0 0.0
      %951 = vmatprep.subr.mxu0 0.0
      %952 = vmatpush1.msra.mxu0 0.0
      %953 = vmatprep.subr.mxu0 0.0
      %954 = vmatpush1.msra.mxu0 %v845
      %955 = vmatprep.subr.mxu0 0.0
      %956 = vmatpush2.msra.mxu0 0.0
      %957 = vmatprep.subr.mxu0 0.0
      %958 = vmatpush2.msra.mxu0 0.0
      %959 = vmatprep.subr.mxu0 0.0
      %960 = vmatpush2.msra.mxu0 0.0
      %961 = vmatprep.subr.mxu0 0.0
      %962 = vmatpush2.msra.mxu0 0.0
      %963 = vmatprep.subr.mxu0 0.0
      %964 = vmatpush2.msra.mxu0 0.0
      %965 = vmatprep.subr.mxu0 0.0
      %966 = vmatpush2.msra.mxu0 0.0
      %967 = vmatprep.subr.mxu0 0.0
      %968 = vmatpush2.msra.mxu0 0.0
      %969 = vmatprep.subr.mxu0 0.0
      %970 = vmatpush2.msra.mxu0 0.0
      %971 = vmatprep.subr.mxu0 0.0
      %972 = vmatpush2.msra.mxu0 0.0
      %973 = vmatprep.subr.mxu0 0.0
      %974 = vmatpush2.msra.mxu0 0.0
      %975 = vmatprep.subr.mxu0 0.0
      %976 = vmatpush2.msra.mxu0 0.0
      %977 = vmatprep.subr.mxu0 0.0
      %978 = vmatpush2.msra.mxu0 0.0
      %979 = vmatprep.subr.mxu0 0.0
      %980 = vmatpush2.msra.mxu0 0.0
      %981 = vmatprep.subr.mxu0 0.0
      %982 = vmatpush2.msra.mxu0 0.0
      %983 = vmatprep.subr.mxu0 0.0
      %984 = vmatpush2.msra.mxu0 0.0
      %985 = vmatprep.subr.mxu0 0.0
      %986 = vmatpush2.msra.mxu0 0.0
      %987 = vmatprep.mubr.f32.mxu0 0.0
      %988 = vmatmul.mubr.f32.gmra.mxu0 %v921
      %v989 = vpop.f32.mrf.mxu0
      %v990 = vadd.f32 0.0, %v989
      %v991 = vpop.f32.mrf.mxu0
      %992 = vdwg.mxu0
      %v993 = vadd.f32 %v919, %v990
      %v995 = vsel %vm468, %v459, 0
      %997 = vmatprep.subr.mxu0 0.0
      %998 = vmatpush1.xpose.msra.mxu0 0.0
      %999 = vmatprep.subr.mxu0 0.0
      %1000 = vmatpush1.xpose.msra.mxu0 0.0
      %1001 = vmatprep.subr.mxu0 0.0
      %1002 = vmatpush1.xpose.msra.mxu0 0.0
      %1003 = vmatprep.subr.mxu0 0.0
      %1004 = vmatpush1.xpose.msra.mxu0 0.0
      %1005 = vmatprep.subr.mxu0 0.0
      %1006 = vmatpush1.xpose.msra.mxu0 0.0
      %1007 = vmatprep.subr.mxu0 0.0
      %1008 = vmatpush1.xpose.msra.mxu0 0.0
      %1009 = vmatprep.subr.mxu0 0.0
      %1010 = vmatpush1.xpose.msra.mxu0 0.0
      %1011 = vmatprep.subr.mxu0 0.0
      %1012 = vmatpush1.xpose.msra.mxu0 0.0
      %1013 = vmatprep.subr.mxu0 0.0
      %1014 = vmatpush1.xpose.msra.mxu0 0.0
      %1015 = vmatprep.subr.mxu0 0.0
      %1016 = vmatpush1.xpose.msra.mxu0 0.0
      %1017 = vmatprep.subr.mxu0 0.0
      %1018 = vmatpush1.xpose.msra.mxu0 0.0
      %1019 = vmatprep.subr.mxu0 0.0
      %1020 = vmatpush1.xpose.msra.mxu0 0.0
      %1021 = vmatprep.subr.mxu0 0.0
      %1022 = vmatpush1.xpose.msra.mxu0 0.0
      %1023 = vmatprep.subr.mxu0 0.0
      %1024 = vmatpush1.xpose.msra.mxu0 0.0
      %1025 = vmatprep.subr.mxu0 0.0
      %1026 = vmatpush1.xpose.msra.mxu0 0.0
      %1027 = vmatprep.subr.mxu0 0.0
      %1028 = vmatpush1.xpose.msra.mxu0 %v995
      %1029 = vmatprep.subr.mxu0 0.0
      %1030 = vmatpush2.xpose.msra.mxu0 0.0
      %1031 = vmatprep.subr.mxu0 0.0
      %1032 = vmatpush2.xpose.msra.mxu0 0.0
      %1033 = vmatprep.subr.mxu0 0.0
      %1034 = vmatpush2.xpose.msra.mxu0 0.0
      %1035 = vmatprep.subr.mxu0 0.0
      %1036 = vmatpush2.xpose.msra.mxu0 0.0
      %1037 = vmatprep.subr.mxu0 0.0
      %1038 = vmatpush2.xpose.msra.mxu0 0.0
      %1039 = vmatprep.subr.mxu0 0.0
      %1040 = vmatpush2.xpose.msra.mxu0 0.0
      %1041 = vmatprep.subr.mxu0 0.0
      %1042 = vmatpush2.xpose.msra.mxu0 0.0
      %1043 = vmatprep.subr.mxu0 0.0
      %1044 = vmatpush2.xpose.msra.mxu0 0.0
      %1045 = vmatprep.subr.mxu0 0.0
      %1046 = vmatpush2.xpose.msra.mxu0 0.0
      %1047 = vmatprep.subr.mxu0 0.0
      %1048 = vmatpush2.xpose.msra.mxu0 0.0
      %1049 = vmatprep.subr.mxu0 0.0
      %1050 = vmatpush2.xpose.msra.mxu0 0.0
      %1051 = vmatprep.subr.mxu0 0.0
      %1052 = vmatpush2.xpose.msra.mxu0 0.0
      %1053 = vmatprep.subr.mxu0 0.0
      %1054 = vmatpush2.xpose.msra.mxu0 0.0
      %1055 = vmatprep.subr.mxu0 0.0
      %1056 = vmatpush2.xpose.msra.mxu0 0.0
      %1057 = vmatprep.subr.mxu0 0.0
      %1058 = vmatpush2.xpose.msra.mxu0 0.0
      %1059 = vmatprep.subr.mxu0 0.0
      %1060 = vmatpush2.xpose.msra.mxu0 0.0
      %1061 = vmatprep.mubr.f32.mxu0 0.0
      %1062 = vmatmul.mubr.f32.gmra.mxu0 %v470
      %v1063 = vpop.f32.mrf.mxu0
      %v1064 = vadd.f32 0.0, %v1063
      %v1065 = vpop.f32.mrf.mxu0
      %1066 = vdwg.mxu0
      %v1067 = vsel %vm467, %v1064, 0.0
      %v1069 = vsel %vm468, %v993, 0
      %1071 = vmatprep.subr.mxu0 0.0
      %1072 = vmatpush1.msra.mxu0 0.0
      %1073 = vmatprep.subr.mxu0 0.0
      %1074 = vmatpush1.msra.mxu0 0.0
      %1075 = vmatprep.subr.mxu0 0.0
      %1076 = vmatpush1.msra.mxu0 0.0
      %1077 = vmatprep.subr.mxu0 0.0
      %1078 = vmatpush1.msra.mxu0 0.0
      %1079 = vmatprep.subr.mxu0 0.0
      %1080 = vmatpush1.msra.mxu0 0.0
      %1081 = vmatprep.subr.mxu0 0.0
      %1082 = vmatpush1.msra.mxu0 0.0
      %1083 = vmatprep.subr.mxu0 0.0
      %1084 = vmatpush1.msra.mxu0 0.0
      %1085 = vmatprep.subr.mxu0 0.0
      %1086 = vmatpush1.msra.mxu0 0.0
      %1087 = vmatprep.subr.mxu0 0.0
      %1088 = vmatpush1.msra.mxu0 0.0
      %1089 = vmatprep.subr.mxu0 0.0
      %1090 = vmatpush1.msra.mxu0 0.0
      %1091 = vmatprep.subr.mxu0 0.0
      %1092 = vmatpush1.msra.mxu0 0.0
      %1093 = vmatprep.subr.mxu0 0.0
      %1094 = vmatpush1.msra.mxu0 0.0
      %1095 = vmatprep.subr.mxu0 0.0
      %1096 = vmatpush1.msra.mxu0 0.0
      %1097 = vmatprep.subr.mxu0 0.0
      %1098 = vmatpush1.msra.mxu0 0.0
      %1099 = vmatprep.subr.mxu0 0.0
      %1100 = vmatpush1.msra.mxu0 0.0
      %1101 = vmatprep.subr.mxu0 0.0
      %1102 = vmatpush1.msra.mxu0 %v1067
      %1103 = vmatprep.subr.mxu0 0.0
      %1104 = vmatpush2.msra.mxu0 0.0
      %1105 = vmatprep.subr.mxu0 0.0
      %1106 = vmatpush2.msra.mxu0 0.0
      %1107 = vmatprep.subr.mxu0 0.0
      %1108 = vmatpush2.msra.mxu0 0.0
      %1109 = vmatprep.subr.mxu0 0.0
      %1110 = vmatpush2.msra.mxu0 0.0
      %1111 = vmatprep.subr.mxu0 0.0
      %1112 = vmatpush2.msra.mxu0 0.0
      %1113 = vmatprep.subr.mxu0 0.0
      %1114 = vmatpush2.msra.mxu0 0.0
      %1115 = vmatprep.subr.mxu0 0.0
      %1116 = vmatpush2.msra.mxu0 0.0
      %1117 = vmatprep.subr.mxu0 0.0
      %1118 = vmatpush2.msra.mxu0 0.0
      %1119 = vmatprep.subr.mxu0 0.0
      %1120 = vmatpush2.msra.mxu0 0.0
      %1121 = vmatprep.subr.mxu0 0.0
      %1122 = vmatpush2.msra.mxu0 0.0
      %1123 = vmatprep.subr.mxu0 0.0
      %1124 = vmatpush2.msra.mxu0 0.0
      %1125 = vmatprep.subr.mxu0 0.0
      %1126 = vmatpush2.msra.mxu0 0.0
      %1127 = vmatprep.subr.mxu0 0.0
      %1128 = vmatpush2.msra.mxu0 0.0
      %1129 = vmatprep.subr.mxu0 0.0
      %1130 = vmatpush2.msra.mxu0 0.0
      %1131 = vmatprep.subr.mxu0 0.0
      %1132 = vmatpush2.msra.mxu0 0.0
      %1133 = vmatprep.subr.mxu0 0.0
      %1134 = vmatpush2.msra.mxu0 0.0
      %1135 = vmatprep.mubr.f32.mxu0 0.0
      %1136 = vmatmul.mubr.f32.gmra.mxu0 %v1069
      %v1137 = vpop.f32.mrf.mxu0
      %v1138 = vadd.f32 0.0, %v1137
      %v1139 = vpop.f32.mrf.mxu0
      %1140 = vdwg.mxu0
      %1141 = vmatprep.subr.mxu0 0.0
      %1142 = vmatpush1.xpose.msra.mxu0 0.0
      %1143 = vmatprep.subr.mxu0 0.0
      %1144 = vmatpush1.xpose.msra.mxu0 0.0
      %1145 = vmatprep.subr.mxu0 0.0
      %1146 = vmatpush1.xpose.msra.mxu0 0.0
      %1147 = vmatprep.subr.mxu0 0.0
      %1148 = vmatpush1.xpose.msra.mxu0 0.0
      %1149 = vmatprep.subr.mxu0 0.0
      %1150 = vmatpush1.xpose.msra.mxu0 0.0
      %1151 = vmatprep.subr.mxu0 0.0
      %1152 = vmatpush1.xpose.msra.mxu0 0.0
      %1153 = vmatprep.subr.mxu0 0.0
      %1154 = vmatpush1.xpose.msra.mxu0 0.0
      %1155 = vmatprep.subr.mxu0 0.0
      %1156 = vmatpush1.xpose.msra.mxu0 0.0
      %1157 = vmatprep.subr.mxu0 0.0
      %1158 = vmatpush1.xpose.msra.mxu0 0.0
      %1159 = vmatprep.subr.mxu0 0.0
      %1160 = vmatpush1.xpose.msra.mxu0 0.0
      %1161 = vmatprep.subr.mxu0 0.0
      %1162 = vmatpush1.xpose.msra.mxu0 0.0
      %1163 = vmatprep.subr.mxu0 0.0
      %1164 = vmatpush1.xpose.msra.mxu0 0.0
      %1165 = vmatprep.subr.mxu0 0.0
      %1166 = vmatpush1.xpose.msra.mxu0 0.0
      %1167 = vmatprep.subr.mxu0 0.0
      %1168 = vmatpush1.xpose.msra.mxu0 0.0
      %1169 = vmatprep.subr.mxu0 0.0
      %1170 = vmatpush1.xpose.msra.mxu0 0.0
      %1171 = vmatprep.subr.mxu0 0.0
      %1172 = vmatpush1.xpose.msra.mxu0 %v995
      %1173 = vmatprep.subr.mxu0 0.0
      %1174 = vmatpush2.xpose.msra.mxu0 0.0
      %1175 = vmatprep.subr.mxu0 0.0
      %1176 = vmatpush2.xpose.msra.mxu0 0.0
      %1177 = vmatprep.subr.mxu0 0.0
      %1178 = vmatpush2.xpose.msra.mxu0 0.0
      %1179 = vmatprep.subr.mxu0 0.0
      %1180 = vmatpush2.xpose.msra.mxu0 0.0
      %1181 = vmatprep.subr.mxu0 0.0
      %1182 = vmatpush2.xpose.msra.mxu0 0.0
      %1183 = vmatprep.subr.mxu0 0.0
      %1184 = vmatpush2.xpose.msra.mxu0 0.0
      %1185 = vmatprep.subr.mxu0 0.0
      %1186 = vmatpush2.xpose.msra.mxu0 0.0
      %1187 = vmatprep.subr.mxu0 0.0
      %1188 = vmatpush2.xpose.msra.mxu0 0.0
      %1189 = vmatprep.subr.mxu0 0.0
      %1190 = vmatpush2.xpose.msra.mxu0 0.0
      %1191 = vmatprep.subr.mxu0 0.0
      %1192 = vmatpush2.xpose.msra.mxu0 0.0
      %1193 = vmatprep.subr.mxu0 0.0
      %1194 = vmatpush2.xpose.msra.mxu0 0.0
      %1195 = vmatprep.subr.mxu0 0.0
      %1196 = vmatpush2.xpose.msra.mxu0 0.0
      %1197 = vmatprep.subr.mxu0 0.0
      %1198 = vmatpush2.xpose.msra.mxu0 0.0
      %1199 = vmatprep.subr.mxu0 0.0
      %1200 = vmatpush2.xpose.msra.mxu0 0.0
      %1201 = vmatprep.subr.mxu0 0.0
      %1202 = vmatpush2.xpose.msra.mxu0 0.0
      %1203 = vmatprep.subr.mxu0 0.0
      %1204 = vmatpush2.xpose.msra.mxu0 0.0
      %1205 = vmatprep.mubr.f32.mxu0 0.0
      %1206 = vmatmul.mubr.f32.gmra.mxu0 %v847
      %v1207 = vpop.f32.mrf.mxu0
      %v1208 = vadd.f32 0.0, %v1207
      %v1209 = vpop.f32.mrf.mxu0
      %1210 = vdwg.mxu0
      %v1211 = vsub.f32 %v1208, %v1138
      %v1212 = vmul.f32 %v1211, 0.35355338
      %v1213 = vsel %vm466, %v1212, -1e+30
      %s1214 = smul.u32 %s23, 8
      %s1215 = scalar_lea.vmem %s444, %s1214
      %v1216 = vld [vmem:[%s1215] sm:$0xff]
      %v1217 = vsel %vm468, %v1213, -inf
      %1218 = vmax.xlane.f32.xlu0 %v1217
      %v1219 = vpop.xlane.xlu0 %1218
      %vm1220 = vcmask 7168
      %1221 = vst.msk [vmem:[#allocation3] sm:$0xff] %vm1220, %v1219
      %v1222 = vld [vmem:[#allocation3] sm:$0xff]
      %1224 = vset.pattern.permute.xlu0 0
      %1225 = vperm.xlu0 %1224, %v1222
      %v1226 = vpop.permute.xlu0 %1225
      %v1228 = vsub.f32 %v1213, %v1226
      %v1229 = vmul.f32 %v1228, 1.442695
      %v1230 = vpow.pop %v1229
      %v1231 = vsel %vm468, %v1230, 0.0
      %1232 = vadd.xlane.f32.xlu0 %v1231
      %v1233 = vpop.xlane.xlu0 %1232
      %1234 = vst.msk [vmem:[#allocation4] sm:$0xff] %vm1220, %v1233
      %v1236 = vsel %vm468, %v1230, 0
      %1238 = vmatprep.subr.mxu0 0.0
      %1239 = vmatpush1.msra.mxu0 0.0
      %1240 = vmatprep.subr.mxu0 0.0
      %1241 = vmatpush1.msra.mxu0 0.0
      %1242 = vmatprep.subr.mxu0 0.0
      %1243 = vmatpush1.msra.mxu0 0.0
      %1244 = vmatprep.subr.mxu0 0.0
      %1245 = vmatpush1.msra.mxu0 0.0
      %1246 = vmatprep.subr.mxu0 0.0
      %1247 = vmatpush1.msra.mxu0 0.0
      %1248 = vmatprep.subr.mxu0 0.0
      %1249 = vmatpush1.msra.mxu0 0.0
      %1250 = vmatprep.subr.mxu0 0.0
      %1251 = vmatpush1.msra.mxu0 0.0
      %1252 = vmatprep.subr.mxu0 0.0
      %1253 = vmatpush1.msra.mxu0 0.0
      %1254 = vmatprep.subr.mxu0 0.0
      %1255 = vmatpush1.msra.mxu0 0.0
      %1256 = vmatprep.subr.mxu0 0.0
      %1257 = vmatpush1.msra.mxu0 0.0
      %1258 = vmatprep.subr.mxu0 0.0
      %1259 = vmatpush1.msra.mxu0 0.0
      %1260 = vmatprep.subr.mxu0 0.0
      %1261 = vmatpush1.msra.mxu0 0.0
      %1262 = vmatprep.subr.mxu0 0.0
      %1263 = vmatpush1.msra.mxu0 0.0
      %1264 = vmatprep.subr.mxu0 0.0
      %1265 = vmatpush1.msra.mxu0 0.0
      %1266 = vmatprep.subr.mxu0 0.0
      %1267 = vmatpush1.msra.mxu0 0.0
      %1268 = vmatprep.subr.mxu0 0.0
      %1269 = vmatpush1.msra.mxu0 %v1216
      %1270 = vmatprep.subr.mxu0 0.0
      %1271 = vmatpush2.msra.mxu0 0.0
      %1272 = vmatprep.subr.mxu0 0.0
      %1273 = vmatpush2.msra.mxu0 0.0
      %1274 = vmatprep.subr.mxu0 0.0
      %1275 = vmatpush2.msra.mxu0 0.0
      %1276 = vmatprep.subr.mxu0 0.0
      %1277 = vmatpush2.msra.mxu0 0.0
      %1278 = vmatprep.subr.mxu0 0.0
      %1279 = vmatpush2.msra.mxu0 0.0
      %1280 = vmatprep.subr.mxu0 0.0
      %1281 = vmatpush2.msra.mxu0 0.0
      %1282 = vmatprep.subr.mxu0 0.0
      %1283 = vmatpush2.msra.mxu0 0.0
      %1284 = vmatprep.subr.mxu0 0.0
      %1285 = vmatpush2.msra.mxu0 0.0
      %1286 = vmatprep.subr.mxu0 0.0
      %1287 = vmatpush2.msra.mxu0 0.0
      %1288 = vmatprep.subr.mxu0 0.0
      %1289 = vmatpush2.msra.mxu0 0.0
      %1290 = vmatprep.subr.mxu0 0.0
      %1291 = vmatpush2.msra.mxu0 0.0
      %1292 = vmatprep.subr.mxu0 0.0
      %1293 = vmatpush2.msra.mxu0 0.0
      %1294 = vmatprep.subr.mxu0 0.0
      %1295 = vmatpush2.msra.mxu0 0.0
      %1296 = vmatprep.subr.mxu0 0.0
      %1297 = vmatpush2.msra.mxu0 0.0
      %1298 = vmatprep.subr.mxu0 0.0
      %1299 = vmatpush2.msra.mxu0 0.0
      %1300 = vmatprep.subr.mxu0 0.0
      %1301 = vmatpush2.msra.mxu0 0.0
      %1302 = vmatprep.mubr.f32.mxu0 0.0
      %1303 = vmatmul.mubr.f32.gmra.mxu0 %v1236
      %v1304 = vpop.f32.mrf.mxu0
      %v1305 = vadd.f32 0.0, %v1304
      %v1306 = vpop.f32.mrf.mxu0
      %1307 = vdwg.mxu0
      %1308 = vst.msk [vmem:[#allocation5] sm:$0xff] %vm468, %v1305
      %1309 = vmatprep.subr.mxu0 0.0
      %1310 = vmatpush1.msra.mxu0 0.0
      %1311 = vmatprep.subr.mxu0 0.0
      %1312 = vmatpush1.msra.mxu0 0.0
      %1313 = vmatprep.subr.mxu0 0.0
      %1314 = vmatpush1.msra.mxu0 0.0
      %1315 = vmatprep.subr.mxu0 0.0
      %1316 = vmatpush1.msra.mxu0 0.0
      %1317 = vmatprep.subr.mxu0 0.0
      %1318 = vmatpush1.msra.mxu0 0.0
      %1319 = vmatprep.subr.mxu0 0.0
      %1320 = vmatpush1.msra.mxu0 0.0
      %1321 = vmatprep.subr.mxu0 0.0
      %1322 = vmatpush1.msra.mxu0 0.0
      %1323 = vmatprep.subr.mxu0 0.0
      %1324 = vmatpush1.msra.mxu0 0.0
      %1325 = vmatprep.subr.mxu0 0.0
      %1326 = vmatpush1.msra.mxu0 0.0
      %1327 = vmatprep.subr.mxu0 0.0
      %1328 = vmatpush1.msra.mxu0 0.0
      %1329 = vmatprep.subr.mxu0 0.0
      %1330 = vmatpush1.msra.mxu0 0.0
      %1331 = vmatprep.subr.mxu0 0.0
      %1332 = vmatpush1.msra.mxu0 0.0
      %1333 = vmatprep.subr.mxu0 0.0
      %1334 = vmatpush1.msra.mxu0 0.0
      %1335 = vmatprep.subr.mxu0 0.0
      %1336 = vmatpush1.msra.mxu0 0.0
      %1337 = vmatprep.subr.mxu0 0.0
      %1338 = vmatpush1.msra.mxu0 0.0
      %1339 = vmatprep.subr.mxu0 0.0
      %1340 = vmatpush1.msra.mxu0 %v461
      %1341 = vmatprep.subr.mxu0 0.0
      %1342 = vmatpush2.msra.mxu0 0.0
      %1343 = vmatprep.subr.mxu0 0.0
      %1344 = vmatpush2.msra.mxu0 0.0
      %1345 = vmatprep.subr.mxu0 0.0
      %1346 = vmatpush2.msra.mxu0 0.0
      %1347 = vmatprep.subr.mxu0 0.0
      %1348 = vmatpush2.msra.mxu0 0.0
      %1349 = vmatprep.subr.mxu0 0.0
      %1350 = vmatpush2.msra.mxu0 0.0
      %1351 = vmatprep.subr.mxu0 0.0
      %1352 = vmatpush2.msra.mxu0 0.0
      %1353 = vmatprep.subr.mxu0 0.0
      %1354 = vmatpush2.msra.mxu0 0.0
      %1355 = vmatprep.subr.mxu0 0.0
      %1356 = vmatpush2.msra.mxu0 0.0
      %1357 = vmatprep.subr.mxu0 0.0
      %1358 = vmatpush2.msra.mxu0 0.0
      %1359 = vmatprep.subr.mxu0 0.0
      %1360 = vmatpush2.msra.mxu0 0.0
      %1361 = vmatprep.subr.mxu0 0.0
      %1362 = vmatpush2.msra.mxu0 0.0
      %1363 = vmatprep.subr.mxu0 0.0
      %1364 = vmatpush2.msra.mxu0 0.0
      %1365 = vmatprep.subr.mxu0 0.0
      %1366 = vmatpush2.msra.mxu0 0.0
      %1367 = vmatprep.subr.mxu0 0.0
      %1368 = vmatpush2.msra.mxu0 0.0
      %1369 = vmatprep.subr.mxu0 0.0
      %1370 = vmatpush2.msra.mxu0 0.0
      %1371 = vmatprep.subr.mxu0 0.0
      %1372 = vmatpush2.msra.mxu0 0.0
      %1373 = vmatprep.mubr.f32.mxu0 0.0
      %1374 = vmatmul.mubr.f32.gmra.mxu0 %v1069
      %v1375 = vpop.f32.mrf.mxu0
      %v1376 = vadd.f32 0.0, %v1375
      %v1377 = vpop.f32.mrf.mxu0
      %1378 = vdwg.mxu0
      %v1379 = vsub.f32 %v458, %v1376
      // While loop
      $region41: #{path_attention_forward.4} parent=39 // loop_pre_header
        _
      $region42: #{path_attention_forward.4} parent=39 // loop_header
        %s1381 = sphi 0, %s1383
        %p1382 = scmp.ge.s32.totalorder %s1381, %s23
      $region43: #{path_attention_forward.4} parent=39 // loop_header_branch
        %1385 = sbr.rel (%p1382) target = $region47
      $region44: #{path_attention_forward.4} parent=39 // loop_body
        %s1386 = smul.u32 %s1381, 8
        %s1387 = scalar_lea.vmem [#allocation2], %s1386
        %v1388 = vld [vmem:[%s1387] sm:$0xff]
        %s1389 = scalar_lea.vmem %s444, %s1386
        %v1390 = vld [vmem:[%s1389] sm:$0xff]
        %v1392 = vsel %vm468, %v1379, 0
        %v1395 = vsel %vm468, %v1388, 0
        %1397 = vmatprep.subr.mxu0 0.0
        %1398 = vmatpush1.xpose.msra.mxu0 0.0
        %1399 = vmatprep.subr.mxu0 0.0
        %1400 = vmatpush1.xpose.msra.mxu0 0.0
        %1401 = vmatprep.subr.mxu0 0.0
        %1402 = vmatpush1.xpose.msra.mxu0 0.0
        %1403 = vmatprep.subr.mxu0 0.0
        %1404 = vmatpush1.xpose.msra.mxu0 0.0
        %1405 = vmatprep.subr.mxu0 0.0
        %1406 = vmatpush1.xpose.msra.mxu0 0.0
        %1407 = vmatprep.subr.mxu0 0.0
        %1408 = vmatpush1.xpose.msra.mxu0 0.0
        %1409 = vmatprep.subr.mxu0 0.0
        %1410 = vmatpush1.xpose.msra.mxu0 0.0
        %1411 = vmatprep.subr.mxu0 0.0
        %1412 = vmatpush1.xpose.msra.mxu0 0.0
        %1413 = vmatprep.subr.mxu0 0.0
        %1414 = vmatpush1.xpose.msra.mxu0 0.0
        %1415 = vmatprep.subr.mxu0 0.0
        %1416 = vmatpush1.xpose.msra.mxu0 0.0
        %1417 = vmatprep.subr.mxu0 0.0
        %1418 = vmatpush1.xpose.msra.mxu0 0.0
        %1419 = vmatprep.subr.mxu0 0.0
        %1420 = vmatpush1.xpose.msra.mxu0 0.0
        %1421 = vmatprep.subr.mxu0 0.0
        %1422 = vmatpush1.xpose.msra.mxu0 0.0
        %1423 = vmatprep.subr.mxu0 0.0
        %1424 = vmatpush1.xpose.msra.mxu0 0.0
        %1425 = vmatprep.subr.mxu0 0.0
        %1426 = vmatpush1.xpose.msra.mxu0 0.0
        %1427 = vmatprep.subr.mxu0 0.0
        %1428 = vmatpush1.xpose.msra.mxu0 %v1395
        %1429 = vmatprep.subr.mxu0 0.0
        %1430 = vmatpush2.xpose.msra.mxu0 0.0
        %1431 = vmatprep.subr.mxu0 0.0
        %1432 = vmatpush2.xpose.msra.mxu0 0.0
        %1433 = vmatprep.subr.mxu0 0.0
        %1434 = vmatpush2.xpose.msra.mxu0 0.0
        %1435 = vmatprep.subr.mxu0 0.0
        %1436 = vmatpush2.xpose.msra.mxu0 0.0
        %1437 = vmatprep.subr.mxu0 0.0
        %1438 = vmatpush2.xpose.msra.mxu0 0.0
        %1439 = vmatprep.subr.mxu0 0.0
        %1440 = vmatpush2.xpose.msra.mxu0 0.0
        %1441 = vmatprep.subr.mxu0 0.0
        %1442 = vmatpush2.xpose.msra.mxu0 0.0
        %1443 = vmatprep.subr.mxu0 0.0
        %1444 = vmatpush2.xpose.msra.mxu0 0.0
        %1445 = vmatprep.subr.mxu0 0.0
        %1446 = vmatpush2.xpose.msra.mxu0 0.0
        %1447 = vmatprep.subr.mxu0 0.0
        %1448 = vmatpush2.xpose.msra.mxu0 0.0
        %1449 = vmatprep.subr.mxu0 0.0
        %1450 = vmatpush2.xpose.msra.mxu0 0.0
        %1451 = vmatprep.subr.mxu0 0.0
        %1452 = vmatpush2.xpose.msra.mxu0 0.0
        %1453 = vmatprep.subr.mxu0 0.0
        %1454 = vmatpush2.xpose.msra.mxu0 0.0
        %1455 = vmatprep.subr.mxu0 0.0
        %1456 = vmatpush2.xpose.msra.mxu0 0.0
        %1457 = vmatprep.subr.mxu0 0.0
        %1458 = vmatpush2.xpose.msra.mxu0 0.0
        %1459 = vmatprep.subr.mxu0 0.0
        %1460 = vmatpush2.xpose.msra.mxu0 0.0
        %1461 = vmatprep.mubr.f32.mxu0 0.0
        %1462 = vmatmul.mubr.f32.gmra.mxu0 %v1392
        %v1463 = vpop.f32.mrf.mxu0
        %v1464 = vadd.f32 0.0, %v1463
        %v1465 = vpop.f32.mrf.mxu0
        %1466 = vdwg.mxu0
        %v1467 = vmul.f32 %v1464, 0.35355338
        %v1468 = vld [vmem:[#allocation3] sm:$0xff]
        %v1469 = vsel %vm468, %v1467, -inf
        %1470 = vmax.xlane.f32.xlu0 %v1469
        %v1471 = vpop.xlane.xlu0 %1470
        %v1472 = vmax.f32 %v1468, %v1471
        %v1473 = vsub.f32 %v1468, %v1472
        %v1474 = vmul.f32 %v1473, 1.442695
        %v1475 = vpow.pop %v1474
        %1477 = vset.pattern.permute.xlu0 0
        %1478 = vperm.xlu0 %1477, %v1472
        %v1479 = vpop.permute.xlu0 %1478
        %v1481 = vsub.f32 %v1467, %v1479
        %v1482 = vmul.f32 %v1481, 1.442695
        %v1483 = vpow.pop %v1482
        %1484 = vst.msk [vmem:[#allocation3] sm:$0xff] %vm1220, %v1472
        %v1485 = vld [vmem:[#allocation4] sm:$0xff]
        %v1486 = vmul.f32 %v1475, %v1485
        %v1487 = vsel %vm468, %v1483, 0.0
        %1488 = vadd.xlane.f32.xlu0 %v1487
        %v1489 = vpop.xlane.xlu0 %1488
        %v1490 = vadd.f32 %v1486, %v1489
        %1491 = vst.msk [vmem:[#allocation4] sm:$0xff] %vm1220, %v1490
        %v1492 = vld [vmem:[#allocation5] sm:$0xff]
        %1494 = vset.pattern.permute.xlu0 0
        %1495 = vperm.xlu0 %1494, %v1475
        %v1496 = vpop.permute.xlu0 %1495
        %v1498 = vmul.f32 %v1496, %v1492
        %v1500 = vsel %vm468, %v1483, 0
        %1502 = vmatprep.subr.mxu0 0.0
        %1503 = vmatpush1.msra.mxu0 0.0
        %1504 = vmatprep.subr.mxu0 0.0
        %1505 = vmatpush1.msra.mxu0 0.0
        %1506 = vmatprep.subr.mxu0 0.0
        %1507 = vmatpush1.msra.mxu0 0.0
        %1508 = vmatprep.subr.mxu0 0.0
        %1509 = vmatpush1.msra.mxu0 0.0
        %1510 = vmatprep.subr.mxu0 0.0
        %1511 = vmatpush1.msra.mxu0 0.0
        %1512 = vmatprep.subr.mxu0 0.0
        %1513 = vmatpush1.msra.mxu0 0.0
        %1514 = vmatprep.subr.mxu0 0.0
        %1515 = vmatpush1.msra.mxu0 0.0
        %1516 = vmatprep.subr.mxu0 0.0
        %1517 = vmatpush1.msra.mxu0 0.0
        %1518 = vmatprep.subr.mxu0 0.0
        %1519 = vmatpush1.msra.mxu0 0.0
        %1520 = vmatprep.subr.mxu0 0.0
        %1521 = vmatpush1.msra.mxu0 0.0
        %1522 = vmatprep.subr.mxu0 0.0
        %1523 = vmatpush1.msra.mxu0 0.0
        %1524 = vmatprep.subr.mxu0 0.0
        %1525 = vmatpush1.msra.mxu0 0.0
        %1526 = vmatprep.subr.mxu0 0.0
        %1527 = vmatpush1.msra.mxu0 0.0
        %1528 = vmatprep.subr.mxu0 0.0
        %1529 = vmatpush1.msra.mxu0 0.0
        %1530 = vmatprep.subr.mxu0 0.0
        %1531 = vmatpush1.msra.mxu0 0.0
        %1532 = vmatprep.subr.mxu0 0.0
        %1533 = vmatpush1.msra.mxu0 %v1390
        %1534 = vmatprep.subr.mxu0 0.0
        %1535 = vmatpush2.msra.mxu0 0.0
        %1536 = vmatprep.subr.mxu0 0.0
        %1537 = vmatpush2.msra.mxu0 0.0
        %1538 = vmatprep.subr.mxu0 0.0
        %1539 = vmatpush2.msra.mxu0 0.0
        %1540 = vmatprep.subr.mxu0 0.0
        %1541 = vmatpush2.msra.mxu0 0.0
        %1542 = vmatprep.subr.mxu0 0.0
        %1543 = vmatpush2.msra.mxu0 0.0
        %1544 = vmatprep.subr.mxu0 0.0
        %1545 = vmatpush2.msra.mxu0 0.0
        %1546 = vmatprep.subr.mxu0 0.0
        %1547 = vmatpush2.msra.mxu0 0.0
        %1548 = vmatprep.subr.mxu0 0.0
        %1549 = vmatpush2.msra.mxu0 0.0
        %1550 = vmatprep.subr.mxu0 0.0
        %1551 = vmatpush2.msra.mxu0 0.0
        %1552 = vmatprep.subr.mxu0 0.0
        %1553 = vmatpush2.msra.mxu0 0.0
        %1554 = vmatprep.subr.mxu0 0.0
        %1555 = vmatpush2.msra.mxu0 0.0
        %1556 = vmatprep.subr.mxu0 0.0
        %1557 = vmatpush2.msra.mxu0 0.0
        %1558 = vmatprep.subr.mxu0 0.0
        %1559 = vmatpush2.msra.mxu0 0.0
        %1560 = vmatprep.subr.mxu0 0.0
        %1561 = vmatpush2.msra.mxu0 0.0
        %1562 = vmatprep.subr.mxu0 0.0
        %1563 = vmatpush2.msra.mxu0 0.0
        %1564 = vmatprep.subr.mxu0 0.0
        %1565 = vmatpush2.msra.mxu0 0.0
        %1566 = vmatprep.mubr.f32.mxu0 0.0
        %1567 = vmatmul.mubr.f32.gmra.mxu0 %v1500
        %v1568 = vpop.f32.mrf.mxu0
        %v1569 = vadd.f32 0.0, %v1568
        %v1570 = vpop.f32.mrf.mxu0
        %1571 = vdwg.mxu0
        %v1572 = vadd.f32 %v1498, %v1569
        %1573 = vst.msk [vmem:[#allocation5] sm:$0xff] %vm468, %v1572
        %1574 = vmatprep.subr.mxu0 0.0
        %1575 = vmatpush1.xpose.msra.mxu0 0.0
        %1576 = vmatprep.subr.mxu0 0.0
        %1577 = vmatpush1.xpose.msra.mxu0 0.0
        %1578 = vmatprep.subr.mxu0 0.0
        %1579 = vmatpush1.xpose.msra.mxu0 0.0
        %1580 = vmatprep.subr.mxu0 0.0
        %1581 = vmatpush1.xpose.msra.mxu0 0.0
        %1582 = vmatprep.subr.mxu0 0.0
        %1583 = vmatpush1.xpose.msra.mxu0 0.0
        %1584 = vmatprep.subr.mxu0 0.0
        %1585 = vmatpush1.xpose.msra.mxu0 0.0
        %1586 = vmatprep.subr.mxu0 0.0
        %1587 = vmatpush1.xpose.msra.mxu0 0.0
        %1588 = vmatprep.subr.mxu0 0.0
        %1589 = vmatpush1.xpose.msra.mxu0 0.0
        %1590 = vmatprep.subr.mxu0 0.0
        %1591 = vmatpush1.xpose.msra.mxu0 0.0
        %1592 = vmatprep.subr.mxu0 0.0
        %1593 = vmatpush1.xpose.msra.mxu0 0.0
        %1594 = vmatprep.subr.mxu0 0.0
        %1595 = vmatpush1.xpose.msra.mxu0 0.0
        %1596 = vmatprep.subr.mxu0 0.0
        %1597 = vmatpush1.xpose.msra.mxu0 0.0
        %1598 = vmatprep.subr.mxu0 0.0
        %1599 = vmatpush1.xpose.msra.mxu0 0.0
        %1600 = vmatprep.subr.mxu0 0.0
        %1601 = vmatpush1.xpose.msra.mxu0 0.0
        %1602 = vmatprep.subr.mxu0 0.0
        %1603 = vmatpush1.xpose.msra.mxu0 0.0
        %1604 = vmatprep.subr.mxu0 0.0
        %1605 = vmatpush1.xpose.msra.mxu0 %v470
        %1606 = vmatprep.subr.mxu0 0.0
        %1607 = vmatpush2.xpose.msra.mxu0 0.0
        %1608 = vmatprep.subr.mxu0 0.0
        %1609 = vmatpush2.xpose.msra.mxu0 0.0
        %1610 = vmatprep.subr.mxu0 0.0
        %1611 = vmatpush2.xpose.msra.mxu0 0.0
        %1612 = vmatprep.subr.mxu0 0.0
        %1613 = vmatpush2.xpose.msra.mxu0 0.0
        %1614 = vmatprep.subr.mxu0 0.0
        %1615 = vmatpush2.xpose.msra.mxu0 0.0
        %1616 = vmatprep.subr.mxu0 0.0
        %1617 = vmatpush2.xpose.msra.mxu0 0.0
        %1618 = vmatprep.subr.mxu0 0.0
        %1619 = vmatpush2.xpose.msra.mxu0 0.0
        %1620 = vmatprep.subr.mxu0 0.0
        %1621 = vmatpush2.xpose.msra.mxu0 0.0
        %1622 = vmatprep.subr.mxu0 0.0
        %1623 = vmatpush2.xpose.msra.mxu0 0.0
        %1624 = vmatprep.subr.mxu0 0.0
        %1625 = vmatpush2.xpose.msra.mxu0 0.0
        %1626 = vmatprep.subr.mxu0 0.0
        %1627 = vmatpush2.xpose.msra.mxu0 0.0
        %1628 = vmatprep.subr.mxu0 0.0
        %1629 = vmatpush2.xpose.msra.mxu0 0.0
        %1630 = vmatprep.subr.mxu0 0.0
        %1631 = vmatpush2.xpose.msra.mxu0 0.0
        %1632 = vmatprep.subr.mxu0 0.0
        %1633 = vmatpush2.xpose.msra.mxu0 0.0
        %1634 = vmatprep.subr.mxu0 0.0
        %1635 = vmatpush2.xpose.msra.mxu0 0.0
        %1636 = vmatprep.subr.mxu0 0.0
        %1637 = vmatpush2.xpose.msra.mxu0 0.0
        %1638 = vmatprep.mubr.f32.mxu0 0.0
        %1639 = vmatmul.mubr.f32.gmra.mxu0 %v1395
        %v1640 = vpop.f32.mrf.mxu0
        %v1641 = vadd.f32 0.0, %v1640
        %v1642 = vpop.f32.mrf.mxu0
        %1643 = vdwg.mxu0
        %v1645 = vsel %vm468, %v1641, 0
        %v1648 = vsel %vm468, %v845, 0
        %1650 = vmatprep.subr.mxu0 0.0
        %1651 = vmatpush1.xpose.msra.mxu0 0.0
        %1652 = vmatprep.subr.mxu0 0.0
        %1653 = vmatpush1.xpose.msra.mxu0 0.0
        %1654 = vmatprep.subr.mxu0 0.0
        %1655 = vmatpush1.xpose.msra.mxu0 0.0
        %1656 = vmatprep.subr.mxu0 0.0
        %1657 = vmatpush1.xpose.msra.mxu0 0.0
        %1658 = vmatprep.subr.mxu0 0.0
        %1659 = vmatpush1.xpose.msra.mxu0 0.0
        %1660 = vmatprep.subr.mxu0 0.0
        %1661 = vmatpush1.xpose.msra.mxu0 0.0
        %1662 = vmatprep.subr.mxu0 0.0
        %1663 = vmatpush1.xpose.msra.mxu0 0.0
        %1664 = vmatprep.subr.mxu0 0.0
        %1665 = vmatpush1.xpose.msra.mxu0 0.0
        %1666 = vmatprep.subr.mxu0 0.0
        %1667 = vmatpush1.xpose.msra.mxu0 0.0
        %1668 = vmatprep.subr.mxu0 0.0
        %1669 = vmatpush1.xpose.msra.mxu0 0.0
        %1670 = vmatprep.subr.mxu0 0.0
        %1671 = vmatpush1.xpose.msra.mxu0 0.0
        %1672 = vmatprep.subr.mxu0 0.0
        %1673 = vmatpush1.xpose.msra.mxu0 0.0
        %1674 = vmatprep.subr.mxu0 0.0
        %1675 = vmatpush1.xpose.msra.mxu0 0.0
        %1676 = vmatprep.subr.mxu0 0.0
        %1677 = vmatpush1.xpose.msra.mxu0 0.0
        %1678 = vmatprep.subr.mxu0 0.0
        %1679 = vmatpush1.xpose.msra.mxu0 0.0
        %1680 = vmatprep.subr.mxu0 0.0
        %1681 = vmatpush1.xpose.msra.mxu0 %v1648
        %1682 = vmatprep.subr.mxu0 0.0
        %1683 = vmatpush2.xpose.msra.mxu0 0.0
        %1684 = vmatprep.subr.mxu0 0.0
        %1685 = vmatpush2.xpose.msra.mxu0 0.0
        %1686 = vmatprep.subr.mxu0 0.0
        %1687 = vmatpush2.xpose.msra.mxu0 0.0
        %1688 = vmatprep.subr.mxu0 0.0
        %1689 = vmatpush2.xpose.msra.mxu0 0.0
        %1690 = vmatprep.subr.mxu0 0.0
        %1691 = vmatpush2.xpose.msra.mxu0 0.0
        %1692 = vmatprep.subr.mxu0 0.0
        %1693 = vmatpush2.xpose.msra.mxu0 0.0
        %1694 = vmatprep.subr.mxu0 0.0
        %1695 = vmatpush2.xpose.msra.mxu0 0.0
        %1696 = vmatprep.subr.mxu0 0.0
        %1697 = vmatpush2.xpose.msra.mxu0 0.0
        %1698 = vmatprep.subr.mxu0 0.0
        %1699 = vmatpush2.xpose.msra.mxu0 0.0
        %1700 = vmatprep.subr.mxu0 0.0
        %1701 = vmatpush2.xpose.msra.mxu0 0.0
        %1702 = vmatprep.subr.mxu0 0.0
        %1703 = vmatpush2.xpose.msra.mxu0 0.0
        %1704 = vmatprep.subr.mxu0 0.0
        %1705 = vmatpush2.xpose.msra.mxu0 0.0
        %1706 = vmatprep.subr.mxu0 0.0
        %1707 = vmatpush2.xpose.msra.mxu0 0.0
        %1708 = vmatprep.subr.mxu0 0.0
        %1709 = vmatpush2.xpose.msra.mxu0 0.0
        %1710 = vmatprep.subr.mxu0 0.0
        %1711 = vmatpush2.xpose.msra.mxu0 0.0
        %1712 = vmatprep.subr.mxu0 0.0
        %1713 = vmatpush2.xpose.msra.mxu0 0.0
        %1714 = vmatprep.mubr.f32.mxu0 0.0
        %1715 = vmatmul.mubr.f32.gmra.mxu0 %v1645
        %v1716 = vpop.f32.mrf.mxu0
        %v1717 = vadd.f32 0.0, %v1716
        %v1718 = vpop.f32.mrf.mxu0
        %1719 = vdwg.mxu0
        %v1720 = vadd.f32 %v1641, %v1717
        %v1722 = vsel %vm468, %v1720, 0
        %1724 = vmatprep.subr.mxu0 0.0
        %1725 = vmatpush1.msra.mxu0 0.0
        %1726 = vmatprep.subr.mxu0 0.0
        %1727 = vmatpush1.msra.mxu0 0.0
        %1728 = vmatprep.subr.mxu0 0.0
        %1729 = vmatpush1.msra.mxu0 0.0
        %1730 = vmatprep.subr.mxu0 0.0
        %1731 = vmatpush1.msra.mxu0 0.0
        %1732 = vmatprep.subr.mxu0 0.0
        %1733 = vmatpush1.msra.mxu0 0.0
        %1734 = vmatprep.subr.mxu0 0.0
        %1735 = vmatpush1.msra.mxu0 0.0
        %1736 = vmatprep.subr.mxu0 0.0
        %1737 = vmatpush1.msra.mxu0 0.0
        %1738 = vmatprep.subr.mxu0 0.0
        %1739 = vmatpush1.msra.mxu0 0.0
        %1740 = vmatprep.subr.mxu0 0.0
        %1741 = vmatpush1.msra.mxu0 0.0
        %1742 = vmatprep.subr.mxu0 0.0
        %1743 = vmatpush1.msra.mxu0 0.0
        %1744 = vmatprep.subr.mxu0 0.0
        %1745 = vmatpush1.msra.mxu0 0.0
        %1746 = vmatprep.subr.mxu0 0.0
        %1747 = vmatpush1.msra.mxu0 0.0
        %1748 = vmatprep.subr.mxu0 0.0
        %1749 = vmatpush1.msra.mxu0 0.0
        %1750 = vmatprep.subr.mxu0 0.0
        %1751 = vmatpush1.msra.mxu0 0.0
        %1752 = vmatprep.subr.mxu0 0.0
        %1753 = vmatpush1.msra.mxu0 0.0
        %1754 = vmatprep.subr.mxu0 0.0
        %1755 = vmatpush1.msra.mxu0 %v460
        %1756 = vmatprep.subr.mxu0 0.0
        %1757 = vmatpush2.msra.mxu0 0.0
        %1758 = vmatprep.subr.mxu0 0.0
        %1759 = vmatpush2.msra.mxu0 0.0
        %1760 = vmatprep.subr.mxu0 0.0
        %1761 = vmatpush2.msra.mxu0 0.0
        %1762 = vmatprep.subr.mxu0 0.0
        %1763 = vmatpush2.msra.mxu0 0.0
        %1764 = vmatprep.subr.mxu0 0.0
        %1765 = vmatpush2.msra.mxu0 0.0
        %1766 = vmatprep.subr.mxu0 0.0
        %1767 = vmatpush2.msra.mxu0 0.0
        %1768 = vmatprep.subr.mxu0 0.0
        %1769 = vmatpush2.msra.mxu0 0.0
        %1770 = vmatprep.subr.mxu0 0.0
        %1771 = vmatpush2.msra.mxu0 0.0
        %1772 = vmatprep.subr.mxu0 0.0
        %1773 = vmatpush2.msra.mxu0 0.0
        %1774 = vmatprep.subr.mxu0 0.0
        %1775 = vmatpush2.msra.mxu0 0.0
        %1776 = vmatprep.subr.mxu0 0.0
        %1777 = vmatpush2.msra.mxu0 0.0
        %1778 = vmatprep.subr.mxu0 0.0
        %1779 = vmatpush2.msra.mxu0 0.0
        %1780 = vmatprep.subr.mxu0 0.0
        %1781 = vmatpush2.msra.mxu0 0.0
        %1782 = vmatprep.subr.mxu0 0.0
        %1783 = vmatpush2.msra.mxu0 0.0
        %1784 = vmatprep.subr.mxu0 0.0
        %1785 = vmatpush2.msra.mxu0 0.0
        %1786 = vmatprep.subr.mxu0 0.0
        %1787 = vmatpush2.msra.mxu0 0.0
        %1788 = vmatprep.mubr.f32.mxu0 0.0
        %1789 = vmatmul.mubr.f32.gmra.mxu0 %v1722
        %v1790 = vpop.f32.mrf.mxu0
        %v1791 = vadd.f32 0.0, %v1790
        %v1792 = vpop.f32.mrf.mxu0
        %1793 = vdwg.mxu0
        %v1794 = vsub.f32 %v1388, %v1791
        %1795 = vst.msk [vmem:[%s1387] sm:$0xff] %vm468, %v1794
      $region45: #{path_attention_forward.4} parent=39 // loop_footer
        %s1383 = sadd.s32 %s1381, 1
      $region46: #{path_attention_forward.4} parent=39 // loop_footer_branch
        %1380 = sbr.rel target = $region42
      $region47: #{path_attention_forward.4} parent=39 // loop_exit
        _
      %v1797 = vsel %vm468, %v845, 0
      %1799 = vmatprep.subr.mxu0 0.0
      %1800 = vmatpush1.msra.mxu0 0.0
      %1801 = vmatprep.subr.mxu0 0.0
      %1802 = vmatpush1.msra.mxu0 0.0
      %1803 = vmatprep.subr.mxu0 0.0
      %1804 = vmatpush1.msra.mxu0 0.0
      %1805 = vmatprep.subr.mxu0 0.0
      %1806 = vmatpush1.msra.mxu0 0.0
      %1807 = vmatprep.subr.mxu0 0.0
      %1808 = vmatpush1.msra.mxu0 0.0
      %1809 = vmatprep.subr.mxu0 0.0
      %1810 = vmatpush1.msra.mxu0 0.0
      %1811 = vmatprep.subr.mxu0 0.0
      %1812 = vmatpush1.msra.mxu0 0.0
      %1813 = vmatprep.subr.mxu0 0.0
      %1814 = vmatpush1.msra.mxu0 0.0
      %1815 = vmatprep.subr.mxu0 0.0
      %1816 = vmatpush1.msra.mxu0 0.0
      %1817 = vmatprep.subr.mxu0 0.0
      %1818 = vmatpush1.msra.mxu0 0.0
      %1819 = vmatprep.subr.mxu0 0.0
      %1820 = vmatpush1.msra.mxu0 0.0
      %1821 = vmatprep.subr.mxu0 0.0
      %1822 = vmatpush1.msra.mxu0 0.0
      %1823 = vmatprep.subr.mxu0 0.0
      %1824 = vmatpush1.msra.mxu0 0.0
      %1825 = vmatprep.subr.mxu0 0.0
      %1826 = vmatpush1.msra.mxu0 0.0
      %1827 = vmatprep.subr.mxu0 0.0
      %1828 = vmatpush1.msra.mxu0 0.0
      %1829 = vmatprep.subr.mxu0 0.0
      %1830 = vmatpush1.msra.mxu0 %v1067
      %1831 = vmatprep.subr.mxu0 0.0
      %1832 = vmatpush2.msra.mxu0 0.0
      %1833 = vmatprep.subr.mxu0 0.0
      %1834 = vmatpush2.msra.mxu0 0.0
      %1835 = vmatprep.subr.mxu0 0.0
      %1836 = vmatpush2.msra.mxu0 0.0
      %1837 = vmatprep.subr.mxu0 0.0
      %1838 = vmatpush2.msra.mxu0 0.0
      %1839 = vmatprep.subr.mxu0 0.0
      %1840 = vmatpush2.msra.mxu0 0.0
      %1841 = vmatprep.subr.mxu0 0.0
      %1842 = vmatpush2.msra.mxu0 0.0
      %1843 = vmatprep.subr.mxu0 0.0
      %1844 = vmatpush2.msra.mxu0 0.0
      %1845 = vmatprep.subr.mxu0 0.0
      %1846 = vmatpush2.msra.mxu0 0.0
      %1847 = vmatprep.subr.mxu0 0.0
      %1848 = vmatpush2.msra.mxu0 0.0
      %1849 = vmatprep.subr.mxu0 0.0
      %1850 = vmatpush2.msra.mxu0 0.0
      %1851 = vmatprep.subr.mxu0 0.0
      %1852 = vmatpush2.msra.mxu0 0.0
      %1853 = vmatprep.subr.mxu0 0.0
      %1854 = vmatpush2.msra.mxu0 0.0
      %1855 = vmatprep.subr.mxu0 0.0
      %1856 = vmatpush2.msra.mxu0 0.0
      %1857 = vmatprep.subr.mxu0 0.0
      %1858 = vmatpush2.msra.mxu0 0.0
      %1859 = vmatprep.subr.mxu0 0.0
      %1860 = vmatpush2.msra.mxu0 0.0
      %1861 = vmatprep.subr.mxu0 0.0
      %1862 = vmatpush2.msra.mxu0 0.0
      %1863 = vmatprep.mubr.f32.mxu0 0.0
      %1864 = vmatmul.mubr.f32.gmra.mxu0 %v1797
      %v1865 = vpop.f32.mrf.mxu0
      %v1866 = vadd.f32 0.0, %v1865
      %v1867 = vpop.f32.mrf.mxu0
      %1868 = vdwg.mxu0
      %v1869 = vadd.f32 %v1067, %v1866
      %1870 = vxpose.xlu0.b32.start [1/16] %v1869, 128
      %1871 = vxpose.xlu0.b32.cont [2/16] 0.0, 128
      %1872 = vxpose.xlu0.b32.cont [3/16] 0.0, 128
      %1873 = vxpose.xlu0.b32.cont [4/16] 0.0, 128
      %1874 = vxpose.xlu0.b32.cont [5/16] 0.0, 128
      %1875 = vxpose.xlu0.b32.cont [6/16] 0.0, 128
      %1876 = vxpose.xlu0.b32.cont [7/16] 0.0, 128
      %1877 = vxpose.xlu0.b32.cont [8/16] 0.0, 128
      %1878 = vxpose.xlu0.b32.cont [9/16] 0.0, 128
      %1879 = vxpose.xlu0.b32.cont [10/16] 0.0, 128
      %1880 = vxpose.xlu0.b32.cont [11/16] 0.0, 128
      %1881 = vxpose.xlu0.b32.cont [12/16] 0.0, 128
      %1882 = vxpose.xlu0.b32.cont [13/16] 0.0, 128
      %1883 = vxpose.xlu0.b32.cont [14/16] 0.0, 128
      %1884 = vxpose.xlu0.b32.cont [15/16] 0.0, 128
      %1885 = vxpose.xlu0.b32.end [16/16] 0.0, 128
      %v1886 = vpop.trf.xlu0
      %v1887 = vpop.trf.xlu0
      %v1888 = vpop.trf.xlu0
      %v1889 = vpop.trf.xlu0
      %v1890 = vpop.trf.xlu0
      %v1891 = vpop.trf.xlu0
      %v1892 = vpop.trf.xlu0
      %v1893 = vpop.trf.xlu0
      %v1894 = vpop.trf.xlu0
      %v1895 = vpop.trf.xlu0
      %v1896 = vpop.trf.xlu0
      %v1897 = vpop.trf.xlu0
      %v1898 = vpop.trf.xlu0
      %v1899 = vpop.trf.xlu0
      %v1900 = vpop.trf.xlu0
      %v1901 = vpop.trf.xlu0
      %v1903 = vsel %vm468, %v1886, 0
      %1905 = vmatprep.subr.mxu0 0.0
      %1906 = vmatpush1.msra.mxu0 0.0
      %1907 = vmatprep.subr.mxu0 0.0
      %1908 = vmatpush1.msra.mxu0 0.0
      %1909 = vmatprep.subr.mxu0 0.0
      %1910 = vmatpush1.msra.mxu0 0.0
      %1911 = vmatprep.subr.mxu0 0.0
      %1912 = vmatpush1.msra.mxu0 0.0
      %1913 = vmatprep.subr.mxu0 0.0
      %1914 = vmatpush1.msra.mxu0 0.0
      %1915 = vmatprep.subr.mxu0 0.0
      %1916 = vmatpush1.msra.mxu0 0.0
      %1917 = vmatprep.subr.mxu0 0.0
      %1918 = vmatpush1.msra.mxu0 0.0
      %1919 = vmatprep.subr.mxu0 0.0
      %1920 = vmatpush1.msra.mxu0 0.0
      %1921 = vmatprep.subr.mxu0 0.0
      %1922 = vmatpush1.msra.mxu0 0.0
      %1923 = vmatprep.subr.mxu0 0.0
      %1924 = vmatpush1.msra.mxu0 0.0
      %1925 = vmatprep.subr.mxu0 0.0
      %1926 = vmatpush1.msra.mxu0 0.0
      %1927 = vmatprep.subr.mxu0 0.0
      %1928 = vmatpush1.msra.mxu0 0.0
      %1929 = vmatprep.subr.mxu0 0.0
      %1930 = vmatpush1.msra.mxu0 0.0
      %1931 = vmatprep.subr.mxu0 0.0
      %1932 = vmatpush1.msra.mxu0 0.0
      %1933 = vmatprep.subr.mxu0 0.0
      %1934 = vmatpush1.msra.mxu0 0.0
      %1935 = vmatprep.subr.mxu0 0.0
      %1936 = vmatpush1.msra.mxu0 %v460
      %1937 = vmatprep.subr.mxu0 0.0
      %1938 = vmatpush2.msra.mxu0 0.0
      %1939 = vmatprep.subr.mxu0 0.0
      %1940 = vmatpush2.msra.mxu0 0.0
      %1941 = vmatprep.subr.mxu0 0.0
      %1942 = vmatpush2.msra.mxu0 0.0
      %1943 = vmatprep.subr.mxu0 0.0
      %1944 = vmatpush2.msra.mxu0 0.0
      %1945 = vmatprep.subr.mxu0 0.0
      %1946 = vmatpush2.msra.mxu0 0.0
      %1947 = vmatprep.subr.mxu0 0.0
      %1948 = vmatpush2.msra.mxu0 0.0
      %1949 = vmatprep.subr.mxu0 0.0
      %1950 = vmatpush2.msra.mxu0 0.0
      %1951 = vmatprep.subr.mxu0 0.0
      %1952 = vmatpush2.msra.mxu0 0.0
      %1953 = vmatprep.subr.mxu0 0.0
      %1954 = vmatpush2.msra.mxu0 0.0
      %1955 = vmatprep.subr.mxu0 0.0
      %1956 = vmatpush2.msra.mxu0 0.0
      %1957 = vmatprep.subr.mxu0 0.0
      %1958 = vmatpush2.msra.mxu0 0.0
      %1959 = vmatprep.subr.mxu0 0.0
      %1960 = vmatpush2.msra.mxu0 0.0
      %1961 = vmatprep.subr.mxu0 0.0
      %1962 = vmatpush2.msra.mxu0 0.0
      %1963 = vmatprep.subr.mxu0 0.0
      %1964 = vmatpush2.msra.mxu0 0.0
      %1965 = vmatprep.subr.mxu0 0.0
      %1966 = vmatpush2.msra.mxu0 0.0
      %1967 = vmatprep.subr.mxu0 0.0
      %1968 = vmatpush2.msra.mxu0 0.0
      %1969 = vmatprep.mubr.f32.mxu0 0.0
      %1970 = vmatmul.mubr.f32.gmra.mxu0 %v1903
      %v1971 = vpop.f32.mrf.mxu0
      %v1972 = vadd.f32 0.0, %v1971
      %v1973 = vpop.f32.mrf.mxu0
      %1974 = vdwg.mxu0
      %v1975 = vsub.f32 %v459, %v1972
      %s1976 = scalar_lea.vmem [#allocation2], %s1214
      %1977 = vst.msk [vmem:[%s1976] sm:$0xff] %vm468, %v1975
      %v1978 = vld [vmem:[#allocation5] sm:$0xff]
      %v1979 = vld [vmem:[#allocation4] sm:$0xff]
      %v1980 = vrcp.pop %v1979
      %1982 = vset.pattern.permute.xlu0 0
      %1983 = vperm.xlu0 %1982, %v1980
      %v1984 = vpop.permute.xlu0 %1983
      %v1986 = vmul.f32 %v1978, %v1984
      %1987 = vst.msk [vmem:[%s455] sm:$0xff] %vm468, %v1986
      %s1988 = smul.u32 %s21, 2
      %s1989 = sadd.s32 %s1988, %s23
      %p1990 = scmp.lt.s32.totalorder %s22, 3
      %s1991 = scalar_select %p1990, %s22, 3
      %p1992 = scmp.lt.s32.totalorder %s1989, 3
      %s1993 = scalar_select %p1992, %s1989, 3
      %s1994 = smul.addr %s1991, 4
      %s1995 = sadd.s32 %s1993, %s1994
      %s1996 = smul.addr %s1995, 8
      %s1997 = scalar_lea.vmem %s5, %s1996
      // Predicated region
      $region48: #{path_attention_forward.4} parent=39 // pred_check
        %p1998 = pneg %p215
      $region49: #{path_attention_forward.4} parent=39 // pred_check_branch
        %2000 = sbr.rel (%p1998) target = $region51
      $region50: #{path_attention_forward.4} parent=39 // pred_region
        %s2001 = smul.u32 %s21, 2
        %s2002 = sadd.s32 %s2001, %s23
      $region51: #{path_attention_forward.4} parent=39 // pred_fallthru
        _
    $region40: #{path_attention_forward.4} parent=5 // pred_fallthru
      _
    %p2003 = scmp.le.s32.totalorder 2, %s11
    // Predicated region
    $region52: #{path_attention_forward.4} parent=5 // pred_check
      %p2004 = pneg %p2003
    $region53: #{path_attention_forward.4} parent=5 // pred_check_branch
      %2006 = sbr.rel (%p2004) target = $region55
    $region54: #{path_attention_forward.4} parent=5 // pred_region
      %s2007 = ssub.s32 %s11, 2
      // Predicated region
      $region56: #{path_attention_forward.4} parent=54 // pred_check
        %p2008 = pneg %p221
      $region57: #{path_attention_forward.4} parent=54 // pred_check_branch
        %2010 = sbr.rel (%p2008) target = $region59
      $region58: #{path_attention_forward.4} parent=54 // pred_region
        %s2011 = smul.u32 %s24, 2
        %s2012 = sadd.s32 %s2011, %s26
        %p2013 = scmp.lt.s32.totalorder %s25, 3
        %s2014 = scalar_select %p2013, %s25, 3
        %p2015 = scmp.lt.s32.totalorder %s2012, 3
        %s2016 = scalar_select %p2015, %s2012, 3
        %s2017 = smul.addr %s2014, 4
        %s2018 = sadd.s32 %s2016, %s2017
        %s2019 = smul.addr %s2018, 8
        %s2020 = scalar_lea.vmem %s5, %s2019
      $region59: #{path_attention_forward.4} parent=54 // pred_fallthru
        _
    $region55: #{path_attention_forward.4} parent=5 // pred_fallthru
      _
  $region6: #{path_attention_forward.4} parent=0 // loop_footer
    %s15 = sadd.s32 1, %s11
  $region7: #{path_attention_forward.4} parent=0 // loop_footer_branch
    %10 = sbr.rel target = $region3
  $region8: #{path_attention_forward.4} parent=0 // loop_exit
    _

</llo_original>
